<compile_context>
chip_gen: v7x
topology: tpu7x:2x2x1
jax: 0.10.0
libtpu: 0.0.40
codegen_flags: <defaults>
</compile_context>

<pallas_src>
import numpy as np
import jax
import jax.numpy as jnp
from jax import lax
from jax.experimental import pallas as pl
from jax.experimental.pallas import tpu as pltpu


# ------------------------------ fused kernel ---------------------------------

def _make_fused_kernel(B, T, H3, num_layers):
    """H3 = n_streams * hidden_size; gate slab width = 4*H3 (i|f|g|o groups)."""

    def kernel(*refs):
        idx = 0
        x_ref = refs[idx]; idx += 1                       # (T*B, Dsum) time-major packed
        layer_refs = []                                   # [(w_in, w_hh, bias)] per layer
        for _l in range(num_layers):
            layer_refs.append((refs[idx], refs[idx + 1], refs[idx + 2]))
            idx += 3
        fcw_ref = refs[idx]; idx += 1                     # (3H, C)
        fcb_ref = refs[idx]; idx += 1                     # (1, C)
        out_ref = refs[idx]; idx += 1                     # (B, C)
        seq_scr = refs[idx]; idx += 1                     # (T*B, 3H) inter-layer hidden seq
        pre_scr = refs[idx]; idx += 1                     # (T*B, 12H) hoisted input gates

        h = jnp.zeros((B, H3), jnp.float32)
        for l in range(num_layers):
            w_in_ref, w_hh_ref, b_ref = layer_refs[l]
            in_ref = x_ref if l == 0 else seq_scr

            # Hoisted input-side projection for ALL time steps: one big MXU pass
            # (M = T*B), bias folded in, result stored time-major so each step
            # reads one contiguous aligned (B, 12H) tile.
            # Note: for l > 0 this fully consumes seq_scr (previous layer's
            # hiddens) BEFORE the time loop below starts overwriting it.
            pre_scr[...] = (
                jnp.dot(in_ref[...], w_in_ref[...],
                        preferred_element_type=jnp.float32)
                + b_ref[...])

            # Hoist the recurrent weight read out of the unrolled time loop.
            w_hh = w_hh_ref[...]                           # (3H, 12H)

            h = jnp.zeros((B, H3), jnp.float32)
            c = jnp.zeros((B, H3), jnp.float32)
            for t in range(T):                             # static, fully unrolled (T small)
                gates = pre_scr[pl.ds(t * B, B), :] + jnp.dot(
                    h, w_hh, preferred_element_type=jnp.float32)   # (B, 12H)

                # gate-grouped layout: [i_all | f_all | g_all | o_all], 3H lanes each
                i_g = jax.nn.sigmoid(gates[:, 0 * H3:1 * H3])
                f_g = jax.nn.sigmoid(gates[:, 1 * H3:2 * H3])
                g_g = jnp.tanh(gates[:, 2 * H3:3 * H3])
                o_g = jax.nn.sigmoid(gates[:, 3 * H3:4 * H3])

                c = f_g * c + i_g * g_g
                h = o_g * jnp.tanh(c)

                if l < num_layers - 1:
                    seq_scr[pl.ds(t * B, B), :] = h        # feeds next layer's projection

        # fused FC + sigmoid tail on the packed last hidden state (B, 3H)
        out_ref[...] = jax.nn.sigmoid(
            jnp.dot(h, fcw_ref[...], preferred_element_type=jnp.float32)
            + fcb_ref[...])

    return kernel


# ------------------------------ wrapper ---------------------------------------

def multi_input_lstm_forward(x1, x2, x3, packed_layers, fc_w_t, fc_b):
    """Fused forward.
    x_i: (B, T, D_i) batch-first.
    packed_layers: list over layers of (w_in_blockdiag, w_hh_blockdiag, bias)
                   (gate-grouped columns, built by pack_params).
    fc_w_t: (3H, C), fc_b: (C,).  Returns sigmoid probabilities (B, C)."""
    xs = (x1, x2, x3)
    B, T = x1.shape[0], x1.shape[1]
    H3 = packed_layers[0][1].shape[0]          # n_streams * hidden_size
    C = fc_w_t.shape[1]
    num_layers = len(packed_layers)
    Dsum = packed_layers[0][0].shape[0]

    # Time-major packed input: (T, B, D1+D2+D3) -> (T*B, Dsum).
    # Pure layout plumbing in the wrapper; keeps every in-kernel read contiguous.
    x_packed = jnp.concatenate(
        [jnp.transpose(x, (1, 0, 2)) for x in xs], axis=-1).reshape(T * B, Dsum)

    inputs = [x_packed]
    for (w_in, w_hh, b) in packed_layers:
        inputs += [w_in, w_hh, b]
    inputs += [fc_w_t, fc_b.reshape(1, C)]

    def full_spec(shape):
        nd = len(shape)
        return pl.BlockSpec(tuple(shape), lambda *_, nd=nd: (0,) * nd)

    kernel = _make_fused_kernel(B, T, H3, num_layers)

    return pl.pallas_call(
        kernel,
        out_shape=jax.ShapeDtypeStruct((B, C), jnp.float32),
        grid=(1,),
        in_specs=[full_spec(a.shape) for a in inputs],
        out_specs=full_spec((B, C)),
        scratch_shapes=[
            pltpu.VMEM((T * B, H3), jnp.float32),          # inter-layer hidden sequence
            pltpu.VMEM((T * B, 4 * H3), jnp.float32),      # hoisted input-gate activations
        ],
        compiler_params=pltpu.CompilerParams(
            dimension_semantics=("arbitrary",)),
    )(*inputs)


# -------------------------- parameter init / packing --------------------------

def init_lstm_params(key, input_size, hidden_size, num_layers):
    """PyTorch-style uniform(-1/sqrt(H), 1/sqrt(H)); raw per-layer
    (w_ih (4H, D), w_hh (4H, H), b_ih (4H,), b_hh (4H,)), gate order (i,f,g,o)."""
    stdv = 1.0 / np.sqrt(hidden_size)
    params = []
    d_in = input_size
    for _ in range(num_layers):
        key, k1, k2, k3, k4 = jax.random.split(key, 5)
        w_ih = jax.random.uniform(k1, (4 * hidden_size, d_in), jnp.float32, -stdv, stdv)
        w_hh = jax.random.uniform(k2, (4 * hidden_size, hidden_size), jnp.float32, -stdv, stdv)
        b_ih = jax.random.uniform(k3, (4 * hidden_size,), jnp.float32, -stdv, stdv)
        b_hh = jax.random.uniform(k4, (4 * hidden_size,), jnp.float32, -stdv, stdv)
        params.append((w_ih, w_hh, b_ih, b_hh))
        d_in = hidden_size
    return params


def pack_params(stream_params, hidden_size):
    """Build per-layer block-diagonal, gate-grouped weights.

    Returns, per layer:
      w_in  (sum(D_s), 4*n*H)  -- input projection, columns grouped [i|f|g|o],
                                  within a group stream s owns [s*H:(s+1)*H]
      w_hh  (n*H, 4*n*H)       -- block-diagonal recurrent weight, same columns
      bias  (1, 4*n*H)         -- b_ih + b_hh, same layout
    """
    n = len(stream_params)
    H = hidden_size
    num_layers = len(stream_params[0])
    packed = []
    for l in range(num_layers):
        dims_l = [int(stream_params[s][l][0].shape[1]) for s in range(n)]
        Din = sum(dims_l)
        w_in = np.zeros((Din, 4 * n * H), np.float32)
        w_hh = np.zeros((n * H, 4 * n * H), np.float32)
        bias = np.zeros((1, 4 * n * H), np.float32)
        row = 0
        for s in range(n):
            w_ih_s, w_hh_s, b_ih_s, b_hh_s = (np.asarray(a) for a in stream_params[s][l])
            D = dims_l[s]
            for g in range(4):
                col = g * n * H + s * H
                w_in[row:row + D, col:col + H] = w_ih_s[g * H:(g + 1) * H, :].T
                w_hh[s * H:(s + 1) * H, col:col + H] = w_hh_s[g * H:(g + 1) * H, :].T
                bias[0, col:col + H] = b_ih_s[g * H:(g + 1) * H] + b_hh_s[g * H:(g + 1) * H]
            row += D
        packed.append((jnp.asarray(w_in), jnp.asarray(w_hh), jnp.asarray(bias)))
    return packed


# ------------------------------ pure-JAX reference ----------------------------

def lstm_stream_ref(x_btd, layer_params):
    h_seq = x_btd
    for (w_ih, w_hh, b_ih, b_hh) in layer_params:
        B = h_seq.shape[0]
        H = w_hh.shape[1]
        w_cat = jnp.concatenate([w_ih.T, w_hh.T], axis=0)
        b = b_ih + b_hh

        def step(carry, x_t, w_cat=w_cat, b=b, H=H):
            h, c = carry
            gates = jnp.concatenate([x_t, h], axis=1) @ w_cat + b
            i = jax.nn.sigmoid(gates[:, :H])
            f = jax.nn.sigmoid(gates[:, H:2 * H])
            g = jnp.tanh(gates[:, 2 * H:3 * H])
            o = jax.nn.sigmoid(gates[:, 3 * H:])
            c = f * c + i * g
            h = o * jnp.tanh(c)
            return (h, c), h

        init = (jnp.zeros((B, H), jnp.float32), jnp.zeros((B, H), jnp.float32))
        _, hs = lax.scan(step, init, jnp.transpose(h_seq, (1, 0, 2)))
        h_seq = jnp.transpose(hs, (1, 0, 2))
    return h_seq[:, -1, :]


def ref_forward(x1, x2, x3, p1, p2, p3, fc_w_t, fc_b):
    o = jnp.concatenate(
        [lstm_stream_ref(x1, p1), lstm_stream_ref(x2, p2), lstm_stream_ref(x3, p3)],
        axis=1)
    return jax.nn.sigmoid(o @ fc_w_t + fc_b)


# ----------------------------------- main --------------------------------------

if __name__ == "__main__":
    B, T = 8, 8
    in1, in2, in3 = 16, 24, 32
    H = 32
    num_layers = 2
    C = 4

    root = jax.random.PRNGKey(0)
    k_p1, k_p2, k_p3, k_fc_w, k_fc_b, k_x1, k_x2, k_x3 = jax.random.split(root, 8)

    params1 = init_lstm_params(k_p1, in1, H, num_layers)
    params2 = init_lstm_params(k_p2, in2, H, num_layers)
    params3 = init_lstm_params(k_p3, in3, H, num_layers)
    packed_layers = pack_params([params1, params2, params3], H)

    stdv_fc = 1.0 / np.sqrt(3 * H)
    fc_w = jax.random.uniform(k_fc_w, (C, 3 * H), jnp.float32, -stdv_fc, stdv_fc)
    fc_b = jax.random.uniform(k_fc_b, (C,), jnp.float32, -stdv_fc, stdv_fc)
    fc_w_t = fc_w.T                                    # (3H, C)

    x1 = jax.random.normal(k_x1, (B, T, in1), jnp.float32)
    x2 = jax.random.normal(k_x2, (B, T, in2), jnp.float32)
    x3 = jax.random.normal(k_x3, (B, T, in3), jnp.float32)

    fwd = jax.jit(multi_input_lstm_forward)
    prob = fwd(x1, x2, x3, packed_layers, fc_w_t, fc_b)
    prob = jax.block_until_ready(prob)

    # correctness check against pure-JAX reference of the PyTorch forward
    expected = ref_forward(x1, x2, x3, params1, params2, params3, fc_w_t, fc_b)
    np.testing.assert_allclose(np.asarray(prob), np.asarray(expected),
                               rtol=1e-5, atol=1e-5)
    assert prob.shape == (B, C)

    print("KERNEL_OK")
</pallas_src>

<mosaic_0001>
module attributes {stable_mosaic.version = 11 : i64} {
  func.func @kernel(%arg0: i32, %arg1: memref<64x72xf32, #tpu.memory_space<vmem>>, %arg2: memref<72x384xf32, #tpu.memory_space<vmem>>, %arg3: memref<96x384xf32, #tpu.memory_space<vmem>>, %arg4: memref<1x384xf32, #tpu.memory_space<vmem>>, %arg5: memref<96x384xf32, #tpu.memory_space<vmem>>, %arg6: memref<96x384xf32, #tpu.memory_space<vmem>>, %arg7: memref<1x384xf32, #tpu.memory_space<vmem>>, %arg8: memref<96x4xf32, #tpu.memory_space<vmem>>, %arg9: memref<1x4xf32, #tpu.memory_space<vmem>>, %arg10: memref<8x4xf32, #tpu.memory_space<vmem>>, %arg11: memref<64x96xf32, #tpu.memory_space<vmem>>, %arg12: memref<64x384xf32, #tpu.memory_space<vmem>>) attributes {dimension_semantics = [#tpu.dimension_semantics<arbitrary>], iteration_bounds = array<i64: 1>, scalar_prefetch = 0 : i64, scratch_operands = 2 : i64, tpu.core_type = #tpu.core_type<tc>, window_params = [{pipeline_mode = #tpu.pipeline_mode<synchronous>, transform_indices = @transform_0, window_bounds = array<i64: 64, 72>}, {pipeline_mode = #tpu.pipeline_mode<synchronous>, transform_indices = @transform_1, window_bounds = array<i64: 72, 384>}, {pipeline_mode = #tpu.pipeline_mode<synchronous>, transform_indices = @transform_2, window_bounds = array<i64: 96, 384>}, {pipeline_mode = #tpu.pipeline_mode<synchronous>, transform_indices = @transform_3, window_bounds = array<i64: 1, 384>}, {pipeline_mode = #tpu.pipeline_mode<synchronous>, transform_indices = @transform_4, window_bounds = array<i64: 96, 384>}, {pipeline_mode = #tpu.pipeline_mode<synchronous>, transform_indices = @transform_5, window_bounds = array<i64: 96, 384>}, {pipeline_mode = #tpu.pipeline_mode<synchronous>, transform_indices = @transform_6, window_bounds = array<i64: 1, 384>}, {pipeline_mode = #tpu.pipeline_mode<synchronous>, transform_indices = @transform_7, window_bounds = array<i64: 96, 4>}, {pipeline_mode = #tpu.pipeline_mode<synchronous>, transform_indices = @transform_8, window_bounds = array<i64: 1, 4>}, {pipeline_mode = #tpu.pipeline_mode<synchronous>, transform_indices = @transform_9, window_bounds = array<i64: 8, 4>}]} {
    %c0 = arith.constant 0 : index
    %c0_0 = arith.constant 0 : index
    %0 = vector.load %arg1[%c0, %c0_0] : memref<64x72xf32, #tpu.memory_space<vmem>>, vector<64x72xf32>
    %c0_1 = arith.constant 0 : index
    %c0_2 = arith.constant 0 : index
    %1 = vector.load %arg2[%c0_1, %c0_2] : memref<72x384xf32, #tpu.memory_space<vmem>>, vector<72x384xf32>
    %cst = arith.constant dense<0.000000e+00> : vector<64x384xf32>
    %2 = tpu.matmul %0, %1, %cst {dimension_numbers = #tpu.dot_dimension_numbers<[1], [0], [0], [1], [0, 0, 1, 1], [], []>} : vector<64x72xf32>, vector<72x384xf32>, vector<64x384xf32> -> vector<64x384xf32>
    %c0_3 = arith.constant 0 : index
    %c0_4 = arith.constant 0 : index
    %3 = vector.load %arg4[%c0_3, %c0_4] : memref<1x384xf32, #tpu.memory_space<vmem>>, vector<1x384xf32>
    %4 = vector.broadcast %3 : vector<1x384xf32> to vector<64x384xf32>
    %5 = arith.addf %2, %4 : vector<64x384xf32>
    %c0_5 = arith.constant 0 : index
    %c0_6 = arith.constant 0 : index
    %6 = vector.load %arg12[%c0_5, %c0_6] : memref<64x384xf32, #tpu.memory_space<vmem>>, vector<64x384xf32>
    tpu.vector_store %arg12[%c0_5, %c0_6], %5 {strides = array<i32>} : memref<64x384xf32, #tpu.memory_space<vmem>>, vector<64x384xf32>,
    %c0_7 = arith.constant 0 : index
    %c0_8 = arith.constant 0 : index
    %7 = vector.load %arg3[%c0_7, %c0_8] : memref<96x384xf32, #tpu.memory_space<vmem>>, vector<96x384xf32>
    %cst_9 = arith.constant 0.000000e+00 : f32
    %8 = vector.broadcast %cst_9 : f32 to vector<8x96xf32>
    %cst_10 = arith.constant 0.000000e+00 : f32
    %9 = vector.broadcast %cst_10 : f32 to vector<8x96xf32>
    %c0_11 = arith.constant 0 : index
    %c0_12 = arith.constant 0 : index
    %10 = vector.load %arg12[%c0_11, %c0_12] : memref<64x384xf32, #tpu.memory_space<vmem>>, vector<8x384xf32>
    %cst_13 = arith.constant dense<0.000000e+00> : vector<8x384xf32>
    %11 = tpu.matmul %8, %7, %cst_13 {dimension_numbers = #tpu.dot_dimension_numbers<[1], [0], [0], [1], [0, 0, 1, 1], [], []>} : vector<8x96xf32>, vector<96x384xf32>, vector<8x384xf32> -> vector<8x384xf32>
    %12 = arith.addf %10, %11 : vector<8x384xf32>
    %13 = vector.extract_strided_slice %12 {offsets = [0, 0], sizes = [8, 96], strides = [1, 1]} : vector<8x384xf32> to vector<8x96xf32>
    %14 = arith.negf %13 : vector<8x96xf32>
    %15 = math.exp %14 : vector<8x96xf32>
    %cst_14 = arith.constant 1.000000e+00 : f32
    %16 = vector.broadcast %cst_14 : f32 to vector<8x96xf32>
    %17 = arith.addf %16, %15 : vector<8x96xf32>
    %18 = arith.divf %16, %17 : vector<8x96xf32>
    %19 = vector.extract_strided_slice %12 {offsets = [0, 96], sizes = [8, 96], strides = [1, 1]} : vector<8x384xf32> to vector<8x96xf32>
    %20 = arith.negf %19 : vector<8x96xf32>
    %21 = math.exp %20 : vector<8x96xf32>
    %cst_15 = arith.constant 1.000000e+00 : f32
    %22 = vector.broadcast %cst_15 : f32 to vector<8x96xf32>
    %23 = arith.addf %22, %21 : vector<8x96xf32>
    %24 = arith.divf %22, %23 : vector<8x96xf32>
    %25 = vector.extract_strided_slice %12 {offsets = [0, 192], sizes = [8, 96], strides = [1, 1]} : vector<8x384xf32> to vector<8x96xf32>
    %26 = math.tanh %25 : vector<8x96xf32>
    %27 = vector.extract_strided_slice %12 {offsets = [0, 288], sizes = [8, 96], strides = [1, 1]} : vector<8x384xf32> to vector<8x96xf32>
    %28 = arith.negf %27 : vector<8x96xf32>
    %29 = math.exp %28 : vector<8x96xf32>
    %cst_16 = arith.constant 1.000000e+00 : f32
    %30 = vector.broadcast %cst_16 : f32 to vector<8x96xf32>
    %31 = arith.addf %30, %29 : vector<8x96xf32>
    %32 = arith.divf %30, %31 : vector<8x96xf32>
    %33 = arith.mulf %24, %9 : vector<8x96xf32>
    %34 = arith.mulf %18, %26 : vector<8x96xf32>
    %35 = arith.addf %33, %34 : vector<8x96xf32>
    %36 = math.tanh %35 : vector<8x96xf32>
    %37 = arith.mulf %32, %36 : vector<8x96xf32>
    %c0_17 = arith.constant 0 : index
    %c0_18 = arith.constant 0 : index
    %38 = vector.load %arg11[%c0_17, %c0_18] : memref<64x96xf32, #tpu.memory_space<vmem>>, vector<8x96xf32>
    tpu.vector_store %arg11[%c0_17, %c0_18], %37 {strides = array<i32>} : memref<64x96xf32, #tpu.memory_space<vmem>>, vector<8x96xf32>,
    %c8 = arith.constant 8 : index
    %c0_19 = arith.constant 0 : index
    %39 = vector.load %arg12[%c8, %c0_19] : memref<64x384xf32, #tpu.memory_space<vmem>>, vector<8x384xf32>
    %cst_20 = arith.constant dense<0.000000e+00> : vector<8x384xf32>
    %40 = tpu.matmul %37, %7, %cst_20 {dimension_numbers = #tpu.dot_dimension_numbers<[1], [0], [0], [1], [0, 0, 1, 1], [], []>} : vector<8x96xf32>, vector<96x384xf32>, vector<8x384xf32> -> vector<8x384xf32>
    %41 = arith.addf %39, %40 : vector<8x384xf32>
    %42 = vector.extract_strided_slice %41 {offsets = [0, 0], sizes = [8, 96], strides = [1, 1]} : vector<8x384xf32> to vector<8x96xf32>
    %43 = arith.negf %42 : vector<8x96xf32>
    %44 = math.exp %43 : vector<8x96xf32>
    %cst_21 = arith.constant 1.000000e+00 : f32
    %45 = vector.broadcast %cst_21 : f32 to vector<8x96xf32>
    %46 = arith.addf %45, %44 : vector<8x96xf32>
    %47 = arith.divf %45, %46 : vector<8x96xf32>
    %48 = vector.extract_strided_slice %41 {offsets = [0, 96], sizes = [8, 96], strides = [1, 1]} : vector<8x384xf32> to vector<8x96xf32>
    %49 = arith.negf %48 : vector<8x96xf32>
    %50 = math.exp %49 : vector<8x96xf32>
    %cst_22 = arith.constant 1.000000e+00 : f32
    %51 = vector.broadcast %cst_22 : f32 to vector<8x96xf32>
    %52 = arith.addf %51, %50 : vector<8x96xf32>
    %53 = arith.divf %51, %52 : vector<8x96xf32>
    %54 = vector.extract_strided_slice %41 {offsets = [0, 192], sizes = [8, 96], strides = [1, 1]} : vector<8x384xf32> to vector<8x96xf32>
    %55 = math.tanh %54 : vector<8x96xf32>
    %56 = vector.extract_strided_slice %41 {offsets = [0, 288], sizes = [8, 96], strides = [1, 1]} : vector<8x384xf32> to vector<8x96xf32>
    %57 = arith.negf %56 : vector<8x96xf32>
    %58 = math.exp %57 : vector<8x96xf32>
    %cst_23 = arith.constant 1.000000e+00 : f32
    %59 = vector.broadcast %cst_23 : f32 to vector<8x96xf32>
    %60 = arith.addf %59, %58 : vector<8x96xf32>
    %61 = arith.divf %59, %60 : vector<8x96xf32>
    %62 = arith.mulf %53, %35 : vector<8x96xf32>
    %63 = arith.mulf %47, %55 : vector<8x96xf32>
    %64 = arith.addf %62, %63 : vector<8x96xf32>
    %65 = math.tanh %64 : vector<8x96xf32>
    %66 = arith.mulf %61, %65 : vector<8x96xf32>
    %c8_24 = arith.constant 8 : index
    %c0_25 = arith.constant 0 : index
    %67 = vector.load %arg11[%c8_24, %c0_25] : memref<64x96xf32, #tpu.memory_space<vmem>>, vector<8x96xf32>
    tpu.vector_store %arg11[%c8_24, %c0_25], %66 {strides = array<i32>} : memref<64x96xf32, #tpu.memory_space<vmem>>, vector<8x96xf32>,
    %c16 = arith.constant 16 : index
    %c0_26 = arith.constant 0 : index
    %68 = vector.load %arg12[%c16, %c0_26] : memref<64x384xf32, #tpu.memory_space<vmem>>, vector<8x384xf32>
    %cst_27 = arith.constant dense<0.000000e+00> : vector<8x384xf32>
    %69 = tpu.matmul %66, %7, %cst_27 {dimension_numbers = #tpu.dot_dimension_numbers<[1], [0], [0], [1], [0, 0, 1, 1], [], []>} : vector<8x96xf32>, vector<96x384xf32>, vector<8x384xf32> -> vector<8x384xf32>
    %70 = arith.addf %68, %69 : vector<8x384xf32>
    %71 = vector.extract_strided_slice %70 {offsets = [0, 0], sizes = [8, 96], strides = [1, 1]} : vector<8x384xf32> to vector<8x96xf32>
    %72 = arith.negf %71 : vector<8x96xf32>
    %73 = math.exp %72 : vector<8x96xf32>
    %cst_28 = arith.constant 1.000000e+00 : f32
    %74 = vector.broadcast %cst_28 : f32 to vector<8x96xf32>
    %75 = arith.addf %74, %73 : vector<8x96xf32>
    %76 = arith.divf %74, %75 : vector<8x96xf32>
    %77 = vector.extract_strided_slice %70 {offsets = [0, 96], sizes = [8, 96], strides = [1, 1]} : vector<8x384xf32> to vector<8x96xf32>
    %78 = arith.negf %77 : vector<8x96xf32>
    %79 = math.exp %78 : vector<8x96xf32>
    %cst_29 = arith.constant 1.000000e+00 : f32
    %80 = vector.broadcast %cst_29 : f32 to vector<8x96xf32>
    %81 = arith.addf %80, %79 : vector<8x96xf32>
    %82 = arith.divf %80, %81 : vector<8x96xf32>
    %83 = vector.extract_strided_slice %70 {offsets = [0, 192], sizes = [8, 96], strides = [1, 1]} : vector<8x384xf32> to vector<8x96xf32>
    %84 = math.tanh %83 : vector<8x96xf32>
    %85 = vector.extract_strided_slice %70 {offsets = [0, 288], sizes = [8, 96], strides = [1, 1]} : vector<8x384xf32> to vector<8x96xf32>
    %86 = arith.negf %85 : vector<8x96xf32>
    %87 = math.exp %86 : vector<8x96xf32>
    %cst_30 = arith.constant 1.000000e+00 : f32
    %88 = vector.broadcast %cst_30 : f32 to vector<8x96xf32>
    %89 = arith.addf %88, %87 : vector<8x96xf32>
    %90 = arith.divf %88, %89 : vector<8x96xf32>
    %91 = arith.mulf %82, %64 : vector<8x96xf32>
    %92 = arith.mulf %76, %84 : vector<8x96xf32>
    %93 = arith.addf %91, %92 : vector<8x96xf32>
    %94 = math.tanh %93 : vector<8x96xf32>
    %95 = arith.mulf %90, %94 : vector<8x96xf32>
    %c16_31 = arith.constant 16 : index
    %c0_32 = arith.constant 0 : index
    %96 = vector.load %arg11[%c16_31, %c0_32] : memref<64x96xf32, #tpu.memory_space<vmem>>, vector<8x96xf32>
    tpu.vector_store %arg11[%c16_31, %c0_32], %95 {strides = array<i32>} : memref<64x96xf32, #tpu.memory_space<vmem>>, vector<8x96xf32>,
    %c24 = arith.constant 24 : index
    %c0_33 = arith.constant 0 : index
    %97 = vector.load %arg12[%c24, %c0_33] : memref<64x384xf32, #tpu.memory_space<vmem>>, vector<8x384xf32>
    %cst_34 = arith.constant dense<0.000000e+00> : vector<8x384xf32>
    %98 = tpu.matmul %95, %7, %cst_34 {dimension_numbers = #tpu.dot_dimension_numbers<[1], [0], [0], [1], [0, 0, 1, 1], [], []>} : vector<8x96xf32>, vector<96x384xf32>, vector<8x384xf32> -> vector<8x384xf32>
    %99 = arith.addf %97, %98 : vector<8x384xf32>
    %100 = vector.extract_strided_slice %99 {offsets = [0, 0], sizes = [8, 96], strides = [1, 1]} : vector<8x384xf32> to vector<8x96xf32>
    %101 = arith.negf %100 : vector<8x96xf32>
    %102 = math.exp %101 : vector<8x96xf32>
    %cst_35 = arith.constant 1.000000e+00 : f32
    %103 = vector.broadcast %cst_35 : f32 to vector<8x96xf32>
    %104 = arith.addf %103, %102 : vector<8x96xf32>
    %105 = arith.divf %103, %104 : vector<8x96xf32>
    %106 = vector.extract_strided_slice %99 {offsets = [0, 96], sizes = [8, 96], strides = [1, 1]} : vector<8x384xf32> to vector<8x96xf32>
    %107 = arith.negf %106 : vector<8x96xf32>
    %108 = math.exp %107 : vector<8x96xf32>
    %cst_36 = arith.constant 1.000000e+00 : f32
    %109 = vector.broadcast %cst_36 : f32 to vector<8x96xf32>
    %110 = arith.addf %109, %108 : vector<8x96xf32>
    %111 = arith.divf %109, %110 : vector<8x96xf32>
    %112 = vector.extract_strided_slice %99 {offsets = [0, 192], sizes = [8, 96], strides = [1, 1]} : vector<8x384xf32> to vector<8x96xf32>
    %113 = math.tanh %112 : vector<8x96xf32>
    %114 = vector.extract_strided_slice %99 {offsets = [0, 288], sizes = [8, 96], strides = [1, 1]} : vector<8x384xf32> to vector<8x96xf32>
    %115 = arith.negf %114 : vector<8x96xf32>
    %116 = math.exp %115 : vector<8x96xf32>
    %cst_37 = arith.constant 1.000000e+00 : f32
    %117 = vector.broadcast %cst_37 : f32 to vector<8x96xf32>
    %118 = arith.addf %117, %116 : vector<8x96xf32>
    %119 = arith.divf %117, %118 : vector<8x96xf32>
    %120 = arith.mulf %111, %93 : vector<8x96xf32>
    %121 = arith.mulf %105, %113 : vector<8x96xf32>
    %122 = arith.addf %120, %121 : vector<8x96xf32>
    %123 = math.tanh %122 : vector<8x96xf32>
    %124 = arith.mulf %119, %123 : vector<8x96xf32>
    %c24_38 = arith.constant 24 : index
    %c0_39 = arith.constant 0 : index
    %125 = vector.load %arg11[%c24_38, %c0_39] : memref<64x96xf32, #tpu.memory_space<vmem>>, vector<8x96xf32>
    tpu.vector_store %arg11[%c24_38, %c0_39], %124 {strides = array<i32>} : memref<64x96xf32, #tpu.memory_space<vmem>>, vector<8x96xf32>,
    %c32 = arith.constant 32 : index
    %c0_40 = arith.constant 0 : index
    %126 = vector.load %arg12[%c32, %c0_40] : memref<64x384xf32, #tpu.memory_space<vmem>>, vector<8x384xf32>
    %cst_41 = arith.constant dense<0.000000e+00> : vector<8x384xf32>
    %127 = tpu.matmul %124, %7, %cst_41 {dimension_numbers = #tpu.dot_dimension_numbers<[1], [0], [0], [1], [0, 0, 1, 1], [], []>} : vector<8x96xf32>, vector<96x384xf32>, vector<8x384xf32> -> vector<8x384xf32>
    %128 = arith.addf %126, %127 : vector<8x384xf32>
    %129 = vector.extract_strided_slice %128 {offsets = [0, 0], sizes = [8, 96], strides = [1, 1]} : vector<8x384xf32> to vector<8x96xf32>
    %130 = arith.negf %129 : vector<8x96xf32>
    %131 = math.exp %130 : vector<8x96xf32>
    %cst_42 = arith.constant 1.000000e+00 : f32
    %132 = vector.broadcast %cst_42 : f32 to vector<8x96xf32>
    %133 = arith.addf %132, %131 : vector<8x96xf32>
    %134 = arith.divf %132, %133 : vector<8x96xf32>
    %135 = vector.extract_strided_slice %128 {offsets = [0, 96], sizes = [8, 96], strides = [1, 1]} : vector<8x384xf32> to vector<8x96xf32>
    %136 = arith.negf %135 : vector<8x96xf32>
    %137 = math.exp %136 : vector<8x96xf32>
    %cst_43 = arith.constant 1.000000e+00 : f32
    %138 = vector.broadcast %cst_43 : f32 to vector<8x96xf32>
    %139 = arith.addf %138, %137 : vector<8x96xf32>
    %140 = arith.divf %138, %139 : vector<8x96xf32>
    %141 = vector.extract_strided_slice %128 {offsets = [0, 192], sizes = [8, 96], strides = [1, 1]} : vector<8x384xf32> to vector<8x96xf32>
    %142 = math.tanh %141 : vector<8x96xf32>
    %143 = vector.extract_strided_slice %128 {offsets = [0, 288], sizes = [8, 96], strides = [1, 1]} : vector<8x384xf32> to vector<8x96xf32>
    %144 = arith.negf %143 : vector<8x96xf32>
    %145 = math.exp %144 : vector<8x96xf32>
    %cst_44 = arith.constant 1.000000e+00 : f32
    %146 = vector.broadcast %cst_44 : f32 to vector<8x96xf32>
    %147 = arith.addf %146, %145 : vector<8x96xf32>
    %148 = arith.divf %146, %147 : vector<8x96xf32>
    %149 = arith.mulf %140, %122 : vector<8x96xf32>
    %150 = arith.mulf %134, %142 : vector<8x96xf32>
    %151 = arith.addf %149, %150 : vector<8x96xf32>
    %152 = math.tanh %151 : vector<8x96xf32>
    %153 = arith.mulf %148, %152 : vector<8x96xf32>
    %c32_45 = arith.constant 32 : index
    %c0_46 = arith.constant 0 : index
    %154 = vector.load %arg11[%c32_45, %c0_46] : memref<64x96xf32, #tpu.memory_space<vmem>>, vector<8x96xf32>
    tpu.vector_store %arg11[%c32_45, %c0_46], %153 {strides = array<i32>} : memref<64x96xf32, #tpu.memory_space<vmem>>, vector<8x96xf32>,
    %c40 = arith.constant 40 : index
    %c0_47 = arith.constant 0 : index
    %155 = vector.load %arg12[%c40, %c0_47] : memref<64x384xf32, #tpu.memory_space<vmem>>, vector<8x384xf32>
    %cst_48 = arith.constant dense<0.000000e+00> : vector<8x384xf32>
    %156 = tpu.matmul %153, %7, %cst_48 {dimension_numbers = #tpu.dot_dimension_numbers<[1], [0], [0], [1], [0, 0, 1, 1], [], []>} : vector<8x96xf32>, vector<96x384xf32>, vector<8x384xf32> -> vector<8x384xf32>
    %157 = arith.addf %155, %156 : vector<8x384xf32>
    %158 = vector.extract_strided_slice %157 {offsets = [0, 0], sizes = [8, 96], strides = [1, 1]} : vector<8x384xf32> to vector<8x96xf32>
    %159 = arith.negf %158 : vector<8x96xf32>
    %160 = math.exp %159 : vector<8x96xf32>
    %cst_49 = arith.constant 1.000000e+00 : f32
    %161 = vector.broadcast %cst_49 : f32 to vector<8x96xf32>
    %162 = arith.addf %161, %160 : vector<8x96xf32>
    %163 = arith.divf %161, %162 : vector<8x96xf32>
    %164 = vector.extract_strided_slice %157 {offsets = [0, 96], sizes = [8, 96], strides = [1, 1]} : vector<8x384xf32> to vector<8x96xf32>
    %165 = arith.negf %164 : vector<8x96xf32>
    %166 = math.exp %165 : vector<8x96xf32>
    %cst_50 = arith.constant 1.000000e+00 : f32
    %167 = vector.broadcast %cst_50 : f32 to vector<8x96xf32>
    %168 = arith.addf %167, %166 : vector<8x96xf32>
    %169 = arith.divf %167, %168 : vector<8x96xf32>
    %170 = vector.extract_strided_slice %157 {offsets = [0, 192], sizes = [8, 96], strides = [1, 1]} : vector<8x384xf32> to vector<8x96xf32>
    %171 = math.tanh %170 : vector<8x96xf32>
    %172 = vector.extract_strided_slice %157 {offsets = [0, 288], sizes = [8, 96], strides = [1, 1]} : vector<8x384xf32> to vector<8x96xf32>
    %173 = arith.negf %172 : vector<8x96xf32>
    %174 = math.exp %173 : vector<8x96xf32>
    %cst_51 = arith.constant 1.000000e+00 : f32
    %175 = vector.broadcast %cst_51 : f32 to vector<8x96xf32>
    %176 = arith.addf %175, %174 : vector<8x96xf32>
    %177 = arith.divf %175, %176 : vector<8x96xf32>
    %178 = arith.mulf %169, %151 : vector<8x96xf32>
    %179 = arith.mulf %163, %171 : vector<8x96xf32>
    %180 = arith.addf %178, %179 : vector<8x96xf32>
    %181 = math.tanh %180 : vector<8x96xf32>
    %182 = arith.mulf %177, %181 : vector<8x96xf32>
    %c40_52 = arith.constant 40 : index
    %c0_53 = arith.constant 0 : index
    %183 = vector.load %arg11[%c40_52, %c0_53] : memref<64x96xf32, #tpu.memory_space<vmem>>, vector<8x96xf32>
    tpu.vector_store %arg11[%c40_52, %c0_53], %182 {strides = array<i32>} : memref<64x96xf32, #tpu.memory_space<vmem>>, vector<8x96xf32>,
    %c48 = arith.constant 48 : index
    %c0_54 = arith.constant 0 : index
    %184 = vector.load %arg12[%c48, %c0_54] : memref<64x384xf32, #tpu.memory_space<vmem>>, vector<8x384xf32>
    %cst_55 = arith.constant dense<0.000000e+00> : vector<8x384xf32>
    %185 = tpu.matmul %182, %7, %cst_55 {dimension_numbers = #tpu.dot_dimension_numbers<[1], [0], [0], [1], [0, 0, 1, 1], [], []>} : vector<8x96xf32>, vector<96x384xf32>, vector<8x384xf32> -> vector<8x384xf32>
    %186 = arith.addf %184, %185 : vector<8x384xf32>
    %187 = vector.extract_strided_slice %186 {offsets = [0, 0], sizes = [8, 96], strides = [1, 1]} : vector<8x384xf32> to vector<8x96xf32>
    %188 = arith.negf %187 : vector<8x96xf32>
    %189 = math.exp %188 : vector<8x96xf32>
    %cst_56 = arith.constant 1.000000e+00 : f32
    %190 = vector.broadcast %cst_56 : f32 to vector<8x96xf32>
    %191 = arith.addf %190, %189 : vector<8x96xf32>
    %192 = arith.divf %190, %191 : vector<8x96xf32>
    %193 = vector.extract_strided_slice %186 {offsets = [0, 96], sizes = [8, 96], strides = [1, 1]} : vector<8x384xf32> to vector<8x96xf32>
    %194 = arith.negf %193 : vector<8x96xf32>
    %195 = math.exp %194 : vector<8x96xf32>
    %cst_57 = arith.constant 1.000000e+00 : f32
    %196 = vector.broadcast %cst_57 : f32 to vector<8x96xf32>
    %197 = arith.addf %196, %195 : vector<8x96xf32>
    %198 = arith.divf %196, %197 : vector<8x96xf32>
    %199 = vector.extract_strided_slice %186 {offsets = [0, 192], sizes = [8, 96], strides = [1, 1]} : vector<8x384xf32> to vector<8x96xf32>
    %200 = math.tanh %199 : vector<8x96xf32>
    %201 = vector.extract_strided_slice %186 {offsets = [0, 288], sizes = [8, 96], strides = [1, 1]} : vector<8x384xf32> to vector<8x96xf32>
    %202 = arith.negf %201 : vector<8x96xf32>
    %203 = math.exp %202 : vector<8x96xf32>
    %cst_58 = arith.constant 1.000000e+00 : f32
    %204 = vector.broadcast %cst_58 : f32 to vector<8x96xf32>
    %205 = arith.addf %204, %203 : vector<8x96xf32>
    %206 = arith.divf %204, %205 : vector<8x96xf32>
    %207 = arith.mulf %198, %180 : vector<8x96xf32>
    %208 = arith.mulf %192, %200 : vector<8x96xf32>
    %209 = arith.addf %207, %208 : vector<8x96xf32>
    %210 = math.tanh %209 : vector<8x96xf32>
    %211 = arith.mulf %206, %210 : vector<8x96xf32>
    %c48_59 = arith.constant 48 : index
    %c0_60 = arith.constant 0 : index
    %212 = vector.load %arg11[%c48_59, %c0_60] : memref<64x96xf32, #tpu.memory_space<vmem>>, vector<8x96xf32>
    tpu.vector_store %arg11[%c48_59, %c0_60], %211 {strides = array<i32>} : memref<64x96xf32, #tpu.memory_space<vmem>>, vector<8x96xf32>,
    %c56 = arith.constant 56 : index
    %c0_61 = arith.constant 0 : index
    %213 = vector.load %arg12[%c56, %c0_61] : memref<64x384xf32, #tpu.memory_space<vmem>>, vector<8x384xf32>
    %cst_62 = arith.constant dense<0.000000e+00> : vector<8x384xf32>
    %214 = tpu.matmul %211, %7, %cst_62 {dimension_numbers = #tpu.dot_dimension_numbers<[1], [0], [0], [1], [0, 0, 1, 1], [], []>} : vector<8x96xf32>, vector<96x384xf32>, vector<8x384xf32> -> vector<8x384xf32>
    %215 = arith.addf %213, %214 : vector<8x384xf32>
    %216 = vector.extract_strided_slice %215 {offsets = [0, 0], sizes = [8, 96], strides = [1, 1]} : vector<8x384xf32> to vector<8x96xf32>
    %217 = arith.negf %216 : vector<8x96xf32>
    %218 = math.exp %217 : vector<8x96xf32>
    %cst_63 = arith.constant 1.000000e+00 : f32
    %219 = vector.broadcast %cst_63 : f32 to vector<8x96xf32>
    %220 = arith.addf %219, %218 : vector<8x96xf32>
    %221 = arith.divf %219, %220 : vector<8x96xf32>
    %222 = vector.extract_strided_slice %215 {offsets = [0, 96], sizes = [8, 96], strides = [1, 1]} : vector<8x384xf32> to vector<8x96xf32>
    %223 = arith.negf %222 : vector<8x96xf32>
    %224 = math.exp %223 : vector<8x96xf32>
    %cst_64 = arith.constant 1.000000e+00 : f32
    %225 = vector.broadcast %cst_64 : f32 to vector<8x96xf32>
    %226 = arith.addf %225, %224 : vector<8x96xf32>
    %227 = arith.divf %225, %226 : vector<8x96xf32>
    %228 = vector.extract_strided_slice %215 {offsets = [0, 192], sizes = [8, 96], strides = [1, 1]} : vector<8x384xf32> to vector<8x96xf32>
    %229 = math.tanh %228 : vector<8x96xf32>
    %230 = vector.extract_strided_slice %215 {offsets = [0, 288], sizes = [8, 96], strides = [1, 1]} : vector<8x384xf32> to vector<8x96xf32>
    %231 = arith.negf %230 : vector<8x96xf32>
    %232 = math.exp %231 : vector<8x96xf32>
    %cst_65 = arith.constant 1.000000e+00 : f32
    %233 = vector.broadcast %cst_65 : f32 to vector<8x96xf32>
    %234 = arith.addf %233, %232 : vector<8x96xf32>
    %235 = arith.divf %233, %234 : vector<8x96xf32>
    %236 = arith.mulf %227, %209 : vector<8x96xf32>
    %237 = arith.mulf %221, %229 : vector<8x96xf32>
    %238 = arith.addf %236, %237 : vector<8x96xf32>
    %239 = math.tanh %238 : vector<8x96xf32>
    %240 = arith.mulf %235, %239 : vector<8x96xf32>
    %c56_66 = arith.constant 56 : index
    %c0_67 = arith.constant 0 : index
    %241 = vector.load %arg11[%c56_66, %c0_67] : memref<64x96xf32, #tpu.memory_space<vmem>>, vector<8x96xf32>
    tpu.vector_store %arg11[%c56_66, %c0_67], %240 {strides = array<i32>} : memref<64x96xf32, #tpu.memory_space<vmem>>, vector<8x96xf32>,
    %c0_68 = arith.constant 0 : index
    %c0_69 = arith.constant 0 : index
    %242 = vector.load %arg11[%c0_68, %c0_69] : memref<64x96xf32, #tpu.memory_space<vmem>>, vector<64x96xf32>
    %c0_70 = arith.constant 0 : index
    %c0_71 = arith.constant 0 : index
    %243 = vector.load %arg5[%c0_70, %c0_71] : memref<96x384xf32, #tpu.memory_space<vmem>>, vector<96x384xf32>
    %cst_72 = arith.constant dense<0.000000e+00> : vector<64x384xf32>
    %244 = tpu.matmul %242, %243, %cst_72 {dimension_numbers = #tpu.dot_dimension_numbers<[1], [0], [0], [1], [0, 0, 1, 1], [], []>} : vector<64x96xf32>, vector<96x384xf32>, vector<64x384xf32> -> vector<64x384xf32>
    %c0_73 = arith.constant 0 : index
    %c0_74 = arith.constant 0 : index
    %245 = vector.load %arg7[%c0_73, %c0_74] : memref<1x384xf32, #tpu.memory_space<vmem>>, vector<1x384xf32>
    %246 = vector.broadcast %245 : vector<1x384xf32> to vector<64x384xf32>
    %247 = arith.addf %244, %246 : vector<64x384xf32>
    %c0_75 = arith.constant 0 : index
    %c0_76 = arith.constant 0 : index
    %248 = vector.load %arg12[%c0_75, %c0_76] : memref<64x384xf32, #tpu.memory_space<vmem>>, vector<64x384xf32>
    tpu.vector_store %arg12[%c0_75, %c0_76], %247 {strides = array<i32>} : memref<64x384xf32, #tpu.memory_space<vmem>>, vector<64x384xf32>,
    %c0_77 = arith.constant 0 : index
    %c0_78 = arith.constant 0 : index
    %249 = vector.load %arg6[%c0_77, %c0_78] : memref<96x384xf32, #tpu.memory_space<vmem>>, vector<96x384xf32>
    %cst_79 = arith.constant 0.000000e+00 : f32
    %250 = vector.broadcast %cst_79 : f32 to vector<8x96xf32>
    %cst_80 = arith.constant 0.000000e+00 : f32
    %251 = vector.broadcast %cst_80 : f32 to vector<8x96xf32>
    %c0_81 = arith.constant 0 : index
    %c0_82 = arith.constant 0 : index
    %252 = vector.load %arg12[%c0_81, %c0_82] : memref<64x384xf32, #tpu.memory_space<vmem>>, vector<8x384xf32>
    %cst_83 = arith.constant dense<0.000000e+00> : vector<8x384xf32>
    %253 = tpu.matmul %250, %249, %cst_83 {dimension_numbers = #tpu.dot_dimension_numbers<[1], [0], [0], [1], [0, 0, 1, 1], [], []>} : vector<8x96xf32>, vector<96x384xf32>, vector<8x384xf32> -> vector<8x384xf32>
    %254 = arith.addf %252, %253 : vector<8x384xf32>
    %255 = vector.extract_strided_slice %254 {offsets = [0, 0], sizes = [8, 96], strides = [1, 1]} : vector<8x384xf32> to vector<8x96xf32>
    %256 = arith.negf %255 : vector<8x96xf32>
    %257 = math.exp %256 : vector<8x96xf32>
    %cst_84 = arith.constant 1.000000e+00 : f32
    %258 = vector.broadcast %cst_84 : f32 to vector<8x96xf32>
    %259 = arith.addf %258, %257 : vector<8x96xf32>
    %260 = arith.divf %258, %259 : vector<8x96xf32>
    %261 = vector.extract_strided_slice %254 {offsets = [0, 96], sizes = [8, 96], strides = [1, 1]} : vector<8x384xf32> to vector<8x96xf32>
    %262 = arith.negf %261 : vector<8x96xf32>
    %263 = math.exp %262 : vector<8x96xf32>
    %cst_85 = arith.constant 1.000000e+00 : f32
    %264 = vector.broadcast %cst_85 : f32 to vector<8x96xf32>
    %265 = arith.addf %264, %263 : vector<8x96xf32>
    %266 = arith.divf %264, %265 : vector<8x96xf32>
    %267 = vector.extract_strided_slice %254 {offsets = [0, 192], sizes = [8, 96], strides = [1, 1]} : vector<8x384xf32> to vector<8x96xf32>
    %268 = math.tanh %267 : vector<8x96xf32>
    %269 = vector.extract_strided_slice %254 {offsets = [0, 288], sizes = [8, 96], strides = [1, 1]} : vector<8x384xf32> to vector<8x96xf32>
    %270 = arith.negf %269 : vector<8x96xf32>
    %271 = math.exp %270 : vector<8x96xf32>
    %cst_86 = arith.constant 1.000000e+00 : f32
    %272 = vector.broadcast %cst_86 : f32 to vector<8x96xf32>
    %273 = arith.addf %272, %271 : vector<8x96xf32>
    %274 = arith.divf %272, %273 : vector<8x96xf32>
    %275 = arith.mulf %266, %251 : vector<8x96xf32>
    %276 = arith.mulf %260, %268 : vector<8x96xf32>
    %277 = arith.addf %275, %276 : vector<8x96xf32>
    %278 = math.tanh %277 : vector<8x96xf32>
    %279 = arith.mulf %274, %278 : vector<8x96xf32>
    %c8_87 = arith.constant 8 : index
    %c0_88 = arith.constant 0 : index
    %280 = vector.load %arg12[%c8_87, %c0_88] : memref<64x384xf32, #tpu.memory_space<vmem>>, vector<8x384xf32>
    %cst_89 = arith.constant dense<0.000000e+00> : vector<8x384xf32>
    %281 = tpu.matmul %279, %249, %cst_89 {dimension_numbers = #tpu.dot_dimension_numbers<[1], [0], [0], [1], [0, 0, 1, 1], [], []>} : vector<8x96xf32>, vector<96x384xf32>, vector<8x384xf32> -> vector<8x384xf32>
    %282 = arith.addf %280, %281 : vector<8x384xf32>
    %283 = vector.extract_strided_slice %282 {offsets = [0, 0], sizes = [8, 96], strides = [1, 1]} : vector<8x384xf32> to vector<8x96xf32>
    %284 = arith.negf %283 : vector<8x96xf32>
    %285 = math.exp %284 : vector<8x96xf32>
    %cst_90 = arith.constant 1.000000e+00 : f32
    %286 = vector.broadcast %cst_90 : f32 to vector<8x96xf32>
    %287 = arith.addf %286, %285 : vector<8x96xf32>
    %288 = arith.divf %286, %287 : vector<8x96xf32>
    %289 = vector.extract_strided_slice %282 {offsets = [0, 96], sizes = [8, 96], strides = [1, 1]} : vector<8x384xf32> to vector<8x96xf32>
    %290 = arith.negf %289 : vector<8x96xf32>
    %291 = math.exp %290 : vector<8x96xf32>
    %cst_91 = arith.constant 1.000000e+00 : f32
    %292 = vector.broadcast %cst_91 : f32 to vector<8x96xf32>
    %293 = arith.addf %292, %291 : vector<8x96xf32>
    %294 = arith.divf %292, %293 : vector<8x96xf32>
    %295 = vector.extract_strided_slice %282 {offsets = [0, 192], sizes = [8, 96], strides = [1, 1]} : vector<8x384xf32> to vector<8x96xf32>
    %296 = math.tanh %295 : vector<8x96xf32>
    %297 = vector.extract_strided_slice %282 {offsets = [0, 288], sizes = [8, 96], strides = [1, 1]} : vector<8x384xf32> to vector<8x96xf32>
    %298 = arith.negf %297 : vector<8x96xf32>
    %299 = math.exp %298 : vector<8x96xf32>
    %cst_92 = arith.constant 1.000000e+00 : f32
    %300 = vector.broadcast %cst_92 : f32 to vector<8x96xf32>
    %301 = arith.addf %300, %299 : vector<8x96xf32>
    %302 = arith.divf %300, %301 : vector<8x96xf32>
    %303 = arith.mulf %294, %277 : vector<8x96xf32>
    %304 = arith.mulf %288, %296 : vector<8x96xf32>
    %305 = arith.addf %303, %304 : vector<8x96xf32>
    %306 = math.tanh %305 : vector<8x96xf32>
    %307 = arith.mulf %302, %306 : vector<8x96xf32>
    %c16_93 = arith.constant 16 : index
    %c0_94 = arith.constant 0 : index
    %308 = vector.load %arg12[%c16_93, %c0_94] : memref<64x384xf32, #tpu.memory_space<vmem>>, vector<8x384xf32>
    %cst_95 = arith.constant dense<0.000000e+00> : vector<8x384xf32>
    %309 = tpu.matmul %307, %249, %cst_95 {dimension_numbers = #tpu.dot_dimension_numbers<[1], [0], [0], [1], [0, 0, 1, 1], [], []>} : vector<8x96xf32>, vector<96x384xf32>, vector<8x384xf32> -> vector<8x384xf32>
    %310 = arith.addf %308, %309 : vector<8x384xf32>
    %311 = vector.extract_strided_slice %310 {offsets = [0, 0], sizes = [8, 96], strides = [1, 1]} : vector<8x384xf32> to vector<8x96xf32>
    %312 = arith.negf %311 : vector<8x96xf32>
    %313 = math.exp %312 : vector<8x96xf32>
    %cst_96 = arith.constant 1.000000e+00 : f32
    %314 = vector.broadcast %cst_96 : f32 to vector<8x96xf32>
    %315 = arith.addf %314, %313 : vector<8x96xf32>
    %316 = arith.divf %314, %315 : vector<8x96xf32>
    %317 = vector.extract_strided_slice %310 {offsets = [0, 96], sizes = [8, 96], strides = [1, 1]} : vector<8x384xf32> to vector<8x96xf32>
    %318 = arith.negf %317 : vector<8x96xf32>
    %319 = math.exp %318 : vector<8x96xf32>
    %cst_97 = arith.constant 1.000000e+00 : f32
    %320 = vector.broadcast %cst_97 : f32 to vector<8x96xf32>
    %321 = arith.addf %320, %319 : vector<8x96xf32>
    %322 = arith.divf %320, %321 : vector<8x96xf32>
    %323 = vector.extract_strided_slice %310 {offsets = [0, 192], sizes = [8, 96], strides = [1, 1]} : vector<8x384xf32> to vector<8x96xf32>
    %324 = math.tanh %323 : vector<8x96xf32>
    %325 = vector.extract_strided_slice %310 {offsets = [0, 288], sizes = [8, 96], strides = [1, 1]} : vector<8x384xf32> to vector<8x96xf32>
    %326 = arith.negf %325 : vector<8x96xf32>
    %327 = math.exp %326 : vector<8x96xf32>
    %cst_98 = arith.constant 1.000000e+00 : f32
    %328 = vector.broadcast %cst_98 : f32 to vector<8x96xf32>
    %329 = arith.addf %328, %327 : vector<8x96xf32>
    %330 = arith.divf %328, %329 : vector<8x96xf32>
    %331 = arith.mulf %322, %305 : vector<8x96xf32>
    %332 = arith.mulf %316, %324 : vector<8x96xf32>
    %333 = arith.addf %331, %332 : vector<8x96xf32>
    %334 = math.tanh %333 : vector<8x96xf32>
    %335 = arith.mulf %330, %334 : vector<8x96xf32>
    %c24_99 = arith.constant 24 : index
    %c0_100 = arith.constant 0 : index
    %336 = vector.load %arg12[%c24_99, %c0_100] : memref<64x384xf32, #tpu.memory_space<vmem>>, vector<8x384xf32>
    %cst_101 = arith.constant dense<0.000000e+00> : vector<8x384xf32>
    %337 = tpu.matmul %335, %249, %cst_101 {dimension_numbers = #tpu.dot_dimension_numbers<[1], [0], [0], [1], [0, 0, 1, 1], [], []>} : vector<8x96xf32>, vector<96x384xf32>, vector<8x384xf32> -> vector<8x384xf32>
    %338 = arith.addf %336, %337 : vector<8x384xf32>
    %339 = vector.extract_strided_slice %338 {offsets = [0, 0], sizes = [8, 96], strides = [1, 1]} : vector<8x384xf32> to vector<8x96xf32>
    %340 = arith.negf %339 : vector<8x96xf32>
    %341 = math.exp %340 : vector<8x96xf32>
    %cst_102 = arith.constant 1.000000e+00 : f32
    %342 = vector.broadcast %cst_102 : f32 to vector<8x96xf32>
    %343 = arith.addf %342, %341 : vector<8x96xf32>
    %344 = arith.divf %342, %343 : vector<8x96xf32>
    %345 = vector.extract_strided_slice %338 {offsets = [0, 96], sizes = [8, 96], strides = [1, 1]} : vector<8x384xf32> to vector<8x96xf32>
    %346 = arith.negf %345 : vector<8x96xf32>
    %347 = math.exp %346 : vector<8x96xf32>
    %cst_103 = arith.constant 1.000000e+00 : f32
    %348 = vector.broadcast %cst_103 : f32 to vector<8x96xf32>
    %349 = arith.addf %348, %347 : vector<8x96xf32>
    %350 = arith.divf %348, %349 : vector<8x96xf32>
    %351 = vector.extract_strided_slice %338 {offsets = [0, 192], sizes = [8, 96], strides = [1, 1]} : vector<8x384xf32> to vector<8x96xf32>
    %352 = math.tanh %351 : vector<8x96xf32>
    %353 = vector.extract_strided_slice %338 {offsets = [0, 288], sizes = [8, 96], strides = [1, 1]} : vector<8x384xf32> to vector<8x96xf32>
    %354 = arith.negf %353 : vector<8x96xf32>
    %355 = math.exp %354 : vector<8x96xf32>
    %cst_104 = arith.constant 1.000000e+00 : f32
    %356 = vector.broadcast %cst_104 : f32 to vector<8x96xf32>
    %357 = arith.addf %356, %355 : vector<8x96xf32>
    %358 = arith.divf %356, %357 : vector<8x96xf32>
    %359 = arith.mulf %350, %333 : vector<8x96xf32>
    %360 = arith.mulf %344, %352 : vector<8x96xf32>
    %361 = arith.addf %359, %360 : vector<8x96xf32>
    %362 = math.tanh %361 : vector<8x96xf32>
    %363 = arith.mulf %358, %362 : vector<8x96xf32>
    %c32_105 = arith.constant 32 : index
    %c0_106 = arith.constant 0 : index
    %364 = vector.load %arg12[%c32_105, %c0_106] : memref<64x384xf32, #tpu.memory_space<vmem>>, vector<8x384xf32>
    %cst_107 = arith.constant dense<0.000000e+00> : vector<8x384xf32>
    %365 = tpu.matmul %363, %249, %cst_107 {dimension_numbers = #tpu.dot_dimension_numbers<[1], [0], [0], [1], [0, 0, 1, 1], [], []>} : vector<8x96xf32>, vector<96x384xf32>, vector<8x384xf32> -> vector<8x384xf32>
    %366 = arith.addf %364, %365 : vector<8x384xf32>
    %367 = vector.extract_strided_slice %366 {offsets = [0, 0], sizes = [8, 96], strides = [1, 1]} : vector<8x384xf32> to vector<8x96xf32>
    %368 = arith.negf %367 : vector<8x96xf32>
    %369 = math.exp %368 : vector<8x96xf32>
    %cst_108 = arith.constant 1.000000e+00 : f32
    %370 = vector.broadcast %cst_108 : f32 to vector<8x96xf32>
    %371 = arith.addf %370, %369 : vector<8x96xf32>
    %372 = arith.divf %370, %371 : vector<8x96xf32>
    %373 = vector.extract_strided_slice %366 {offsets = [0, 96], sizes = [8, 96], strides = [1, 1]} : vector<8x384xf32> to vector<8x96xf32>
    %374 = arith.negf %373 : vector<8x96xf32>
    %375 = math.exp %374 : vector<8x96xf32>
    %cst_109 = arith.constant 1.000000e+00 : f32
    %376 = vector.broadcast %cst_109 : f32 to vector<8x96xf32>
    %377 = arith.addf %376, %375 : vector<8x96xf32>
    %378 = arith.divf %376, %377 : vector<8x96xf32>
    %379 = vector.extract_strided_slice %366 {offsets = [0, 192], sizes = [8, 96], strides = [1, 1]} : vector<8x384xf32> to vector<8x96xf32>
    %380 = math.tanh %379 : vector<8x96xf32>
    %381 = vector.extract_strided_slice %366 {offsets = [0, 288], sizes = [8, 96], strides = [1, 1]} : vector<8x384xf32> to vector<8x96xf32>
    %382 = arith.negf %381 : vector<8x96xf32>
    %383 = math.exp %382 : vector<8x96xf32>
    %cst_110 = arith.constant 1.000000e+00 : f32
    %384 = vector.broadcast %cst_110 : f32 to vector<8x96xf32>
    %385 = arith.addf %384, %383 : vector<8x96xf32>
    %386 = arith.divf %384, %385 : vector<8x96xf32>
    %387 = arith.mulf %378, %361 : vector<8x96xf32>
    %388 = arith.mulf %372, %380 : vector<8x96xf32>
    %389 = arith.addf %387, %388 : vector<8x96xf32>
    %390 = math.tanh %389 : vector<8x96xf32>
    %391 = arith.mulf %386, %390 : vector<8x96xf32>
    %c40_111 = arith.constant 40 : index
    %c0_112 = arith.constant 0 : index
    %392 = vector.load %arg12[%c40_111, %c0_112] : memref<64x384xf32, #tpu.memory_space<vmem>>, vector<8x384xf32>
    %cst_113 = arith.constant dense<0.000000e+00> : vector<8x384xf32>
    %393 = tpu.matmul %391, %249, %cst_113 {dimension_numbers = #tpu.dot_dimension_numbers<[1], [0], [0], [1], [0, 0, 1, 1], [], []>} : vector<8x96xf32>, vector<96x384xf32>, vector<8x384xf32> -> vector<8x384xf32>
    %394 = arith.addf %392, %393 : vector<8x384xf32>
    %395 = vector.extract_strided_slice %394 {offsets = [0, 0], sizes = [8, 96], strides = [1, 1]} : vector<8x384xf32> to vector<8x96xf32>
    %396 = arith.negf %395 : vector<8x96xf32>
    %397 = math.exp %396 : vector<8x96xf32>
    %cst_114 = arith.constant 1.000000e+00 : f32
    %398 = vector.broadcast %cst_114 : f32 to vector<8x96xf32>
    %399 = arith.addf %398, %397 : vector<8x96xf32>
    %400 = arith.divf %398, %399 : vector<8x96xf32>
    %401 = vector.extract_strided_slice %394 {offsets = [0, 96], sizes = [8, 96], strides = [1, 1]} : vector<8x384xf32> to vector<8x96xf32>
    %402 = arith.negf %401 : vector<8x96xf32>
    %403 = math.exp %402 : vector<8x96xf32>
    %cst_115 = arith.constant 1.000000e+00 : f32
    %404 = vector.broadcast %cst_115 : f32 to vector<8x96xf32>
    %405 = arith.addf %404, %403 : vector<8x96xf32>
    %406 = arith.divf %404, %405 : vector<8x96xf32>
    %407 = vector.extract_strided_slice %394 {offsets = [0, 192], sizes = [8, 96], strides = [1, 1]} : vector<8x384xf32> to vector<8x96xf32>
    %408 = math.tanh %407 : vector<8x96xf32>
    %409 = vector.extract_strided_slice %394 {offsets = [0, 288], sizes = [8, 96], strides = [1, 1]} : vector<8x384xf32> to vector<8x96xf32>
    %410 = arith.negf %409 : vector<8x96xf32>
    %411 = math.exp %410 : vector<8x96xf32>
    %cst_116 = arith.constant 1.000000e+00 : f32
    %412 = vector.broadcast %cst_116 : f32 to vector<8x96xf32>
    %413 = arith.addf %412, %411 : vector<8x96xf32>
    %414 = arith.divf %412, %413 : vector<8x96xf32>
    %415 = arith.mulf %406, %389 : vector<8x96xf32>
    %416 = arith.mulf %400, %408 : vector<8x96xf32>
    %417 = arith.addf %415, %416 : vector<8x96xf32>
    %418 = math.tanh %417 : vector<8x96xf32>
    %419 = arith.mulf %414, %418 : vector<8x96xf32>
    %c48_117 = arith.constant 48 : index
    %c0_118 = arith.constant 0 : index
    %420 = vector.load %arg12[%c48_117, %c0_118] : memref<64x384xf32, #tpu.memory_space<vmem>>, vector<8x384xf32>
    %cst_119 = arith.constant dense<0.000000e+00> : vector<8x384xf32>
    %421 = tpu.matmul %419, %249, %cst_119 {dimension_numbers = #tpu.dot_dimension_numbers<[1], [0], [0], [1], [0, 0, 1, 1], [], []>} : vector<8x96xf32>, vector<96x384xf32>, vector<8x384xf32> -> vector<8x384xf32>
    %422 = arith.addf %420, %421 : vector<8x384xf32>
    %423 = vector.extract_strided_slice %422 {offsets = [0, 0], sizes = [8, 96], strides = [1, 1]} : vector<8x384xf32> to vector<8x96xf32>
    %424 = arith.negf %423 : vector<8x96xf32>
    %425 = math.exp %424 : vector<8x96xf32>
    %cst_120 = arith.constant 1.000000e+00 : f32
    %426 = vector.broadcast %cst_120 : f32 to vector<8x96xf32>
    %427 = arith.addf %426, %425 : vector<8x96xf32>
    %428 = arith.divf %426, %427 : vector<8x96xf32>
    %429 = vector.extract_strided_slice %422 {offsets = [0, 96], sizes = [8, 96], strides = [1, 1]} : vector<8x384xf32> to vector<8x96xf32>
    %430 = arith.negf %429 : vector<8x96xf32>
    %431 = math.exp %430 : vector<8x96xf32>
    %cst_121 = arith.constant 1.000000e+00 : f32
    %432 = vector.broadcast %cst_121 : f32 to vector<8x96xf32>
    %433 = arith.addf %432, %431 : vector<8x96xf32>
    %434 = arith.divf %432, %433 : vector<8x96xf32>
    %435 = vector.extract_strided_slice %422 {offsets = [0, 192], sizes = [8, 96], strides = [1, 1]} : vector<8x384xf32> to vector<8x96xf32>
    %436 = math.tanh %435 : vector<8x96xf32>
    %437 = vector.extract_strided_slice %422 {offsets = [0, 288], sizes = [8, 96], strides = [1, 1]} : vector<8x384xf32> to vector<8x96xf32>
    %438 = arith.negf %437 : vector<8x96xf32>
    %439 = math.exp %438 : vector<8x96xf32>
    %cst_122 = arith.constant 1.000000e+00 : f32
    %440 = vector.broadcast %cst_122 : f32 to vector<8x96xf32>
    %441 = arith.addf %440, %439 : vector<8x96xf32>
    %442 = arith.divf %440, %441 : vector<8x96xf32>
    %443 = arith.mulf %434, %417 : vector<8x96xf32>
    %444 = arith.mulf %428, %436 : vector<8x96xf32>
    %445 = arith.addf %443, %444 : vector<8x96xf32>
    %446 = math.tanh %445 : vector<8x96xf32>
    %447 = arith.mulf %442, %446 : vector<8x96xf32>
    %c56_123 = arith.constant 56 : index
    %c0_124 = arith.constant 0 : index
    %448 = vector.load %arg12[%c56_123, %c0_124] : memref<64x384xf32, #tpu.memory_space<vmem>>, vector<8x384xf32>
    %cst_125 = arith.constant dense<0.000000e+00> : vector<8x384xf32>
    %449 = tpu.matmul %447, %249, %cst_125 {dimension_numbers = #tpu.dot_dimension_numbers<[1], [0], [0], [1], [0, 0, 1, 1], [], []>} : vector<8x96xf32>, vector<96x384xf32>, vector<8x384xf32> -> vector<8x384xf32>
    %450 = arith.addf %448, %449 : vector<8x384xf32>
    %451 = vector.extract_strided_slice %450 {offsets = [0, 0], sizes = [8, 96], strides = [1, 1]} : vector<8x384xf32> to vector<8x96xf32>
    %452 = arith.negf %451 : vector<8x96xf32>
    %453 = math.exp %452 : vector<8x96xf32>
    %cst_126 = arith.constant 1.000000e+00 : f32
    %454 = vector.broadcast %cst_126 : f32 to vector<8x96xf32>
    %455 = arith.addf %454, %453 : vector<8x96xf32>
    %456 = arith.divf %454, %455 : vector<8x96xf32>
    %457 = vector.extract_strided_slice %450 {offsets = [0, 96], sizes = [8, 96], strides = [1, 1]} : vector<8x384xf32> to vector<8x96xf32>
    %458 = arith.negf %457 : vector<8x96xf32>
    %459 = math.exp %458 : vector<8x96xf32>
    %cst_127 = arith.constant 1.000000e+00 : f32
    %460 = vector.broadcast %cst_127 : f32 to vector<8x96xf32>
    %461 = arith.addf %460, %459 : vector<8x96xf32>
    %462 = arith.divf %460, %461 : vector<8x96xf32>
    %463 = vector.extract_strided_slice %450 {offsets = [0, 192], sizes = [8, 96], strides = [1, 1]} : vector<8x384xf32> to vector<8x96xf32>
    %464 = math.tanh %463 : vector<8x96xf32>
    %465 = vector.extract_strided_slice %450 {offsets = [0, 288], sizes = [8, 96], strides = [1, 1]} : vector<8x384xf32> to vector<8x96xf32>
    %466 = arith.negf %465 : vector<8x96xf32>
    %467 = math.exp %466 : vector<8x96xf32>
    %cst_128 = arith.constant 1.000000e+00 : f32
    %468 = vector.broadcast %cst_128 : f32 to vector<8x96xf32>
    %469 = arith.addf %468, %467 : vector<8x96xf32>
    %470 = arith.divf %468, %469 : vector<8x96xf32>
    %471 = arith.mulf %462, %445 : vector<8x96xf32>
    %472 = arith.mulf %456, %464 : vector<8x96xf32>
    %473 = arith.addf %471, %472 : vector<8x96xf32>
    %474 = math.tanh %473 : vector<8x96xf32>
    %475 = arith.mulf %470, %474 : vector<8x96xf32>
    %c0_129 = arith.constant 0 : index
    %c0_130 = arith.constant 0 : index
    %476 = vector.load %arg8[%c0_129, %c0_130] : memref<96x4xf32, #tpu.memory_space<vmem>>, vector<96x4xf32>
    %cst_131 = arith.constant dense<0.000000e+00> : vector<8x4xf32>
    %477 = tpu.matmul %475, %476, %cst_131 {dimension_numbers = #tpu.dot_dimension_numbers<[1], [0], [0], [1], [0, 0, 1, 1], [], []>} : vector<8x96xf32>, vector<96x4xf32>, vector<8x4xf32> -> vector<8x4xf32>
    %c0_132 = arith.constant 0 : index
    %c0_133 = arith.constant 0 : index
    %478 = vector.load %arg9[%c0_132, %c0_133] : memref<1x4xf32, #tpu.memory_space<vmem>>, vector<1x4xf32>
    %479 = vector.broadcast %478 : vector<1x4xf32> to vector<8x4xf32>
    %480 = arith.addf %477, %479 : vector<8x4xf32>
    %481 = arith.negf %480 : vector<8x4xf32>
    %482 = math.exp %481 : vector<8x4xf32>
    %cst_134 = arith.constant 1.000000e+00 : f32
    %483 = vector.broadcast %cst_134 : f32 to vector<8x4xf32>
    %484 = arith.addf %483, %482 : vector<8x4xf32>
    %485 = arith.divf %483, %484 : vector<8x4xf32>
    %c0_135 = arith.constant 0 : index
    %c0_136 = arith.constant 0 : index
    %486 = vector.load %arg10[%c0_135, %c0_136] : memref<8x4xf32, #tpu.memory_space<vmem>>, vector<8x4xf32>
    tpu.vector_store %arg10[%c0_135, %c0_136], %485 {strides = array<i32>} : memref<8x4xf32, #tpu.memory_space<vmem>>, vector<8x4xf32>,
    return
  }
  func.func @transform_0(%arg0: i32) -> (i32, i32) {
    %c0_i32 = arith.constant 0 : i32
    %c0_i32_0 = arith.constant 0 : i32
    %c0_i32_1 = arith.constant 0 : i32
    return %c0_i32, %c0_i32_0 : i32, i32
  }
  func.func @transform_1(%arg0: i32) -> (i32, i32) {
    %c0_i32 = arith.constant 0 : i32
    %c0_i32_0 = arith.constant 0 : i32
    %c0_i32_1 = arith.constant 0 : i32
    return %c0_i32, %c0_i32_0 : i32, i32
  }
  func.func @transform_2(%arg0: i32) -> (i32, i32) {
    %c0_i32 = arith.constant 0 : i32
    %c0_i32_0 = arith.constant 0 : i32
    %c0_i32_1 = arith.constant 0 : i32
    return %c0_i32, %c0_i32_0 : i32, i32
  }
  func.func @transform_3(%arg0: i32) -> (i32, i32) {
    %c0_i32 = arith.constant 0 : i32
    %c0_i32_0 = arith.constant 0 : i32
    %c0_i32_1 = arith.constant 0 : i32
    return %c0_i32, %c0_i32_0 : i32, i32
  }
  func.func @transform_4(%arg0: i32) -> (i32, i32) {
    %c0_i32 = arith.constant 0 : i32
    %c0_i32_0 = arith.constant 0 : i32
    %c0_i32_1 = arith.constant 0 : i32
    return %c0_i32, %c0_i32_0 : i32, i32
  }
  func.func @transform_5(%arg0: i32) -> (i32, i32) {
    %c0_i32 = arith.constant 0 : i32
    %c0_i32_0 = arith.constant 0 : i32
    %c0_i32_1 = arith.constant 0 : i32
    return %c0_i32, %c0_i32_0 : i32, i32
  }
  func.func @transform_6(%arg0: i32) -> (i32, i32) {
    %c0_i32 = arith.constant 0 : i32
    %c0_i32_0 = arith.constant 0 : i32
    %c0_i32_1 = arith.constant 0 : i32
    return %c0_i32, %c0_i32_0 : i32, i32
  }
  func.func @transform_7(%arg0: i32) -> (i32, i32) {
    %c0_i32 = arith.constant 0 : i32
    %c0_i32_0 = arith.constant 0 : i32
    %c0_i32_1 = arith.constant 0 : i32
    return %c0_i32, %c0_i32_0 : i32, i32
  }
  func.func @transform_8(%arg0: i32) -> (i32, i32) {
    %c0_i32 = arith.constant 0 : i32
    %c0_i32_0 = arith.constant 0 : i32
    %c0_i32_1 = arith.constant 0 : i32
    return %c0_i32, %c0_i32_0 : i32, i32
  }
  func.func @transform_9(%arg0: i32) -> (i32, i32) {
    %c0_i32 = arith.constant 0 : i32
    %c0_i32_0 = arith.constant 0 : i32
    %c0_i32_1 = arith.constant 0 : i32
    return %c0_i32, %c0_i32_0 : i32, i32
  }
}

</mosaic_0001>

<llo_original>
// kernel: multi_input_lstm_forward.1
$region0: #{multi_input_lstm_forward.1}
  #allocation0 [shape = 'u32[]', space=smem, size = 0x4, offset = 0x4, fixed_abs, tag = 'smem constant byte address 0x4 - core index']
  #allocation1 [shape = 'u32[144,128]{1,0:T(1,128)}', space=vmem, size = 0x12000, scoped, tag = 'internal scratch']
  #allocation2 [shape = 'f32[64,96]{1,0:T(8,128)}', space=vmem, size = 0x8000, scoped, tag = 'scratch operand']
  #allocation3 [shape = 'f32[64,384]{1,0:T(8,128)}', space=vmem, size = 0x18000, scoped, tag = 'scratch operand']
  %s0 = inlined_call_operand.vmem [shape: f32[64,72], index: 0, kind: input, shape index: {}]
  %s1 = inlined_call_operand.vmem [shape: f32[72,384], index: 1, kind: input, shape index: {}]
  %s2 = inlined_call_operand.vmem [shape: f32[96,384], index: 2, kind: input, shape index: {}]
  %s3 = inlined_call_operand.vmem [shape: f32[1,384], index: 3, kind: input, shape index: {}]
  %s4 = inlined_call_operand.hbm [shape: f32[96,384], index: 4, kind: input, shape index: {}]
  %s5 = inlined_call_operand.hbm [shape: f32[96,384], index: 5, kind: input, shape index: {}]
  %s6 = inlined_call_operand.vmem [shape: f32[1,384], index: 6, kind: input, shape index: {}]
  %s7 = inlined_call_operand.vmem [shape: f32[96,4], index: 7, kind: input, shape index: {}]
  %s8 = inlined_call_operand.vmem [shape: f32[1,4], index: 8, kind: input, shape index: {}]
  %s9 = inlined_call_operand.vmem [shape: f32[8,4], index: 9, kind: output, shape index: {}]
  %s10 = sld [smem:[#allocation0]]
  $region54: #{multi_input_lstm_forward.1} parent=0
    _
  %s12 = ssub.s32 1, %s10
  %s13 = scalar_select 0, %s12, %s10
  $region1: #{multi_input_lstm_forward.1} parent=0
    #allocation4 [shape = 'u8[147456]{0}', space=vmem, size = 0x24000, scoped, tag = 'input window, operand 4, single buffered']
    #allocation5 [shape = 's32[1]{0}', space=sflag, size = 0x4, scoped, tag = 'scoped memory for multi_input_lstm_forward.1']
    #allocation6 [shape = 'u8[147456]{0}', space=vmem, size = 0x24000, scoped, tag = 'input window, operand 5, single buffered']
    #allocation7 [shape = 's32[1]{0}', space=sflag, size = 0x4, scoped, tag = 'scoped memory for multi_input_lstm_forward.1']
    %14 = vsyncpa [#allocation5], 0
    %15 = vsyncpa [#allocation7], 0
    // Predicated region
    $region2: #{multi_input_lstm_forward.1} parent=1 // pred_check
      _
    $region3: #{multi_input_lstm_forward.1} parent=1 // pred_check_branch
      %17 = sbr.rel (0) target = $region5
    $region4: #{multi_input_lstm_forward.1} parent=1 // pred_region
      _
    $region5: #{multi_input_lstm_forward.1} parent=1 // pred_fallthru
      _
    // Predicated region
    $region6: #{multi_input_lstm_forward.1} parent=1 // pred_check
      _
    $region7: #{multi_input_lstm_forward.1} parent=1 // pred_check_branch
      %19 = sbr.rel (0) target = $region9
    $region8: #{multi_input_lstm_forward.1} parent=1 // pred_region
      _
    $region9: #{multi_input_lstm_forward.1} parent=1 // pred_fallthru
      _
    // Predicated region
    $region10: #{multi_input_lstm_forward.1} parent=1 // pred_check
      _
    $region11: #{multi_input_lstm_forward.1} parent=1 // pred_check_branch
      %21 = sbr.rel (0) target = $region13
    $region12: #{multi_input_lstm_forward.1} parent=1 // pred_region
      _
    $region13: #{multi_input_lstm_forward.1} parent=1 // pred_fallthru
      _
    // Predicated region
    $region14: #{multi_input_lstm_forward.1} parent=1 // pred_check
      _
    $region15: #{multi_input_lstm_forward.1} parent=1 // pred_check_branch
      %23 = sbr.rel (0) target = $region17
    $region16: #{multi_input_lstm_forward.1} parent=1 // pred_region
      _
    $region17: #{multi_input_lstm_forward.1} parent=1 // pred_fallthru
      _
    // Predicated region
    $region18: #{multi_input_lstm_forward.1} parent=1 // pred_check
      _
    $region19: #{multi_input_lstm_forward.1} parent=1 // pred_check_branch
      %25 = sbr.rel (0) target = $region21
    $region20: #{multi_input_lstm_forward.1} parent=1 // pred_region
      %s27 = ssub.s32 4608, 4608
      %28 = vsyncadd [#allocation5], %s27
      %s29 = sshll.u32 [#allocation4], 4
      %s30 = int_to_ptr.vmem [resolvable:$true] %s29
      %35 = dma.hbm_to_vmem [thread:$0]  %s4, 4608, %s30, [#allocation5], 384, 384, 24
    $region21: #{multi_input_lstm_forward.1} parent=1 // pred_fallthru
      _
    // Predicated region
    $region22: #{multi_input_lstm_forward.1} parent=1 // pred_check
      _
    $region23: #{multi_input_lstm_forward.1} parent=1 // pred_check_branch
      %37 = sbr.rel (0) target = $region25
    $region24: #{multi_input_lstm_forward.1} parent=1 // pred_region
      %s39 = ssub.s32 4608, 4608
      %40 = vsyncadd [#allocation7], %s39
      %s41 = sshll.u32 [#allocation6], 4
      %s42 = int_to_ptr.vmem [resolvable:$true] %s41
      %47 = dma.hbm_to_vmem [thread:$0]  %s5, 4608, %s42, [#allocation7], 384, 384, 24
    $region25: #{multi_input_lstm_forward.1} parent=1 // pred_fallthru
      _
    // Predicated region
    $region26: #{multi_input_lstm_forward.1} parent=1 // pred_check
      _
    $region27: #{multi_input_lstm_forward.1} parent=1 // pred_check_branch
      %49 = sbr.rel (0) target = $region29
    $region28: #{multi_input_lstm_forward.1} parent=1 // pred_region
      _
    $region29: #{multi_input_lstm_forward.1} parent=1 // pred_fallthru
      _
    // Predicated region
    $region30: #{multi_input_lstm_forward.1} parent=1 // pred_check
      _
    $region31: #{multi_input_lstm_forward.1} parent=1 // pred_check_branch
      %51 = sbr.rel (0) target = $region33
    $region32: #{multi_input_lstm_forward.1} parent=1 // pred_region
      _
    $region33: #{multi_input_lstm_forward.1} parent=1 // pred_fallthru
      _
    // Predicated region
    $region34: #{multi_input_lstm_forward.1} parent=1 // pred_check
      _
    $region35: #{multi_input_lstm_forward.1} parent=1 // pred_check_branch
      %53 = sbr.rel (0) target = $region37
    $region36: #{multi_input_lstm_forward.1} parent=1 // pred_region
      _
    $region37: #{multi_input_lstm_forward.1} parent=1 // pred_fallthru
      _
    // Predicated region
    $region38: #{multi_input_lstm_forward.1} parent=1 // pred_check
      _
    $region39: #{multi_input_lstm_forward.1} parent=1 // pred_check_branch
      %55 = sbr.rel (0) target = $region41
    $region40: #{multi_input_lstm_forward.1} parent=1 // pred_region
      %56 = dma.done [#allocation5], 4608
    $region41: #{multi_input_lstm_forward.1} parent=1 // pred_fallthru
      _
    // Predicated region
    $region42: #{multi_input_lstm_forward.1} parent=1 // pred_check
      _
    $region43: #{multi_input_lstm_forward.1} parent=1 // pred_check_branch
      %58 = sbr.rel (0) target = $region45
    $region44: #{multi_input_lstm_forward.1} parent=1 // pred_region
      %59 = dma.done [#allocation7], 4608
    $region45: #{multi_input_lstm_forward.1} parent=1 // pred_fallthru
      _
    %v60 = vld [vmem:[%s0] sm:$0xff]
    %v61 = vld [vmem:[%s0 + $0x8] sm:$0xff]
    %v62 = vld [vmem:[%s0 + $0x10] sm:$0xff]
    %v63 = vld [vmem:[%s0 + $0x18] sm:$0xff]
    %v64 = vld [vmem:[%s0 + $0x20] sm:$0xff]
    %v65 = vld [vmem:[%s0 + $0x28] sm:$0xff]
    %v66 = vld [vmem:[%s0 + $0x30] sm:$0xff]
    %v67 = vld [vmem:[%s0 + $0x38] sm:$0xff]
    %v68 = vld [vmem:[%s1] sm:$0xff]
    %v69 = vld [vmem:[%s1 + $0x8] sm:$0xff]
    %v70 = vld [vmem:[%s1 + $0x10] sm:$0xff]
    %v71 = vld [vmem:[%s1 + $0x18] sm:$0xff]
    %v72 = vld [vmem:[%s1 + $0x20] sm:$0xff]
    %v73 = vld [vmem:[%s1 + $0x28] sm:$0xff]
    %v74 = vld [vmem:[%s1 + $0x30] sm:$0xff]
    %v75 = vld [vmem:[%s1 + $0x38] sm:$0xff]
    %v76 = vld [vmem:[%s1 + $0x40] sm:$0xff]
    %v77 = vld [vmem:[%s1 + $0x48] sm:$0xff]
    %v78 = vld [vmem:[%s1 + $0x50] sm:$0xff]
    %v79 = vld [vmem:[%s1 + $0x58] sm:$0xff]
    %v80 = vld [vmem:[%s1 + $0x60] sm:$0xff]
    %v81 = vld [vmem:[%s1 + $0x68] sm:$0xff]
    %v82 = vld [vmem:[%s1 + $0x70] sm:$0xff]
    %v83 = vld [vmem:[%s1 + $0x78] sm:$0xff]
    %v84 = vld [vmem:[%s1 + $0x80] sm:$0xff]
    %v85 = vld [vmem:[%s1 + $0x88] sm:$0xff]
    %v86 = vld [vmem:[%s1 + $0x90] sm:$0xff]
    %v87 = vld [vmem:[%s1 + $0x98] sm:$0xff]
    %v88 = vld [vmem:[%s1 + $0xa0] sm:$0xff]
    %v89 = vld [vmem:[%s1 + $0xa8] sm:$0xff]
    %v90 = vld [vmem:[%s1 + $0xb0] sm:$0xff]
    %v91 = vld [vmem:[%s1 + $0xb8] sm:$0xff]
    %v92 = vld [vmem:[%s1 + $0xc0] sm:$0xff]
    %v93 = vld [vmem:[%s1 + $0xc8] sm:$0xff]
    %v94 = vld [vmem:[%s1 + $0xd0] sm:$0xff]
    %v95 = vld [vmem:[%s3] sm:$0x7]
    %v97 = vlaneseq
    %v98 = vshrl.u32 %v97, 7
    %v99 = vsub.s32 0, %v98
    %v100 = vrot.slane %v95, %v99
    %v101 = vlaneseq
    %v102 = vshrl.u32 %v101, 7
    %v103 = vsub.s32 1, %v102
    %v104 = vrot.slane %v95, %v103
    %v105 = vlaneseq
    %v106 = vshrl.u32 %v105, 7
    %v107 = vsub.s32 2, %v106
    %v108 = vrot.slane %v95, %v107
    %vm112 = vcmask 588800
    %v114 = vsel %vm112, %v60, 0
    %v117 = vsel %vm112, %v61, 0
    %v120 = vsel %vm112, %v62, 0
    %v123 = vsel %vm112, %v63, 0
    %v126 = vsel %vm112, %v64, 0
    %v129 = vsel %vm112, %v65, 0
    %v132 = vsel %vm112, %v66, 0
    %v135 = vsel %vm112, %v67, 0
    %137 = vmatprep.subr.mxu0 %v69
    %138 = vmatpush1.msra.mxu0 %v68
    %139 = vmatprep.subr.mxu0 %v72
    %140 = vmatpush1.msra.mxu0 %v71
    %141 = vmatprep.subr.mxu0 %v75
    %142 = vmatpush1.msra.mxu0 %v74
    %143 = vmatprep.subr.mxu0 %v78
    %144 = vmatpush1.msra.mxu0 %v77
    %145 = vmatprep.subr.mxu0 %v81
    %146 = vmatpush1.msra.mxu0 %v80
    %147 = vmatprep.subr.mxu0 %v84
    %148 = vmatpush1.msra.mxu0 %v83
    %149 = vmatprep.subr.mxu0 %v87
    %150 = vmatpush1.msra.mxu0 %v86
    %151 = vmatprep.subr.mxu0 %v90
    %152 = vmatpush1.msra.mxu0 %v89
    %153 = vmatprep.subr.mxu0 %v93
    %154 = vmatpush1.msra.mxu0 %v92
    %155 = vmatprep.subr.mxu0 0.0
    %156 = vmatpush1.msra.mxu0 0.0
    %157 = vmatprep.subr.mxu0 0.0
    %158 = vmatpush1.msra.mxu0 0.0
    %159 = vmatprep.subr.mxu0 0.0
    %160 = vmatpush1.msra.mxu0 0.0
    %161 = vmatprep.subr.mxu0 0.0
    %162 = vmatpush1.msra.mxu0 0.0
    %163 = vmatprep.subr.mxu0 0.0
    %164 = vmatpush1.msra.mxu0 0.0
    %165 = vmatprep.subr.mxu0 0.0
    %166 = vmatpush1.msra.mxu0 0.0
    %167 = vmatprep.subr.mxu0 0.0
    %168 = vmatpush1.msra.mxu0 0.0
    %169 = vmatprep.subr.mxu0 0.0
    %170 = vmatpush1.msra.mxu0 0.0
    %171 = vmatprep.subr.mxu0 0.0
    %172 = vmatpush1.msra.mxu0 0.0
    %173 = vmatprep.subr.mxu0 0.0
    %174 = vmatpush1.msra.mxu0 0.0
    %175 = vmatprep.subr.mxu0 0.0
    %176 = vmatpush1.msra.mxu0 0.0
    %177 = vmatprep.subr.mxu0 0.0
    %178 = vmatpush1.msra.mxu0 0.0
    %179 = vmatprep.subr.mxu0 0.0
    %180 = vmatpush1.msra.mxu0 0.0
    %181 = vmatprep.subr.mxu0 0.0
    %182 = vmatpush1.msra.mxu0 0.0
    %183 = vmatprep.subr.mxu0 0.0
    %184 = vmatpush1.msra.mxu0 0.0
    %185 = vmatprep.subr.mxu0 0.0
    %186 = vmatpush1.msra.mxu0 0.0
    %187 = vmatprep.subr.mxu0 0.0
    %188 = vmatpush1.msra.mxu0 0.0
    %189 = vmatprep.subr.mxu0 0.0
    %190 = vmatpush1.msra.mxu0 0.0
    %191 = vmatprep.subr.mxu0 0.0
    %192 = vmatpush1.msra.mxu0 0.0
    %193 = vmatprep.subr.mxu0 0.0
    %194 = vmatpush1.msra.mxu0 0.0
    %195 = vmatprep.subr.mxu0 0.0
    %196 = vmatpush1.msra.mxu0 0.0
    %197 = vmatprep.subr.mxu0 0.0
    %198 = vmatpush1.msra.mxu0 0.0
    %199 = vmatprep.subr.mxu0 0.0
    %200 = vmatpush1.msra.mxu0 0.0
    %201 = vmatprep.mubr.f32.mxu0 0.0
    %202 = vmatmul.mubr.f32.gmra.mrb[0].mxu0 %v114
    %v203 = vpop.f32.mrb[0].mxu0
    %v204 = vadd.f32 %v100, %v203
    %v205 = vpop.f32.mrb[0].mxu0
    %v206 = vadd.f32 %v104, %v205
    %207 = vmatprep.mubr.f32.mxu0 0.0
    %208 = vmatmul.mubr.f32.gmra.mrb[0].mxu0 %v117
    %v209 = vpop.f32.mrb[0].mxu0
    %v210 = vadd.f32 %v100, %v209
    %v211 = vpop.f32.mrb[0].mxu0
    %v212 = vadd.f32 %v104, %v211
    %213 = vmatprep.mubr.f32.mxu0 0.0
    %214 = vmatmul.mubr.f32.gmra.mrb[0].mxu0 %v120
    %v215 = vpop.f32.mrb[0].mxu0
    %v216 = vadd.f32 %v100, %v215
    %v217 = vpop.f32.mrb[0].mxu0
    %v218 = vadd.f32 %v104, %v217
    %219 = vmatprep.mubr.f32.mxu0 0.0
    %220 = vmatmul.mubr.f32.gmra.mrb[0].mxu0 %v123
    %v221 = vpop.f32.mrb[0].mxu0
    %v222 = vadd.f32 %v100, %v221
    %v223 = vpop.f32.mrb[0].mxu0
    %v224 = vadd.f32 %v104, %v223
    %225 = vmatprep.mubr.f32.mxu0 0.0
    %226 = vmatmul.mubr.f32.gmra.mrb[0].mxu0 %v126
    %v227 = vpop.f32.mrb[0].mxu0
    %v228 = vadd.f32 %v100, %v227
    %v229 = vpop.f32.mrb[0].mxu0
    %v230 = vadd.f32 %v104, %v229
    %231 = vmatprep.mubr.f32.mxu0 0.0
    %232 = vmatmul.mubr.f32.gmra.mrb[0].mxu0 %v129
    %v233 = vpop.f32.mrb[0].mxu0
    %v234 = vadd.f32 %v100, %v233
    %v235 = vpop.f32.mrb[0].mxu0
    %v236 = vadd.f32 %v104, %v235
    %237 = vmatprep.mubr.f32.mxu0 0.0
    %238 = vmatmul.mubr.f32.gmra.mrb[0].mxu0 %v132
    %v239 = vpop.f32.mrb[0].mxu0
    %v240 = vadd.f32 %v100, %v239
    %v241 = vpop.f32.mrb[0].mxu0
    %v242 = vadd.f32 %v104, %v241
    %243 = vmatprep.mubr.f32.mxu0 0.0
    %244 = vmatmul.mubr.f32.gmra.mrb[0].mxu0 %v135
    %v245 = vpop.f32.mrb[0].mxu0
    %v246 = vadd.f32 %v100, %v245
    %v247 = vpop.f32.mrb[0].mxu0
    %v248 = vadd.f32 %v104, %v247
    %249 = vdwg.mxu0
    %250 = vmatprep.subr.mxu0 0.0
    %251 = vmatpush1.msra.mxu0 %v70
    %252 = vmatprep.subr.mxu0 0.0
    %253 = vmatpush1.msra.mxu0 %v73
    %254 = vmatprep.subr.mxu0 0.0
    %255 = vmatpush1.msra.mxu0 %v76
    %256 = vmatprep.subr.mxu0 0.0
    %257 = vmatpush1.msra.mxu0 %v79
    %258 = vmatprep.subr.mxu0 0.0
    %259 = vmatpush1.msra.mxu0 %v82
    %260 = vmatprep.subr.mxu0 0.0
    %261 = vmatpush1.msra.mxu0 %v85
    %262 = vmatprep.subr.mxu0 0.0
    %263 = vmatpush1.msra.mxu0 %v88
    %264 = vmatprep.subr.mxu0 0.0
    %265 = vmatpush1.msra.mxu0 %v91
    %266 = vmatprep.subr.mxu0 0.0
    %267 = vmatpush1.msra.mxu0 %v94
    %268 = vmatprep.subr.mxu0 0.0
    %269 = vmatpush1.msra.mxu0 0.0
    %270 = vmatprep.subr.mxu0 0.0
    %271 = vmatpush1.msra.mxu0 0.0
    %272 = vmatprep.subr.mxu0 0.0
    %273 = vmatpush1.msra.mxu0 0.0
    %274 = vmatprep.subr.mxu0 0.0
    %275 = vmatpush1.msra.mxu0 0.0
    %276 = vmatprep.subr.mxu0 0.0
    %277 = vmatpush1.msra.mxu0 0.0
    %278 = vmatprep.subr.mxu0 0.0
    %279 = vmatpush1.msra.mxu0 0.0
    %280 = vmatprep.subr.mxu0 0.0
    %281 = vmatpush1.msra.mxu0 0.0
    %282 = vmatprep.subr.mxu0 0.0
    %283 = vmatpush1.msra.mxu0 0.0
    %284 = vmatprep.subr.mxu0 0.0
    %285 = vmatpush1.msra.mxu0 0.0
    %286 = vmatprep.subr.mxu0 0.0
    %287 = vmatpush1.msra.mxu0 0.0
    %288 = vmatprep.subr.mxu0 0.0
    %289 = vmatpush1.msra.mxu0 0.0
    %290 = vmatprep.subr.mxu0 0.0
    %291 = vmatpush1.msra.mxu0 0.0
    %292 = vmatprep.subr.mxu0 0.0
    %293 = vmatpush1.msra.mxu0 0.0
    %294 = vmatprep.subr.mxu0 0.0
    %295 = vmatpush1.msra.mxu0 0.0
    %296 = vmatprep.subr.mxu0 0.0
    %297 = vmatpush1.msra.mxu0 0.0
    %298 = vmatprep.subr.mxu0 0.0
    %299 = vmatpush1.msra.mxu0 0.0
    %300 = vmatprep.subr.mxu0 0.0
    %301 = vmatpush1.msra.mxu0 0.0
    %302 = vmatprep.subr.mxu0 0.0
    %303 = vmatpush1.msra.mxu0 0.0
    %304 = vmatprep.subr.mxu0 0.0
    %305 = vmatpush1.msra.mxu0 0.0
    %306 = vmatprep.subr.mxu0 0.0
    %307 = vmatpush1.msra.mxu0 0.0
    %308 = vmatprep.subr.mxu0 0.0
    %309 = vmatpush1.msra.mxu0 0.0
    %310 = vmatprep.subr.mxu0 0.0
    %311 = vmatpush1.msra.mxu0 0.0
    %312 = vmatprep.subr.mxu0 0.0
    %313 = vmatpush1.msra.mxu0 0.0
    %314 = vmatprep.mubr.f32.mxu0 0.0
    %315 = vmatmul.mubr.f32.gmra.mrb[0].mxu0 %v114
    %v316 = vpop.f32.mrb[0].mxu0
    %v317 = vadd.f32 %v108, %v316
    %v318 = vpop.f32.mrb[0].mxu0
    %319 = vmatprep.mubr.f32.mxu0 0.0
    %320 = vmatmul.mubr.f32.gmra.mrb[0].mxu0 %v117
    %v321 = vpop.f32.mrb[0].mxu0
    %v322 = vadd.f32 %v108, %v321
    %v323 = vpop.f32.mrb[0].mxu0
    %324 = vmatprep.mubr.f32.mxu0 0.0
    %325 = vmatmul.mubr.f32.gmra.mrb[0].mxu0 %v120
    %v326 = vpop.f32.mrb[0].mxu0
    %v327 = vadd.f32 %v108, %v326
    %v328 = vpop.f32.mrb[0].mxu0
    %329 = vmatprep.mubr.f32.mxu0 0.0
    %330 = vmatmul.mubr.f32.gmra.mrb[0].mxu0 %v123
    %v331 = vpop.f32.mrb[0].mxu0
    %v332 = vadd.f32 %v108, %v331
    %v333 = vpop.f32.mrb[0].mxu0
    %334 = vmatprep.mubr.f32.mxu0 0.0
    %335 = vmatmul.mubr.f32.gmra.mrb[0].mxu0 %v126
    %v336 = vpop.f32.mrb[0].mxu0
    %v337 = vadd.f32 %v108, %v336
    %v338 = vpop.f32.mrb[0].mxu0
    %339 = vmatprep.mubr.f32.mxu0 0.0
    %340 = vmatmul.mubr.f32.gmra.mrb[0].mxu0 %v129
    %v341 = vpop.f32.mrb[0].mxu0
    %v342 = vadd.f32 %v108, %v341
    %v343 = vpop.f32.mrb[0].mxu0
    %344 = vmatprep.mubr.f32.mxu0 0.0
    %345 = vmatmul.mubr.f32.gmra.mrb[0].mxu0 %v132
    %v346 = vpop.f32.mrb[0].mxu0
    %v347 = vadd.f32 %v108, %v346
    %v348 = vpop.f32.mrb[0].mxu0
    %349 = vmatprep.mubr.f32.mxu0 0.0
    %350 = vmatmul.mubr.f32.gmra.mrb[0].mxu0 %v135
    %v351 = vpop.f32.mrb[0].mxu0
    %v352 = vadd.f32 %v108, %v351
    %v353 = vpop.f32.mrb[0].mxu0
    %354 = vdwg.mxu0
    %355 = vst [vmem:[#allocation3] sm:$0xff] %v204
    %356 = vst [vmem:[#allocation3 + $0x8] sm:$0xff] %v206
    %357 = vst [vmem:[#allocation3 + $0x10] sm:$0xff] %v317
    %358 = vst [vmem:[#allocation3 + $0x18] sm:$0xff] %v210
    %359 = vst [vmem:[#allocation3 + $0x20] sm:$0xff] %v212
    %360 = vst [vmem:[#allocation3 + $0x28] sm:$0xff] %v322
    %361 = vst [vmem:[#allocation3 + $0x30] sm:$0xff] %v216
    %362 = vst [vmem:[#allocation3 + $0x38] sm:$0xff] %v218
    %363 = vst [vmem:[#allocation3 + $0x40] sm:$0xff] %v327
    %364 = vst [vmem:[#allocation3 + $0x48] sm:$0xff] %v222
    %365 = vst [vmem:[#allocation3 + $0x50] sm:$0xff] %v224
    %366 = vst [vmem:[#allocation3 + $0x58] sm:$0xff] %v332
    %367 = vst [vmem:[#allocation3 + $0x60] sm:$0xff] %v228
    %368 = vst [vmem:[#allocation3 + $0x68] sm:$0xff] %v230
    %369 = vst [vmem:[#allocation3 + $0x70] sm:$0xff] %v337
    %370 = vst [vmem:[#allocation3 + $0x78] sm:$0xff] %v234
    %371 = vst [vmem:[#allocation3 + $0x80] sm:$0xff] %v236
    %372 = vst [vmem:[#allocation3 + $0x88] sm:$0xff] %v342
    %373 = vst [vmem:[#allocation3 + $0x90] sm:$0xff] %v240
    %374 = vst [vmem:[#allocation3 + $0x98] sm:$0xff] %v242
    %375 = vst [vmem:[#allocation3 + $0xa0] sm:$0xff] %v347
    %376 = vst [vmem:[#allocation3 + $0xa8] sm:$0xff] %v246
    %377 = vst [vmem:[#allocation3 + $0xb0] sm:$0xff] %v248
    %378 = vst [vmem:[#allocation3 + $0xb8] sm:$0xff] %v352
    %v379 = vld [vmem:[%s2] sm:$0xff]
    %v380 = vld [vmem:[%s2 + $0x8] sm:$0xff]
    %v381 = vld [vmem:[%s2 + $0x10] sm:$0xff]
    %v382 = vld [vmem:[%s2 + $0x18] sm:$0xff]
    %v383 = vld [vmem:[%s2 + $0x20] sm:$0xff]
    %v384 = vld [vmem:[%s2 + $0x28] sm:$0xff]
    %v385 = vld [vmem:[%s2 + $0x30] sm:$0xff]
    %v386 = vld [vmem:[%s2 + $0x38] sm:$0xff]
    %v387 = vld [vmem:[%s2 + $0x40] sm:$0xff]
    %v388 = vld [vmem:[%s2 + $0x48] sm:$0xff]
    %v389 = vld [vmem:[%s2 + $0x50] sm:$0xff]
    %v390 = vld [vmem:[%s2 + $0x58] sm:$0xff]
    %v391 = vld [vmem:[%s2 + $0x60] sm:$0xff]
    %v392 = vld [vmem:[%s2 + $0x68] sm:$0xff]
    %v393 = vld [vmem:[%s2 + $0x70] sm:$0xff]
    %v394 = vld [vmem:[%s2 + $0x78] sm:$0xff]
    %v395 = vld [vmem:[%s2 + $0x80] sm:$0xff]
    %v396 = vld [vmem:[%s2 + $0x88] sm:$0xff]
    %v397 = vld [vmem:[%s2 + $0x90] sm:$0xff]
    %v398 = vld [vmem:[%s2 + $0x98] sm:$0xff]
    %v399 = vld [vmem:[%s2 + $0xa0] sm:$0xff]
    %v400 = vld [vmem:[%s2 + $0xa8] sm:$0xff]
    %v401 = vld [vmem:[%s2 + $0xb0] sm:$0xff]
    %v402 = vld [vmem:[%s2 + $0xb8] sm:$0xff]
    %v403 = vld [vmem:[%s2 + $0xc0] sm:$0xff]
    %v404 = vld [vmem:[%s2 + $0xc8] sm:$0xff]
    %v405 = vld [vmem:[%s2 + $0xd0] sm:$0xff]
    %v406 = vld [vmem:[%s2 + $0xd8] sm:$0xff]
    %v407 = vld [vmem:[%s2 + $0xe0] sm:$0xff]
    %v408 = vld [vmem:[%s2 + $0xe8] sm:$0xff]
    %v409 = vld [vmem:[%s2 + $0xf0] sm:$0xff]
    %v410 = vld [vmem:[%s2 + $0xf8] sm:$0xff]
    %v411 = vld [vmem:[%s2 + $0x100] sm:$0xff]
    %v412 = vld [vmem:[%s2 + $0x108] sm:$0xff]
    %v413 = vld [vmem:[%s2 + $0x110] sm:$0xff]
    %v414 = vld [vmem:[%s2 + $0x118] sm:$0xff]
    %v415 = vld [vmem:[#allocation3] sm:$0xff]
    %v416 = vld [vmem:[#allocation3 + $0x8] sm:$0xff]
    %v417 = vld [vmem:[#allocation3 + $0x10] sm:$0xff]
    %vm418 = vcmask 785408
    %v420 = vsel %vm418, 0.0, 0
    %422 = vmatprep.subr.mxu0 %v380
    %423 = vmatpush1.msra.mxu0 %v379
    %424 = vmatprep.subr.mxu0 %v383
    %425 = vmatpush1.msra.mxu0 %v382
    %426 = vmatprep.subr.mxu0 %v386
    %427 = vmatpush1.msra.mxu0 %v385
    %428 = vmatprep.subr.mxu0 %v389
    %429 = vmatpush1.msra.mxu0 %v388
    %430 = vmatprep.subr.mxu0 %v392
    %431 = vmatpush1.msra.mxu0 %v391
    %432 = vmatprep.subr.mxu0 %v395
    %433 = vmatpush1.msra.mxu0 %v394
    %434 = vmatprep.subr.mxu0 %v398
    %435 = vmatpush1.msra.mxu0 %v397
    %436 = vmatprep.subr.mxu0 %v401
    %437 = vmatpush1.msra.mxu0 %v400
    %438 = vmatprep.subr.mxu0 %v404
    %439 = vmatpush1.msra.mxu0 %v403
    %440 = vmatprep.subr.mxu0 %v407
    %441 = vmatpush1.msra.mxu0 %v406
    %442 = vmatprep.subr.mxu0 %v410
    %443 = vmatpush1.msra.mxu0 %v409
    %444 = vmatprep.subr.mxu0 %v413
    %445 = vmatpush1.msra.mxu0 %v412
    %446 = vmatprep.subr.mxu0 0.0
    %447 = vmatpush1.msra.mxu0 0.0
    %448 = vmatprep.subr.mxu0 0.0
    %449 = vmatpush1.msra.mxu0 0.0
    %450 = vmatprep.subr.mxu0 0.0
    %451 = vmatpush1.msra.mxu0 0.0
    %452 = vmatprep.subr.mxu0 0.0
    %453 = vmatpush1.msra.mxu0 0.0
    %454 = vmatprep.subr.mxu0 0.0
    %455 = vmatpush1.msra.mxu0 0.0
    %456 = vmatprep.subr.mxu0 0.0
    %457 = vmatpush1.msra.mxu0 0.0
    %458 = vmatprep.subr.mxu0 0.0
    %459 = vmatpush1.msra.mxu0 0.0
    %460 = vmatprep.subr.mxu0 0.0
    %461 = vmatpush1.msra.mxu0 0.0
    %462 = vmatprep.subr.mxu0 0.0
    %463 = vmatpush1.msra.mxu0 0.0
    %464 = vmatprep.subr.mxu0 0.0
    %465 = vmatpush1.msra.mxu0 0.0
    %466 = vmatprep.subr.mxu0 0.0
    %467 = vmatpush1.msra.mxu0 0.0
    %468 = vmatprep.subr.mxu0 0.0
    %469 = vmatpush1.msra.mxu0 0.0
    %470 = vmatprep.subr.mxu0 0.0
    %471 = vmatpush1.msra.mxu0 0.0
    %472 = vmatprep.subr.mxu0 0.0
    %473 = vmatpush1.msra.mxu0 0.0
    %474 = vmatprep.subr.mxu0 0.0
    %475 = vmatpush1.msra.mxu0 0.0
    %476 = vmatprep.subr.mxu0 0.0
    %477 = vmatpush1.msra.mxu0 0.0
    %478 = vmatprep.subr.mxu0 0.0
    %479 = vmatpush1.msra.mxu0 0.0
    %480 = vmatprep.subr.mxu0 0.0
    %481 = vmatpush1.msra.mxu0 0.0
    %482 = vmatprep.subr.mxu0 0.0
    %483 = vmatpush1.msra.mxu0 0.0
    %484 = vmatprep.subr.mxu0 0.0
    %485 = vmatpush1.msra.mxu0 0.0
    %486 = vmatprep.mubr.f32.mxu0 0.0
    %487 = vmatmul.mubr.f32.gmra.mrb[0].mxu0 %v420
    %v488 = vpop.f32.mrb[0].mxu0
    %v489 = vadd.f32 0.0, %v488
    %v490 = vpop.f32.mrb[0].mxu0
    %v491 = vadd.f32 0.0, %v490
    %492 = vdwg.mxu0
    %493 = vmatprep.subr.mxu0 0.0
    %494 = vmatpush1.msra.mxu0 %v381
    %495 = vmatprep.subr.mxu0 0.0
    %496 = vmatpush1.msra.mxu0 %v384
    %497 = vmatprep.subr.mxu0 0.0
    %498 = vmatpush1.msra.mxu0 %v387
    %499 = vmatprep.subr.mxu0 0.0
    %500 = vmatpush1.msra.mxu0 %v390
    %501 = vmatprep.subr.mxu0 0.0
    %502 = vmatpush1.msra.mxu0 %v393
    %503 = vmatprep.subr.mxu0 0.0
    %504 = vmatpush1.msra.mxu0 %v396
    %505 = vmatprep.subr.mxu0 0.0
    %506 = vmatpush1.msra.mxu0 %v399
    %507 = vmatprep.subr.mxu0 0.0
    %508 = vmatpush1.msra.mxu0 %v402
    %509 = vmatprep.subr.mxu0 0.0
    %510 = vmatpush1.msra.mxu0 %v405
    %511 = vmatprep.subr.mxu0 0.0
    %512 = vmatpush1.msra.mxu0 %v408
    %513 = vmatprep.subr.mxu0 0.0
    %514 = vmatpush1.msra.mxu0 %v411
    %515 = vmatprep.subr.mxu0 0.0
    %516 = vmatpush1.msra.mxu0 %v414
    %517 = vmatprep.subr.mxu0 0.0
    %518 = vmatpush1.msra.mxu0 0.0
    %519 = vmatprep.subr.mxu0 0.0
    %520 = vmatpush1.msra.mxu0 0.0
    %521 = vmatprep.subr.mxu0 0.0
    %522 = vmatpush1.msra.mxu0 0.0
    %523 = vmatprep.subr.mxu0 0.0
    %524 = vmatpush1.msra.mxu0 0.0
    %525 = vmatprep.subr.mxu0 0.0
    %526 = vmatpush1.msra.mxu0 0.0
    %527 = vmatprep.subr.mxu0 0.0
    %528 = vmatpush1.msra.mxu0 0.0
    %529 = vmatprep.subr.mxu0 0.0
    %530 = vmatpush1.msra.mxu0 0.0
    %531 = vmatprep.subr.mxu0 0.0
    %532 = vmatpush1.msra.mxu0 0.0
    %533 = vmatprep.subr.mxu0 0.0
    %534 = vmatpush1.msra.mxu0 0.0
    %535 = vmatprep.subr.mxu0 0.0
    %536 = vmatpush1.msra.mxu0 0.0
    %537 = vmatprep.subr.mxu0 0.0
    %538 = vmatpush1.msra.mxu0 0.0
    %539 = vmatprep.subr.mxu0 0.0
    %540 = vmatpush1.msra.mxu0 0.0
    %541 = vmatprep.subr.mxu0 0.0
    %542 = vmatpush1.msra.mxu0 0.0
    %543 = vmatprep.subr.mxu0 0.0
    %544 = vmatpush1.msra.mxu0 0.0
    %545 = vmatprep.subr.mxu0 0.0
    %546 = vmatpush1.msra.mxu0 0.0
    %547 = vmatprep.subr.mxu0 0.0
    %548 = vmatpush1.msra.mxu0 0.0
    %549 = vmatprep.subr.mxu0 0.0
    %550 = vmatpush1.msra.mxu0 0.0
    %551 = vmatprep.subr.mxu0 0.0
    %552 = vmatpush1.msra.mxu0 0.0
    %553 = vmatprep.subr.mxu0 0.0
    %554 = vmatpush1.msra.mxu0 0.0
    %555 = vmatprep.subr.mxu0 0.0
    %556 = vmatpush1.msra.mxu0 0.0
    %557 = vmatprep.mubr.f32.mxu0 0.0
    %558 = vmatmul.mubr.f32.gmra.mrb[0].mxu0 %v420
    %v559 = vpop.f32.mrb[0].mxu0
    %v560 = vadd.f32 0.0, %v559
    %v561 = vpop.f32.mrb[0].mxu0
    %562 = vdwg.mxu0
    %v563 = vadd.f32 %v415, %v489
    %v564 = vadd.f32 %v416, %v491
    %v565 = vadd.f32 %v417, %v560
    %v566 = vxor.u32 %v563, 2147483648
    %v567 = vmul.f32 %v566, 1.442695
    %v568 = vpow.pop %v567
    %v569 = vadd.f32 %v568, 1.0
    %v570 = vrcp.pop %v569
    %v571 = vmul.f32 1.0, %v570
    %v572 = vxor.u32 %v564, 2147483648
    %v573 = vmul.f32 %v572, 1.442695
    %v574 = vpow.pop %v573
    %v575 = vadd.f32 %v574, 1.0
    %v576 = vrcp.pop %v575
    %v577 = vmul.f32 1.0, %v576
    %v578 = vtanh.pop %v564
    %v579 = vtanh.pop %v565
    %v580 = vxor.u32 %v565, 2147483648
    %v581 = vmul.f32 %v580, 1.442695
    %v582 = vpow.pop %v581
    %v583 = vadd.f32 %v582, 1.0
    %v584 = vrcp.pop %v583
    %v585 = vmul.f32 1.0, %v584
    %v586 = vmul.f32 %v571, 0.0
    %v587 = vmul.f32 %v577, 0.0
    %590 = vrot.lane.b32.xlu0 %v578, 64
    %v591 = vpop.permute.xlu0 %590
    %592 = vrot.lane.b32.xlu0 %v579, 64
    %v593 = vpop.permute.xlu0 %592
    %vm594 = vcmask 523264
    %v595 = vsel %vm594, %v591, %v593
    %v597 = vmul.f32 %v571, %v595
    %599 = vrot.lane.b32.xlu0 %v597, 96
    %v600 = vpop.permute.xlu0 %599
    %v602 = vadd.f32 %v586, %v600
    %v603 = vadd.f32 %v587, %v600
    %v604 = vtanh.pop %v602
    %v605 = vtanh.pop %v603
    %608 = vrot.lane.b32.xlu0 %v604, 64
    %v609 = vpop.permute.xlu0 %608
    %610 = vrot.lane.b32.xlu0 %v605, 64
    %v611 = vpop.permute.xlu0 %610
    %v612 = vsel %vm594, %v609, %v611
    %v614 = vmul.f32 %v585, %v612
    %616 = vrot.lane.b32.xlu0 %v614, 96
    %v617 = vpop.permute.xlu0 %616
    %619 = vst.msk [vmem:[#allocation2] sm:$0xff] %vm418, %v617
    %v620 = vld [vmem:[#allocation3 + $0x18] sm:$0xff]
    %v621 = vld [vmem:[#allocation3 + $0x20] sm:$0xff]
    %v622 = vld [vmem:[#allocation3 + $0x28] sm:$0xff]
    %v623 = vsel %vm418, %v617, 0
    %625 = vmatprep.subr.mxu0 %v380
    %626 = vmatpush1.msra.mxu0 %v379
    %627 = vmatprep.subr.mxu0 %v383
    %628 = vmatpush1.msra.mxu0 %v382
    %629 = vmatprep.subr.mxu0 %v386
    %630 = vmatpush1.msra.mxu0 %v385
    %631 = vmatprep.subr.mxu0 %v389
    %632 = vmatpush1.msra.mxu0 %v388
    %633 = vmatprep.subr.mxu0 %v392
    %634 = vmatpush1.msra.mxu0 %v391
    %635 = vmatprep.subr.mxu0 %v395
    %636 = vmatpush1.msra.mxu0 %v394
    %637 = vmatprep.subr.mxu0 %v398
    %638 = vmatpush1.msra.mxu0 %v397
    %639 = vmatprep.subr.mxu0 %v401
    %640 = vmatpush1.msra.mxu0 %v400
    %641 = vmatprep.subr.mxu0 %v404
    %642 = vmatpush1.msra.mxu0 %v403
    %643 = vmatprep.subr.mxu0 %v407
    %644 = vmatpush1.msra.mxu0 %v406
    %645 = vmatprep.subr.mxu0 %v410
    %646 = vmatpush1.msra.mxu0 %v409
    %647 = vmatprep.subr.mxu0 %v413
    %648 = vmatpush1.msra.mxu0 %v412
    %649 = vmatprep.subr.mxu0 0.0
    %650 = vmatpush1.msra.mxu0 0.0
    %651 = vmatprep.subr.mxu0 0.0
    %652 = vmatpush1.msra.mxu0 0.0
    %653 = vmatprep.subr.mxu0 0.0
    %654 = vmatpush1.msra.mxu0 0.0
    %655 = vmatprep.subr.mxu0 0.0
    %656 = vmatpush1.msra.mxu0 0.0
    %657 = vmatprep.subr.mxu0 0.0
    %658 = vmatpush1.msra.mxu0 0.0
    %659 = vmatprep.subr.mxu0 0.0
    %660 = vmatpush1.msra.mxu0 0.0
    %661 = vmatprep.subr.mxu0 0.0
    %662 = vmatpush1.msra.mxu0 0.0
    %663 = vmatprep.subr.mxu0 0.0
    %664 = vmatpush1.msra.mxu0 0.0
    %665 = vmatprep.subr.mxu0 0.0
    %666 = vmatpush1.msra.mxu0 0.0
    %667 = vmatprep.subr.mxu0 0.0
    %668 = vmatpush1.msra.mxu0 0.0
    %669 = vmatprep.subr.mxu0 0.0
    %670 = vmatpush1.msra.mxu0 0.0
    %671 = vmatprep.subr.mxu0 0.0
    %672 = vmatpush1.msra.mxu0 0.0
    %673 = vmatprep.subr.mxu0 0.0
    %674 = vmatpush1.msra.mxu0 0.0
    %675 = vmatprep.subr.mxu0 0.0
    %676 = vmatpush1.msra.mxu0 0.0
    %677 = vmatprep.subr.mxu0 0.0
    %678 = vmatpush1.msra.mxu0 0.0
    %679 = vmatprep.subr.mxu0 0.0
    %680 = vmatpush1.msra.mxu0 0.0
    %681 = vmatprep.subr.mxu0 0.0
    %682 = vmatpush1.msra.mxu0 0.0
    %683 = vmatprep.subr.mxu0 0.0
    %684 = vmatpush1.msra.mxu0 0.0
    %685 = vmatprep.subr.mxu0 0.0
    %686 = vmatpush1.msra.mxu0 0.0
    %687 = vmatprep.subr.mxu0 0.0
    %688 = vmatpush1.msra.mxu0 0.0
    %689 = vmatprep.mubr.f32.mxu0 0.0
    %690 = vmatmul.mubr.f32.gmra.mrb[0].mxu0 %v623
    %v691 = vpop.f32.mrb[0].mxu0
    %v692 = vadd.f32 0.0, %v691
    %v693 = vpop.f32.mrb[0].mxu0
    %v694 = vadd.f32 0.0, %v693
    %695 = vdwg.mxu0
    %696 = vmatprep.subr.mxu0 0.0
    %697 = vmatpush1.msra.mxu0 %v381
    %698 = vmatprep.subr.mxu0 0.0
    %699 = vmatpush1.msra.mxu0 %v384
    %700 = vmatprep.subr.mxu0 0.0
    %701 = vmatpush1.msra.mxu0 %v387
    %702 = vmatprep.subr.mxu0 0.0
    %703 = vmatpush1.msra.mxu0 %v390
    %704 = vmatprep.subr.mxu0 0.0
    %705 = vmatpush1.msra.mxu0 %v393
    %706 = vmatprep.subr.mxu0 0.0
    %707 = vmatpush1.msra.mxu0 %v396
    %708 = vmatprep.subr.mxu0 0.0
    %709 = vmatpush1.msra.mxu0 %v399
    %710 = vmatprep.subr.mxu0 0.0
    %711 = vmatpush1.msra.mxu0 %v402
    %712 = vmatprep.subr.mxu0 0.0
    %713 = vmatpush1.msra.mxu0 %v405
    %714 = vmatprep.subr.mxu0 0.0
    %715 = vmatpush1.msra.mxu0 %v408
    %716 = vmatprep.subr.mxu0 0.0
    %717 = vmatpush1.msra.mxu0 %v411
    %718 = vmatprep.subr.mxu0 0.0
    %719 = vmatpush1.msra.mxu0 %v414
    %720 = vmatprep.subr.mxu0 0.0
    %721 = vmatpush1.msra.mxu0 0.0
    %722 = vmatprep.subr.mxu0 0.0
    %723 = vmatpush1.msra.mxu0 0.0
    %724 = vmatprep.subr.mxu0 0.0
    %725 = vmatpush1.msra.mxu0 0.0
    %726 = vmatprep.subr.mxu0 0.0
    %727 = vmatpush1.msra.mxu0 0.0
    %728 = vmatprep.subr.mxu0 0.0
    %729 = vmatpush1.msra.mxu0 0.0
    %730 = vmatprep.subr.mxu0 0.0
    %731 = vmatpush1.msra.mxu0 0.0
    %732 = vmatprep.subr.mxu0 0.0
    %733 = vmatpush1.msra.mxu0 0.0
    %734 = vmatprep.subr.mxu0 0.0
    %735 = vmatpush1.msra.mxu0 0.0
    %736 = vmatprep.subr.mxu0 0.0
    %737 = vmatpush1.msra.mxu0 0.0
    %738 = vmatprep.subr.mxu0 0.0
    %739 = vmatpush1.msra.mxu0 0.0
    %740 = vmatprep.subr.mxu0 0.0
    %741 = vmatpush1.msra.mxu0 0.0
    %742 = vmatprep.subr.mxu0 0.0
    %743 = vmatpush1.msra.mxu0 0.0
    %744 = vmatprep.subr.mxu0 0.0
    %745 = vmatpush1.msra.mxu0 0.0
    %746 = vmatprep.subr.mxu0 0.0
    %747 = vmatpush1.msra.mxu0 0.0
    %748 = vmatprep.subr.mxu0 0.0
    %749 = vmatpush1.msra.mxu0 0.0
    %750 = vmatprep.subr.mxu0 0.0
    %751 = vmatpush1.msra.mxu0 0.0
    %752 = vmatprep.subr.mxu0 0.0
    %753 = vmatpush1.msra.mxu0 0.0
    %754 = vmatprep.subr.mxu0 0.0
    %755 = vmatpush1.msra.mxu0 0.0
    %756 = vmatprep.subr.mxu0 0.0
    %757 = vmatpush1.msra.mxu0 0.0
    %758 = vmatprep.subr.mxu0 0.0
    %759 = vmatpush1.msra.mxu0 0.0
    %760 = vmatprep.mubr.f32.mxu0 0.0
    %761 = vmatmul.mubr.f32.gmra.mrb[0].mxu0 %v623
    %v762 = vpop.f32.mrb[0].mxu0
    %v763 = vadd.f32 0.0, %v762
    %v764 = vpop.f32.mrb[0].mxu0
    %765 = vdwg.mxu0
    %v766 = vadd.f32 %v620, %v692
    %v767 = vadd.f32 %v621, %v694
    %v768 = vadd.f32 %v622, %v763
    %v769 = vxor.u32 %v766, 2147483648
    %v770 = vmul.f32 %v769, 1.442695
    %v771 = vpow.pop %v770
    %v772 = vadd.f32 %v771, 1.0
    %v773 = vrcp.pop %v772
    %v774 = vmul.f32 1.0, %v773
    %v775 = vxor.u32 %v767, 2147483648
    %v776 = vmul.f32 %v775, 1.442695
    %v777 = vpow.pop %v776
    %v778 = vadd.f32 %v777, 1.0
    %v779 = vrcp.pop %v778
    %v780 = vmul.f32 1.0, %v779
    %v781 = vtanh.pop %v767
    %v782 = vtanh.pop %v768
    %v783 = vxor.u32 %v768, 2147483648
    %v784 = vmul.f32 %v783, 1.442695
    %v785 = vpow.pop %v784
    %v786 = vadd.f32 %v785, 1.0
    %v787 = vrcp.pop %v786
    %v788 = vmul.f32 1.0, %v787
    %v789 = vmul.f32 %v774, %v602
    %v790 = vmul.f32 %v780, %v603
    %793 = vrot.lane.b32.xlu0 %v781, 64
    %v794 = vpop.permute.xlu0 %793
    %795 = vrot.lane.b32.xlu0 %v782, 64
    %v796 = vpop.permute.xlu0 %795
    %v797 = vsel %vm594, %v794, %v796
    %v799 = vmul.f32 %v774, %v797
    %801 = vrot.lane.b32.xlu0 %v799, 96
    %v802 = vpop.permute.xlu0 %801
    %v804 = vadd.f32 %v789, %v802
    %v805 = vadd.f32 %v790, %v802
    %v806 = vtanh.pop %v804
    %v807 = vtanh.pop %v805
    %810 = vrot.lane.b32.xlu0 %v806, 64
    %v811 = vpop.permute.xlu0 %810
    %812 = vrot.lane.b32.xlu0 %v807, 64
    %v813 = vpop.permute.xlu0 %812
    %v814 = vsel %vm594, %v811, %v813
    %v816 = vmul.f32 %v788, %v814
    %818 = vrot.lane.b32.xlu0 %v816, 96
    %v819 = vpop.permute.xlu0 %818
    %821 = vst.msk [vmem:[#allocation2 + $0x8] sm:$0xff] %vm418, %v819
    %v822 = vld [vmem:[#allocation3 + $0x30] sm:$0xff]
    %v823 = vld [vmem:[#allocation3 + $0x38] sm:$0xff]
    %v824 = vld [vmem:[#allocation3 + $0x40] sm:$0xff]
    %v825 = vsel %vm418, %v819, 0
    %827 = vmatprep.subr.mxu0 %v380
    %828 = vmatpush1.msra.mxu0 %v379
    %829 = vmatprep.subr.mxu0 %v383
    %830 = vmatpush1.msra.mxu0 %v382
    %831 = vmatprep.subr.mxu0 %v386
    %832 = vmatpush1.msra.mxu0 %v385
    %833 = vmatprep.subr.mxu0 %v389
    %834 = vmatpush1.msra.mxu0 %v388
    %835 = vmatprep.subr.mxu0 %v392
    %836 = vmatpush1.msra.mxu0 %v391
    %837 = vmatprep.subr.mxu0 %v395
    %838 = vmatpush1.msra.mxu0 %v394
    %839 = vmatprep.subr.mxu0 %v398
    %840 = vmatpush1.msra.mxu0 %v397
    %841 = vmatprep.subr.mxu0 %v401
    %842 = vmatpush1.msra.mxu0 %v400
    %843 = vmatprep.subr.mxu0 %v404
    %844 = vmatpush1.msra.mxu0 %v403
    %845 = vmatprep.subr.mxu0 %v407
    %846 = vmatpush1.msra.mxu0 %v406
    %847 = vmatprep.subr.mxu0 %v410
    %848 = vmatpush1.msra.mxu0 %v409
    %849 = vmatprep.subr.mxu0 %v413
    %850 = vmatpush1.msra.mxu0 %v412
    %851 = vmatprep.subr.mxu0 0.0
    %852 = vmatpush1.msra.mxu0 0.0
    %853 = vmatprep.subr.mxu0 0.0
    %854 = vmatpush1.msra.mxu0 0.0
    %855 = vmatprep.subr.mxu0 0.0
    %856 = vmatpush1.msra.mxu0 0.0
    %857 = vmatprep.subr.mxu0 0.0
    %858 = vmatpush1.msra.mxu0 0.0
    %859 = vmatprep.subr.mxu0 0.0
    %860 = vmatpush1.msra.mxu0 0.0
    %861 = vmatprep.subr.mxu0 0.0
    %862 = vmatpush1.msra.mxu0 0.0
    %863 = vmatprep.subr.mxu0 0.0
    %864 = vmatpush1.msra.mxu0 0.0
    %865 = vmatprep.subr.mxu0 0.0
    %866 = vmatpush1.msra.mxu0 0.0
    %867 = vmatprep.subr.mxu0 0.0
    %868 = vmatpush1.msra.mxu0 0.0
    %869 = vmatprep.subr.mxu0 0.0
    %870 = vmatpush1.msra.mxu0 0.0
    %871 = vmatprep.subr.mxu0 0.0
    %872 = vmatpush1.msra.mxu0 0.0
    %873 = vmatprep.subr.mxu0 0.0
    %874 = vmatpush1.msra.mxu0 0.0
    %875 = vmatprep.subr.mxu0 0.0
    %876 = vmatpush1.msra.mxu0 0.0
    %877 = vmatprep.subr.mxu0 0.0
    %878 = vmatpush1.msra.mxu0 0.0
    %879 = vmatprep.subr.mxu0 0.0
    %880 = vmatpush1.msra.mxu0 0.0
    %881 = vmatprep.subr.mxu0 0.0
    %882 = vmatpush1.msra.mxu0 0.0
    %883 = vmatprep.subr.mxu0 0.0
    %884 = vmatpush1.msra.mxu0 0.0
    %885 = vmatprep.subr.mxu0 0.0
    %886 = vmatpush1.msra.mxu0 0.0
    %887 = vmatprep.subr.mxu0 0.0
    %888 = vmatpush1.msra.mxu0 0.0
    %889 = vmatprep.subr.mxu0 0.0
    %890 = vmatpush1.msra.mxu0 0.0
    %891 = vmatprep.mubr.f32.mxu0 0.0
    %892 = vmatmul.mubr.f32.gmra.mrb[0].mxu0 %v825
    %v893 = vpop.f32.mrb[0].mxu0
    %v894 = vadd.f32 0.0, %v893
    %v895 = vpop.f32.mrb[0].mxu0
    %v896 = vadd.f32 0.0, %v895
    %897 = vdwg.mxu0
    %898 = vmatprep.subr.mxu0 0.0
    %899 = vmatpush1.msra.mxu0 %v381
    %900 = vmatprep.subr.mxu0 0.0
    %901 = vmatpush1.msra.mxu0 %v384
    %902 = vmatprep.subr.mxu0 0.0
    %903 = vmatpush1.msra.mxu0 %v387
    %904 = vmatprep.subr.mxu0 0.0
    %905 = vmatpush1.msra.mxu0 %v390
    %906 = vmatprep.subr.mxu0 0.0
    %907 = vmatpush1.msra.mxu0 %v393
    %908 = vmatprep.subr.mxu0 0.0
    %909 = vmatpush1.msra.mxu0 %v396
    %910 = vmatprep.subr.mxu0 0.0
    %911 = vmatpush1.msra.mxu0 %v399
    %912 = vmatprep.subr.mxu0 0.0
    %913 = vmatpush1.msra.mxu0 %v402
    %914 = vmatprep.subr.mxu0 0.0
    %915 = vmatpush1.msra.mxu0 %v405
    %916 = vmatprep.subr.mxu0 0.0
    %917 = vmatpush1.msra.mxu0 %v408
    %918 = vmatprep.subr.mxu0 0.0
    %919 = vmatpush1.msra.mxu0 %v411
    %920 = vmatprep.subr.mxu0 0.0
    %921 = vmatpush1.msra.mxu0 %v414
    %922 = vmatprep.subr.mxu0 0.0
    %923 = vmatpush1.msra.mxu0 0.0
    %924 = vmatprep.subr.mxu0 0.0
    %925 = vmatpush1.msra.mxu0 0.0
    %926 = vmatprep.subr.mxu0 0.0
    %927 = vmatpush1.msra.mxu0 0.0
    %928 = vmatprep.subr.mxu0 0.0
    %929 = vmatpush1.msra.mxu0 0.0
    %930 = vmatprep.subr.mxu0 0.0
    %931 = vmatpush1.msra.mxu0 0.0
    %932 = vmatprep.subr.mxu0 0.0
    %933 = vmatpush1.msra.mxu0 0.0
    %934 = vmatprep.subr.mxu0 0.0
    %935 = vmatpush1.msra.mxu0 0.0
    %936 = vmatprep.subr.mxu0 0.0
    %937 = vmatpush1.msra.mxu0 0.0
    %938 = vmatprep.subr.mxu0 0.0
    %939 = vmatpush1.msra.mxu0 0.0
    %940 = vmatprep.subr.mxu0 0.0
    %941 = vmatpush1.msra.mxu0 0.0
    %942 = vmatprep.subr.mxu0 0.0
    %943 = vmatpush1.msra.mxu0 0.0
    %944 = vmatprep.subr.mxu0 0.0
    %945 = vmatpush1.msra.mxu0 0.0
    %946 = vmatprep.subr.mxu0 0.0
    %947 = vmatpush1.msra.mxu0 0.0
    %948 = vmatprep.subr.mxu0 0.0
    %949 = vmatpush1.msra.mxu0 0.0
    %950 = vmatprep.subr.mxu0 0.0
    %951 = vmatpush1.msra.mxu0 0.0
    %952 = vmatprep.subr.mxu0 0.0
    %953 = vmatpush1.msra.mxu0 0.0
    %954 = vmatprep.subr.mxu0 0.0
    %955 = vmatpush1.msra.mxu0 0.0
    %956 = vmatprep.subr.mxu0 0.0
    %957 = vmatpush1.msra.mxu0 0.0
    %958 = vmatprep.subr.mxu0 0.0
    %959 = vmatpush1.msra.mxu0 0.0
    %960 = vmatprep.subr.mxu0 0.0
    %961 = vmatpush1.msra.mxu0 0.0
    %962 = vmatprep.mubr.f32.mxu0 0.0
    %963 = vmatmul.mubr.f32.gmra.mrb[0].mxu0 %v825
    %v964 = vpop.f32.mrb[0].mxu0
    %v965 = vadd.f32 0.0, %v964
    %v966 = vpop.f32.mrb[0].mxu0
    %967 = vdwg.mxu0
    %v968 = vadd.f32 %v822, %v894
    %v969 = vadd.f32 %v823, %v896
    %v970 = vadd.f32 %v824, %v965
    %v971 = vxor.u32 %v968, 2147483648
    %v972 = vmul.f32 %v971, 1.442695
    %v973 = vpow.pop %v972
    %v974 = vadd.f32 %v973, 1.0
    %v975 = vrcp.pop %v974
    %v976 = vmul.f32 1.0, %v975
    %v977 = vxor.u32 %v969, 2147483648
    %v978 = vmul.f32 %v977, 1.442695
    %v979 = vpow.pop %v978
    %v980 = vadd.f32 %v979, 1.0
    %v981 = vrcp.pop %v980
    %v982 = vmul.f32 1.0, %v981
    %v983 = vtanh.pop %v969
    %v984 = vtanh.pop %v970
    %v985 = vxor.u32 %v970, 2147483648
    %v986 = vmul.f32 %v985, 1.442695
    %v987 = vpow.pop %v986
    %v988 = vadd.f32 %v987, 1.0
    %v989 = vrcp.pop %v988
    %v990 = vmul.f32 1.0, %v989
    %v991 = vmul.f32 %v976, %v804
    %v992 = vmul.f32 %v982, %v805
    %995 = vrot.lane.b32.xlu0 %v983, 64
    %v996 = vpop.permute.xlu0 %995
    %997 = vrot.lane.b32.xlu0 %v984, 64
    %v998 = vpop.permute.xlu0 %997
    %v999 = vsel %vm594, %v996, %v998
    %v1001 = vmul.f32 %v976, %v999
    %1003 = vrot.lane.b32.xlu0 %v1001, 96
    %v1004 = vpop.permute.xlu0 %1003
    %v1006 = vadd.f32 %v991, %v1004
    %v1007 = vadd.f32 %v992, %v1004
    %v1008 = vtanh.pop %v1006
    %v1009 = vtanh.pop %v1007
    %1012 = vrot.lane.b32.xlu0 %v1008, 64
    %v1013 = vpop.permute.xlu0 %1012
    %1014 = vrot.lane.b32.xlu0 %v1009, 64
    %v1015 = vpop.permute.xlu0 %1014
    %v1016 = vsel %vm594, %v1013, %v1015
    %v1018 = vmul.f32 %v990, %v1016
    %1020 = vrot.lane.b32.xlu0 %v1018, 96
    %v1021 = vpop.permute.xlu0 %1020
    %1023 = vst.msk [vmem:[#allocation2 + $0x10] sm:$0xff] %vm418, %v1021
    %v1024 = vld [vmem:[#allocation3 + $0x48] sm:$0xff]
    %v1025 = vld [vmem:[#allocation3 + $0x50] sm:$0xff]
    %v1026 = vld [vmem:[#allocation3 + $0x58] sm:$0xff]
    %v1027 = vsel %vm418, %v1021, 0
    %1029 = vmatprep.subr.mxu0 %v380
    %1030 = vmatpush1.msra.mxu0 %v379
    %1031 = vmatprep.subr.mxu0 %v383
    %1032 = vmatpush1.msra.mxu0 %v382
    %1033 = vmatprep.subr.mxu0 %v386
    %1034 = vmatpush1.msra.mxu0 %v385
    %1035 = vmatprep.subr.mxu0 %v389
    %1036 = vmatpush1.msra.mxu0 %v388
    %1037 = vmatprep.subr.mxu0 %v392
    %1038 = vmatpush1.msra.mxu0 %v391
    %1039 = vmatprep.subr.mxu0 %v395
    %1040 = vmatpush1.msra.mxu0 %v394
    %1041 = vmatprep.subr.mxu0 %v398
    %1042 = vmatpush1.msra.mxu0 %v397
    %1043 = vmatprep.subr.mxu0 %v401
    %1044 = vmatpush1.msra.mxu0 %v400
    %1045 = vmatprep.subr.mxu0 %v404
    %1046 = vmatpush1.msra.mxu0 %v403
    %1047 = vmatprep.subr.mxu0 %v407
    %1048 = vmatpush1.msra.mxu0 %v406
    %1049 = vmatprep.subr.mxu0 %v410
    %1050 = vmatpush1.msra.mxu0 %v409
    %1051 = vmatprep.subr.mxu0 %v413
    %1052 = vmatpush1.msra.mxu0 %v412
    %1053 = vmatprep.subr.mxu0 0.0
    %1054 = vmatpush1.msra.mxu0 0.0
    %1055 = vmatprep.subr.mxu0 0.0
    %1056 = vmatpush1.msra.mxu0 0.0
    %1057 = vmatprep.subr.mxu0 0.0
    %1058 = vmatpush1.msra.mxu0 0.0
    %1059 = vmatprep.subr.mxu0 0.0
    %1060 = vmatpush1.msra.mxu0 0.0
    %1061 = vmatprep.subr.mxu0 0.0
    %1062 = vmatpush1.msra.mxu0 0.0
    %1063 = vmatprep.subr.mxu0 0.0
    %1064 = vmatpush1.msra.mxu0 0.0
    %1065 = vmatprep.subr.mxu0 0.0
    %1066 = vmatpush1.msra.mxu0 0.0
    %1067 = vmatprep.subr.mxu0 0.0
    %1068 = vmatpush1.msra.mxu0 0.0
    %1069 = vmatprep.subr.mxu0 0.0
    %1070 = vmatpush1.msra.mxu0 0.0
    %1071 = vmatprep.subr.mxu0 0.0
    %1072 = vmatpush1.msra.mxu0 0.0
    %1073 = vmatprep.subr.mxu0 0.0
    %1074 = vmatpush1.msra.mxu0 0.0
    %1075 = vmatprep.subr.mxu0 0.0
    %1076 = vmatpush1.msra.mxu0 0.0
    %1077 = vmatprep.subr.mxu0 0.0
    %1078 = vmatpush1.msra.mxu0 0.0
    %1079 = vmatprep.subr.mxu0 0.0
    %1080 = vmatpush1.msra.mxu0 0.0
    %1081 = vmatprep.subr.mxu0 0.0
    %1082 = vmatpush1.msra.mxu0 0.0
    %1083 = vmatprep.subr.mxu0 0.0
    %1084 = vmatpush1.msra.mxu0 0.0
    %1085 = vmatprep.subr.mxu0 0.0
    %1086 = vmatpush1.msra.mxu0 0.0
    %1087 = vmatprep.subr.mxu0 0.0
    %1088 = vmatpush1.msra.mxu0 0.0
    %1089 = vmatprep.subr.mxu0 0.0
    %1090 = vmatpush1.msra.mxu0 0.0
    %1091 = vmatprep.subr.mxu0 0.0
    %1092 = vmatpush1.msra.mxu0 0.0
    %1093 = vmatprep.mubr.f32.mxu0 0.0
    %1094 = vmatmul.mubr.f32.gmra.mrb[0].mxu0 %v1027
    %v1095 = vpop.f32.mrb[0].mxu0
    %v1096 = vadd.f32 0.0, %v1095
    %v1097 = vpop.f32.mrb[0].mxu0
    %v1098 = vadd.f32 0.0, %v1097
    %1099 = vdwg.mxu0
    %1100 = vmatprep.subr.mxu0 0.0
    %1101 = vmatpush1.msra.mxu0 %v381
    %1102 = vmatprep.subr.mxu0 0.0
    %1103 = vmatpush1.msra.mxu0 %v384
    %1104 = vmatprep.subr.mxu0 0.0
    %1105 = vmatpush1.msra.mxu0 %v387
    %1106 = vmatprep.subr.mxu0 0.0
    %1107 = vmatpush1.msra.mxu0 %v390
    %1108 = vmatprep.subr.mxu0 0.0
    %1109 = vmatpush1.msra.mxu0 %v393
    %1110 = vmatprep.subr.mxu0 0.0
    %1111 = vmatpush1.msra.mxu0 %v396
    %1112 = vmatprep.subr.mxu0 0.0
    %1113 = vmatpush1.msra.mxu0 %v399
    %1114 = vmatprep.subr.mxu0 0.0
    %1115 = vmatpush1.msra.mxu0 %v402
    %1116 = vmatprep.subr.mxu0 0.0
    %1117 = vmatpush1.msra.mxu0 %v405
    %1118 = vmatprep.subr.mxu0 0.0
    %1119 = vmatpush1.msra.mxu0 %v408
    %1120 = vmatprep.subr.mxu0 0.0
    %1121 = vmatpush1.msra.mxu0 %v411
    %1122 = vmatprep.subr.mxu0 0.0
    %1123 = vmatpush1.msra.mxu0 %v414
    %1124 = vmatprep.subr.mxu0 0.0
    %1125 = vmatpush1.msra.mxu0 0.0
    %1126 = vmatprep.subr.mxu0 0.0
    %1127 = vmatpush1.msra.mxu0 0.0
    %1128 = vmatprep.subr.mxu0 0.0
    %1129 = vmatpush1.msra.mxu0 0.0
    %1130 = vmatprep.subr.mxu0 0.0
    %1131 = vmatpush1.msra.mxu0 0.0
    %1132 = vmatprep.subr.mxu0 0.0
    %1133 = vmatpush1.msra.mxu0 0.0
    %1134 = vmatprep.subr.mxu0 0.0
    %1135 = vmatpush1.msra.mxu0 0.0
    %1136 = vmatprep.subr.mxu0 0.0
    %1137 = vmatpush1.msra.mxu0 0.0
    %1138 = vmatprep.subr.mxu0 0.0
    %1139 = vmatpush1.msra.mxu0 0.0
    %1140 = vmatprep.subr.mxu0 0.0
    %1141 = vmatpush1.msra.mxu0 0.0
    %1142 = vmatprep.subr.mxu0 0.0
    %1143 = vmatpush1.msra.mxu0 0.0
    %1144 = vmatprep.subr.mxu0 0.0
    %1145 = vmatpush1.msra.mxu0 0.0
    %1146 = vmatprep.subr.mxu0 0.0
    %1147 = vmatpush1.msra.mxu0 0.0
    %1148 = vmatprep.subr.mxu0 0.0
    %1149 = vmatpush1.msra.mxu0 0.0
    %1150 = vmatprep.subr.mxu0 0.0
    %1151 = vmatpush1.msra.mxu0 0.0
    %1152 = vmatprep.subr.mxu0 0.0
    %1153 = vmatpush1.msra.mxu0 0.0
    %1154 = vmatprep.subr.mxu0 0.0
    %1155 = vmatpush1.msra.mxu0 0.0
    %1156 = vmatprep.subr.mxu0 0.0
    %1157 = vmatpush1.msra.mxu0 0.0
    %1158 = vmatprep.subr.mxu0 0.0
    %1159 = vmatpush1.msra.mxu0 0.0
    %1160 = vmatprep.subr.mxu0 0.0
    %1161 = vmatpush1.msra.mxu0 0.0
    %1162 = vmatprep.subr.mxu0 0.0
    %1163 = vmatpush1.msra.mxu0 0.0
    %1164 = vmatprep.mubr.f32.mxu0 0.0
    %1165 = vmatmul.mubr.f32.gmra.mrb[0].mxu0 %v1027
    %v1166 = vpop.f32.mrb[0].mxu0
    %v1167 = vadd.f32 0.0, %v1166
    %v1168 = vpop.f32.mrb[0].mxu0
    %1169 = vdwg.mxu0
    %v1170 = vadd.f32 %v1024, %v1096
    %v1171 = vadd.f32 %v1025, %v1098
    %v1172 = vadd.f32 %v1026, %v1167
    %v1173 = vxor.u32 %v1170, 2147483648
    %v1174 = vmul.f32 %v1173, 1.442695
    %v1175 = vpow.pop %v1174
    %v1176 = vadd.f32 %v1175, 1.0
    %v1177 = vrcp.pop %v1176
    %v1178 = vmul.f32 1.0, %v1177
    %v1179 = vxor.u32 %v1171, 2147483648
    %v1180 = vmul.f32 %v1179, 1.442695
    %v1181 = vpow.pop %v1180
    %v1182 = vadd.f32 %v1181, 1.0
    %v1183 = vrcp.pop %v1182
    %v1184 = vmul.f32 1.0, %v1183
    %v1185 = vtanh.pop %v1171
    %v1186 = vtanh.pop %v1172
    %v1187 = vxor.u32 %v1172, 2147483648
    %v1188 = vmul.f32 %v1187, 1.442695
    %v1189 = vpow.pop %v1188
    %v1190 = vadd.f32 %v1189, 1.0
    %v1191 = vrcp.pop %v1190
    %v1192 = vmul.f32 1.0, %v1191
    %v1193 = vmul.f32 %v1178, %v1006
    %v1194 = vmul.f32 %v1184, %v1007
    %1197 = vrot.lane.b32.xlu0 %v1185, 64
    %v1198 = vpop.permute.xlu0 %1197
    %1199 = vrot.lane.b32.xlu0 %v1186, 64
    %v1200 = vpop.permute.xlu0 %1199
    %v1201 = vsel %vm594, %v1198, %v1200
    %v1203 = vmul.f32 %v1178, %v1201
    %1205 = vrot.lane.b32.xlu0 %v1203, 96
    %v1206 = vpop.permute.xlu0 %1205
    %v1208 = vadd.f32 %v1193, %v1206
    %v1209 = vadd.f32 %v1194, %v1206
    %v1210 = vtanh.pop %v1208
    %v1211 = vtanh.pop %v1209
    %1214 = vrot.lane.b32.xlu0 %v1210, 64
    %v1215 = vpop.permute.xlu0 %1214
    %1216 = vrot.lane.b32.xlu0 %v1211, 64
    %v1217 = vpop.permute.xlu0 %1216
    %v1218 = vsel %vm594, %v1215, %v1217
    %v1220 = vmul.f32 %v1192, %v1218
    %1222 = vrot.lane.b32.xlu0 %v1220, 96
    %v1223 = vpop.permute.xlu0 %1222
    %1225 = vst.msk [vmem:[#allocation2 + $0x18] sm:$0xff] %vm418, %v1223
    %v1226 = vld [vmem:[#allocation3 + $0x60] sm:$0xff]
    %v1227 = vld [vmem:[#allocation3 + $0x68] sm:$0xff]
    %v1228 = vld [vmem:[#allocation3 + $0x70] sm:$0xff]
    %v1229 = vsel %vm418, %v1223, 0
    %1231 = vmatprep.subr.mxu0 %v380
    %1232 = vmatpush1.msra.mxu0 %v379
    %1233 = vmatprep.subr.mxu0 %v383
    %1234 = vmatpush1.msra.mxu0 %v382
    %1235 = vmatprep.subr.mxu0 %v386
    %1236 = vmatpush1.msra.mxu0 %v385
    %1237 = vmatprep.subr.mxu0 %v389
    %1238 = vmatpush1.msra.mxu0 %v388
    %1239 = vmatprep.subr.mxu0 %v392
    %1240 = vmatpush1.msra.mxu0 %v391
    %1241 = vmatprep.subr.mxu0 %v395
    %1242 = vmatpush1.msra.mxu0 %v394
    %1243 = vmatprep.subr.mxu0 %v398
    %1244 = vmatpush1.msra.mxu0 %v397
    %1245 = vmatprep.subr.mxu0 %v401
    %1246 = vmatpush1.msra.mxu0 %v400
    %1247 = vmatprep.subr.mxu0 %v404
    %1248 = vmatpush1.msra.mxu0 %v403
    %1249 = vmatprep.subr.mxu0 %v407
    %1250 = vmatpush1.msra.mxu0 %v406
    %1251 = vmatprep.subr.mxu0 %v410
    %1252 = vmatpush1.msra.mxu0 %v409
    %1253 = vmatprep.subr.mxu0 %v413
    %1254 = vmatpush1.msra.mxu0 %v412
    %1255 = vmatprep.subr.mxu0 0.0
    %1256 = vmatpush1.msra.mxu0 0.0
    %1257 = vmatprep.subr.mxu0 0.0
    %1258 = vmatpush1.msra.mxu0 0.0
    %1259 = vmatprep.subr.mxu0 0.0
    %1260 = vmatpush1.msra.mxu0 0.0
    %1261 = vmatprep.subr.mxu0 0.0
    %1262 = vmatpush1.msra.mxu0 0.0
    %1263 = vmatprep.subr.mxu0 0.0
    %1264 = vmatpush1.msra.mxu0 0.0
    %1265 = vmatprep.subr.mxu0 0.0
    %1266 = vmatpush1.msra.mxu0 0.0
    %1267 = vmatprep.subr.mxu0 0.0
    %1268 = vmatpush1.msra.mxu0 0.0
    %1269 = vmatprep.subr.mxu0 0.0
    %1270 = vmatpush1.msra.mxu0 0.0
    %1271 = vmatprep.subr.mxu0 0.0
    %1272 = vmatpush1.msra.mxu0 0.0
    %1273 = vmatprep.subr.mxu0 0.0
    %1274 = vmatpush1.msra.mxu0 0.0
    %1275 = vmatprep.subr.mxu0 0.0
    %1276 = vmatpush1.msra.mxu0 0.0
    %1277 = vmatprep.subr.mxu0 0.0
    %1278 = vmatpush1.msra.mxu0 0.0
    %1279 = vmatprep.subr.mxu0 0.0
    %1280 = vmatpush1.msra.mxu0 0.0
    %1281 = vmatprep.subr.mxu0 0.0
    %1282 = vmatpush1.msra.mxu0 0.0
    %1283 = vmatprep.subr.mxu0 0.0
    %1284 = vmatpush1.msra.mxu0 0.0
    %1285 = vmatprep.subr.mxu0 0.0
    %1286 = vmatpush1.msra.mxu0 0.0
    %1287 = vmatprep.subr.mxu0 0.0
    %1288 = vmatpush1.msra.mxu0 0.0
    %1289 = vmatprep.subr.mxu0 0.0
    %1290 = vmatpush1.msra.mxu0 0.0
    %1291 = vmatprep.subr.mxu0 0.0
    %1292 = vmatpush1.msra.mxu0 0.0
    %1293 = vmatprep.subr.mxu0 0.0
    %1294 = vmatpush1.msra.mxu0 0.0
    %1295 = vmatprep.mubr.f32.mxu0 0.0
    %1296 = vmatmul.mubr.f32.gmra.mrb[0].mxu0 %v1229
    %v1297 = vpop.f32.mrb[0].mxu0
    %v1298 = vadd.f32 0.0, %v1297
    %v1299 = vpop.f32.mrb[0].mxu0
    %v1300 = vadd.f32 0.0, %v1299
    %1301 = vdwg.mxu0
    %1302 = vmatprep.subr.mxu0 0.0
    %1303 = vmatpush1.msra.mxu0 %v381
    %1304 = vmatprep.subr.mxu0 0.0
    %1305 = vmatpush1.msra.mxu0 %v384
    %1306 = vmatprep.subr.mxu0 0.0
    %1307 = vmatpush1.msra.mxu0 %v387
    %1308 = vmatprep.subr.mxu0 0.0
    %1309 = vmatpush1.msra.mxu0 %v390
    %1310 = vmatprep.subr.mxu0 0.0
    %1311 = vmatpush1.msra.mxu0 %v393
    %1312 = vmatprep.subr.mxu0 0.0
    %1313 = vmatpush1.msra.mxu0 %v396
    %1314 = vmatprep.subr.mxu0 0.0
    %1315 = vmatpush1.msra.mxu0 %v399
    %1316 = vmatprep.subr.mxu0 0.0
    %1317 = vmatpush1.msra.mxu0 %v402
    %1318 = vmatprep.subr.mxu0 0.0
    %1319 = vmatpush1.msra.mxu0 %v405
    %1320 = vmatprep.subr.mxu0 0.0
    %1321 = vmatpush1.msra.mxu0 %v408
    %1322 = vmatprep.subr.mxu0 0.0
    %1323 = vmatpush1.msra.mxu0 %v411
    %1324 = vmatprep.subr.mxu0 0.0
    %1325 = vmatpush1.msra.mxu0 %v414
    %1326 = vmatprep.subr.mxu0 0.0
    %1327 = vmatpush1.msra.mxu0 0.0
    %1328 = vmatprep.subr.mxu0 0.0
    %1329 = vmatpush1.msra.mxu0 0.0
    %1330 = vmatprep.subr.mxu0 0.0
    %1331 = vmatpush1.msra.mxu0 0.0
    %1332 = vmatprep.subr.mxu0 0.0
    %1333 = vmatpush1.msra.mxu0 0.0
    %1334 = vmatprep.subr.mxu0 0.0
    %1335 = vmatpush1.msra.mxu0 0.0
    %1336 = vmatprep.subr.mxu0 0.0
    %1337 = vmatpush1.msra.mxu0 0.0
    %1338 = vmatprep.subr.mxu0 0.0
    %1339 = vmatpush1.msra.mxu0 0.0
    %1340 = vmatprep.subr.mxu0 0.0
    %1341 = vmatpush1.msra.mxu0 0.0
    %1342 = vmatprep.subr.mxu0 0.0
    %1343 = vmatpush1.msra.mxu0 0.0
    %1344 = vmatprep.subr.mxu0 0.0
    %1345 = vmatpush1.msra.mxu0 0.0
    %1346 = vmatprep.subr.mxu0 0.0
    %1347 = vmatpush1.msra.mxu0 0.0
    %1348 = vmatprep.subr.mxu0 0.0
    %1349 = vmatpush1.msra.mxu0 0.0
    %1350 = vmatprep.subr.mxu0 0.0
    %1351 = vmatpush1.msra.mxu0 0.0
    %1352 = vmatprep.subr.mxu0 0.0
    %1353 = vmatpush1.msra.mxu0 0.0
    %1354 = vmatprep.subr.mxu0 0.0
    %1355 = vmatpush1.msra.mxu0 0.0
    %1356 = vmatprep.subr.mxu0 0.0
    %1357 = vmatpush1.msra.mxu0 0.0
    %1358 = vmatprep.subr.mxu0 0.0
    %1359 = vmatpush1.msra.mxu0 0.0
    %1360 = vmatprep.subr.mxu0 0.0
    %1361 = vmatpush1.msra.mxu0 0.0
    %1362 = vmatprep.subr.mxu0 0.0
    %1363 = vmatpush1.msra.mxu0 0.0
    %1364 = vmatprep.subr.mxu0 0.0
    %1365 = vmatpush1.msra.mxu0 0.0
    %1366 = vmatprep.mubr.f32.mxu0 0.0
    %1367 = vmatmul.mubr.f32.gmra.mrb[0].mxu0 %v1229
    %v1368 = vpop.f32.mrb[0].mxu0
    %v1369 = vadd.f32 0.0, %v1368
    %v1370 = vpop.f32.mrb[0].mxu0
    %1371 = vdwg.mxu0
    %v1372 = vadd.f32 %v1226, %v1298
    %v1373 = vadd.f32 %v1227, %v1300
    %v1374 = vadd.f32 %v1228, %v1369
    %v1375 = vxor.u32 %v1372, 2147483648
    %v1376 = vmul.f32 %v1375, 1.442695
    %v1377 = vpow.pop %v1376
    %v1378 = vadd.f32 %v1377, 1.0
    %v1379 = vrcp.pop %v1378
    %v1380 = vmul.f32 1.0, %v1379
    %v1381 = vxor.u32 %v1373, 2147483648
    %v1382 = vmul.f32 %v1381, 1.442695
    %v1383 = vpow.pop %v1382
    %v1384 = vadd.f32 %v1383, 1.0
    %v1385 = vrcp.pop %v1384
    %v1386 = vmul.f32 1.0, %v1385
    %v1387 = vtanh.pop %v1373
    %v1388 = vtanh.pop %v1374
    %v1389 = vxor.u32 %v1374, 2147483648
    %v1390 = vmul.f32 %v1389, 1.442695
    %v1391 = vpow.pop %v1390
    %v1392 = vadd.f32 %v1391, 1.0
    %v1393 = vrcp.pop %v1392
    %v1394 = vmul.f32 1.0, %v1393
    %v1395 = vmul.f32 %v1380, %v1208
    %v1396 = vmul.f32 %v1386, %v1209
    %1399 = vrot.lane.b32.xlu0 %v1387, 64
    %v1400 = vpop.permute.xlu0 %1399
    %1401 = vrot.lane.b32.xlu0 %v1388, 64
    %v1402 = vpop.permute.xlu0 %1401
    %v1403 = vsel %vm594, %v1400, %v1402
    %v1405 = vmul.f32 %v1380, %v1403
    %1407 = vrot.lane.b32.xlu0 %v1405, 96
    %v1408 = vpop.permute.xlu0 %1407
    %v1410 = vadd.f32 %v1395, %v1408
    %v1411 = vadd.f32 %v1396, %v1408
    %v1412 = vtanh.pop %v1410
    %v1413 = vtanh.pop %v1411
    %1416 = vrot.lane.b32.xlu0 %v1412, 64
    %v1417 = vpop.permute.xlu0 %1416
    %1418 = vrot.lane.b32.xlu0 %v1413, 64
    %v1419 = vpop.permute.xlu0 %1418
    %v1420 = vsel %vm594, %v1417, %v1419
    %v1422 = vmul.f32 %v1394, %v1420
    %1424 = vrot.lane.b32.xlu0 %v1422, 96
    %v1425 = vpop.permute.xlu0 %1424
    %1427 = vst.msk [vmem:[#allocation2 + $0x20] sm:$0xff] %vm418, %v1425
    %v1428 = vld [vmem:[#allocation3 + $0x78] sm:$0xff]
    %v1429 = vld [vmem:[#allocation3 + $0x80] sm:$0xff]
    %v1430 = vld [vmem:[#allocation3 + $0x88] sm:$0xff]
    %v1431 = vsel %vm418, %v1425, 0
    %1433 = vmatprep.subr.mxu0 %v380
    %1434 = vmatpush1.msra.mxu0 %v379
    %1435 = vmatprep.subr.mxu0 %v383
    %1436 = vmatpush1.msra.mxu0 %v382
    %1437 = vmatprep.subr.mxu0 %v386
    %1438 = vmatpush1.msra.mxu0 %v385
    %1439 = vmatprep.subr.mxu0 %v389
    %1440 = vmatpush1.msra.mxu0 %v388
    %1441 = vmatprep.subr.mxu0 %v392
    %1442 = vmatpush1.msra.mxu0 %v391
    %1443 = vmatprep.subr.mxu0 %v395
    %1444 = vmatpush1.msra.mxu0 %v394
    %1445 = vmatprep.subr.mxu0 %v398
    %1446 = vmatpush1.msra.mxu0 %v397
    %1447 = vmatprep.subr.mxu0 %v401
    %1448 = vmatpush1.msra.mxu0 %v400
    %1449 = vmatprep.subr.mxu0 %v404
    %1450 = vmatpush1.msra.mxu0 %v403
    %1451 = vmatprep.subr.mxu0 %v407
    %1452 = vmatpush1.msra.mxu0 %v406
    %1453 = vmatprep.subr.mxu0 %v410
    %1454 = vmatpush1.msra.mxu0 %v409
    %1455 = vmatprep.subr.mxu0 %v413
    %1456 = vmatpush1.msra.mxu0 %v412
    %1457 = vmatprep.subr.mxu0 0.0
    %1458 = vmatpush1.msra.mxu0 0.0
    %1459 = vmatprep.subr.mxu0 0.0
    %1460 = vmatpush1.msra.mxu0 0.0
    %1461 = vmatprep.subr.mxu0 0.0
    %1462 = vmatpush1.msra.mxu0 0.0
    %1463 = vmatprep.subr.mxu0 0.0
    %1464 = vmatpush1.msra.mxu0 0.0
    %1465 = vmatprep.subr.mxu0 0.0
    %1466 = vmatpush1.msra.mxu0 0.0
    %1467 = vmatprep.subr.mxu0 0.0
    %1468 = vmatpush1.msra.mxu0 0.0
    %1469 = vmatprep.subr.mxu0 0.0
    %1470 = vmatpush1.msra.mxu0 0.0
    %1471 = vmatprep.subr.mxu0 0.0
    %1472 = vmatpush1.msra.mxu0 0.0
    %1473 = vmatprep.subr.mxu0 0.0
    %1474 = vmatpush1.msra.mxu0 0.0
    %1475 = vmatprep.subr.mxu0 0.0
    %1476 = vmatpush1.msra.mxu0 0.0
    %1477 = vmatprep.subr.mxu0 0.0
    %1478 = vmatpush1.msra.mxu0 0.0
    %1479 = vmatprep.subr.mxu0 0.0
    %1480 = vmatpush1.msra.mxu0 0.0
    %1481 = vmatprep.subr.mxu0 0.0
    %1482 = vmatpush1.msra.mxu0 0.0
    %1483 = vmatprep.subr.mxu0 0.0
    %1484 = vmatpush1.msra.mxu0 0.0
    %1485 = vmatprep.subr.mxu0 0.0
    %1486 = vmatpush1.msra.mxu0 0.0
    %1487 = vmatprep.subr.mxu0 0.0
    %1488 = vmatpush1.msra.mxu0 0.0
    %1489 = vmatprep.subr.mxu0 0.0
    %1490 = vmatpush1.msra.mxu0 0.0
    %1491 = vmatprep.subr.mxu0 0.0
    %1492 = vmatpush1.msra.mxu0 0.0
    %1493 = vmatprep.subr.mxu0 0.0
    %1494 = vmatpush1.msra.mxu0 0.0
    %1495 = vmatprep.subr.mxu0 0.0
    %1496 = vmatpush1.msra.mxu0 0.0
    %1497 = vmatprep.mubr.f32.mxu0 0.0
    %1498 = vmatmul.mubr.f32.gmra.mrb[0].mxu0 %v1431
    %v1499 = vpop.f32.mrb[0].mxu0
    %v1500 = vadd.f32 0.0, %v1499
    %v1501 = vpop.f32.mrb[0].mxu0
    %v1502 = vadd.f32 0.0, %v1501
    %1503 = vdwg.mxu0
    %1504 = vmatprep.subr.mxu0 0.0
    %1505 = vmatpush1.msra.mxu0 %v381
    %1506 = vmatprep.subr.mxu0 0.0
    %1507 = vmatpush1.msra.mxu0 %v384
    %1508 = vmatprep.subr.mxu0 0.0
    %1509 = vmatpush1.msra.mxu0 %v387
    %1510 = vmatprep.subr.mxu0 0.0
    %1511 = vmatpush1.msra.mxu0 %v390
    %1512 = vmatprep.subr.mxu0 0.0
    %1513 = vmatpush1.msra.mxu0 %v393
    %1514 = vmatprep.subr.mxu0 0.0
    %1515 = vmatpush1.msra.mxu0 %v396
    %1516 = vmatprep.subr.mxu0 0.0
    %1517 = vmatpush1.msra.mxu0 %v399
    %1518 = vmatprep.subr.mxu0 0.0
    %1519 = vmatpush1.msra.mxu0 %v402
    %1520 = vmatprep.subr.mxu0 0.0
    %1521 = vmatpush1.msra.mxu0 %v405
    %1522 = vmatprep.subr.mxu0 0.0
    %1523 = vmatpush1.msra.mxu0 %v408
    %1524 = vmatprep.subr.mxu0 0.0
    %1525 = vmatpush1.msra.mxu0 %v411
    %1526 = vmatprep.subr.mxu0 0.0
    %1527 = vmatpush1.msra.mxu0 %v414
    %1528 = vmatprep.subr.mxu0 0.0
    %1529 = vmatpush1.msra.mxu0 0.0
    %1530 = vmatprep.subr.mxu0 0.0
    %1531 = vmatpush1.msra.mxu0 0.0
    %1532 = vmatprep.subr.mxu0 0.0
    %1533 = vmatpush1.msra.mxu0 0.0
    %1534 = vmatprep.subr.mxu0 0.0
    %1535 = vmatpush1.msra.mxu0 0.0
    %1536 = vmatprep.subr.mxu0 0.0
    %1537 = vmatpush1.msra.mxu0 0.0
    %1538 = vmatprep.subr.mxu0 0.0
    %1539 = vmatpush1.msra.mxu0 0.0
    %1540 = vmatprep.subr.mxu0 0.0
    %1541 = vmatpush1.msra.mxu0 0.0
    %1542 = vmatprep.subr.mxu0 0.0
    %1543 = vmatpush1.msra.mxu0 0.0
    %1544 = vmatprep.subr.mxu0 0.0
    %1545 = vmatpush1.msra.mxu0 0.0
    %1546 = vmatprep.subr.mxu0 0.0
    %1547 = vmatpush1.msra.mxu0 0.0
    %1548 = vmatprep.subr.mxu0 0.0
    %1549 = vmatpush1.msra.mxu0 0.0
    %1550 = vmatprep.subr.mxu0 0.0
    %1551 = vmatpush1.msra.mxu0 0.0
    %1552 = vmatprep.subr.mxu0 0.0
    %1553 = vmatpush1.msra.mxu0 0.0
    %1554 = vmatprep.subr.mxu0 0.0
    %1555 = vmatpush1.msra.mxu0 0.0
    %1556 = vmatprep.subr.mxu0 0.0
    %1557 = vmatpush1.msra.mxu0 0.0
    %1558 = vmatprep.subr.mxu0 0.0
    %1559 = vmatpush1.msra.mxu0 0.0
    %1560 = vmatprep.subr.mxu0 0.0
    %1561 = vmatpush1.msra.mxu0 0.0
    %1562 = vmatprep.subr.mxu0 0.0
    %1563 = vmatpush1.msra.mxu0 0.0
    %1564 = vmatprep.subr.mxu0 0.0
    %1565 = vmatpush1.msra.mxu0 0.0
    %1566 = vmatprep.subr.mxu0 0.0
    %1567 = vmatpush1.msra.mxu0 0.0
    %1568 = vmatprep.mubr.f32.mxu0 0.0
    %1569 = vmatmul.mubr.f32.gmra.mrb[0].mxu0 %v1431
    %v1570 = vpop.f32.mrb[0].mxu0
    %v1571 = vadd.f32 0.0, %v1570
    %v1572 = vpop.f32.mrb[0].mxu0
    %1573 = vdwg.mxu0
    %v1574 = vadd.f32 %v1428, %v1500
    %v1575 = vadd.f32 %v1429, %v1502
    %v1576 = vadd.f32 %v1430, %v1571
    %v1577 = vxor.u32 %v1574, 2147483648
    %v1578 = vmul.f32 %v1577, 1.442695
    %v1579 = vpow.pop %v1578
    %v1580 = vadd.f32 %v1579, 1.0
    %v1581 = vrcp.pop %v1580
    %v1582 = vmul.f32 1.0, %v1581
    %v1583 = vxor.u32 %v1575, 2147483648
    %v1584 = vmul.f32 %v1583, 1.442695
    %v1585 = vpow.pop %v1584
    %v1586 = vadd.f32 %v1585, 1.0
    %v1587 = vrcp.pop %v1586
    %v1588 = vmul.f32 1.0, %v1587
    %v1589 = vtanh.pop %v1575
    %v1590 = vtanh.pop %v1576
    %v1591 = vxor.u32 %v1576, 2147483648
    %v1592 = vmul.f32 %v1591, 1.442695
    %v1593 = vpow.pop %v1592
    %v1594 = vadd.f32 %v1593, 1.0
    %v1595 = vrcp.pop %v1594
    %v1596 = vmul.f32 1.0, %v1595
    %v1597 = vmul.f32 %v1582, %v1410
    %v1598 = vmul.f32 %v1588, %v1411
    %1601 = vrot.lane.b32.xlu0 %v1589, 64
    %v1602 = vpop.permute.xlu0 %1601
    %1603 = vrot.lane.b32.xlu0 %v1590, 64
    %v1604 = vpop.permute.xlu0 %1603
    %v1605 = vsel %vm594, %v1602, %v1604
    %v1607 = vmul.f32 %v1582, %v1605
    %1609 = vrot.lane.b32.xlu0 %v1607, 96
    %v1610 = vpop.permute.xlu0 %1609
    %v1612 = vadd.f32 %v1597, %v1610
    %v1613 = vadd.f32 %v1598, %v1610
    %v1614 = vtanh.pop %v1612
    %v1615 = vtanh.pop %v1613
    %1618 = vrot.lane.b32.xlu0 %v1614, 64
    %v1619 = vpop.permute.xlu0 %1618
    %1620 = vrot.lane.b32.xlu0 %v1615, 64
    %v1621 = vpop.permute.xlu0 %1620
    %v1622 = vsel %vm594, %v1619, %v1621
    %v1624 = vmul.f32 %v1596, %v1622
    %1626 = vrot.lane.b32.xlu0 %v1624, 96
    %v1627 = vpop.permute.xlu0 %1626
    %1629 = vst.msk [vmem:[#allocation2 + $0x28] sm:$0xff] %vm418, %v1627
    %v1630 = vld [vmem:[#allocation3 + $0x90] sm:$0xff]
    %v1631 = vld [vmem:[#allocation3 + $0x98] sm:$0xff]
    %v1632 = vld [vmem:[#allocation3 + $0xa0] sm:$0xff]
    %v1633 = vsel %vm418, %v1627, 0
    %1635 = vmatprep.subr.mxu0 %v380
    %1636 = vmatpush1.msra.mxu0 %v379
    %1637 = vmatprep.subr.mxu0 %v383
    %1638 = vmatpush1.msra.mxu0 %v382
    %1639 = vmatprep.subr.mxu0 %v386
    %1640 = vmatpush1.msra.mxu0 %v385
    %1641 = vmatprep.subr.mxu0 %v389
    %1642 = vmatpush1.msra.mxu0 %v388
    %1643 = vmatprep.subr.mxu0 %v392
    %1644 = vmatpush1.msra.mxu0 %v391
    %1645 = vmatprep.subr.mxu0 %v395
    %1646 = vmatpush1.msra.mxu0 %v394
    %1647 = vmatprep.subr.mxu0 %v398
    %1648 = vmatpush1.msra.mxu0 %v397
    %1649 = vmatprep.subr.mxu0 %v401
    %1650 = vmatpush1.msra.mxu0 %v400
    %1651 = vmatprep.subr.mxu0 %v404
    %1652 = vmatpush1.msra.mxu0 %v403
    %1653 = vmatprep.subr.mxu0 %v407
    %1654 = vmatpush1.msra.mxu0 %v406
    %1655 = vmatprep.subr.mxu0 %v410
    %1656 = vmatpush1.msra.mxu0 %v409
    %1657 = vmatprep.subr.mxu0 %v413
    %1658 = vmatpush1.msra.mxu0 %v412
    %1659 = vmatprep.subr.mxu0 0.0
    %1660 = vmatpush1.msra.mxu0 0.0
    %1661 = vmatprep.subr.mxu0 0.0
    %1662 = vmatpush1.msra.mxu0 0.0
    %1663 = vmatprep.subr.mxu0 0.0
    %1664 = vmatpush1.msra.mxu0 0.0
    %1665 = vmatprep.subr.mxu0 0.0
    %1666 = vmatpush1.msra.mxu0 0.0
    %1667 = vmatprep.subr.mxu0 0.0
    %1668 = vmatpush1.msra.mxu0 0.0
    %1669 = vmatprep.subr.mxu0 0.0
    %1670 = vmatpush1.msra.mxu0 0.0
    %1671 = vmatprep.subr.mxu0 0.0
    %1672 = vmatpush1.msra.mxu0 0.0
    %1673 = vmatprep.subr.mxu0 0.0
    %1674 = vmatpush1.msra.mxu0 0.0
    %1675 = vmatprep.subr.mxu0 0.0
    %1676 = vmatpush1.msra.mxu0 0.0
    %1677 = vmatprep.subr.mxu0 0.0
    %1678 = vmatpush1.msra.mxu0 0.0
    %1679 = vmatprep.subr.mxu0 0.0
    %1680 = vmatpush1.msra.mxu0 0.0
    %1681 = vmatprep.subr.mxu0 0.0
    %1682 = vmatpush1.msra.mxu0 0.0
    %1683 = vmatprep.subr.mxu0 0.0
    %1684 = vmatpush1.msra.mxu0 0.0
    %1685 = vmatprep.subr.mxu0 0.0
    %1686 = vmatpush1.msra.mxu0 0.0
    %1687 = vmatprep.subr.mxu0 0.0
    %1688 = vmatpush1.msra.mxu0 0.0
    %1689 = vmatprep.subr.mxu0 0.0
    %1690 = vmatpush1.msra.mxu0 0.0
    %1691 = vmatprep.subr.mxu0 0.0
    %1692 = vmatpush1.msra.mxu0 0.0
    %1693 = vmatprep.subr.mxu0 0.0
    %1694 = vmatpush1.msra.mxu0 0.0
    %1695 = vmatprep.subr.mxu0 0.0
    %1696 = vmatpush1.msra.mxu0 0.0
    %1697 = vmatprep.subr.mxu0 0.0
    %1698 = vmatpush1.msra.mxu0 0.0
    %1699 = vmatprep.mubr.f32.mxu0 0.0
    %1700 = vmatmul.mubr.f32.gmra.mrb[0].mxu0 %v1633
    %v1701 = vpop.f32.mrb[0].mxu0
    %v1702 = vadd.f32 0.0, %v1701
    %v1703 = vpop.f32.mrb[0].mxu0
    %v1704 = vadd.f32 0.0, %v1703
    %1705 = vdwg.mxu0
    %1706 = vmatprep.subr.mxu0 0.0
    %1707 = vmatpush1.msra.mxu0 %v381
    %1708 = vmatprep.subr.mxu0 0.0
    %1709 = vmatpush1.msra.mxu0 %v384
    %1710 = vmatprep.subr.mxu0 0.0
    %1711 = vmatpush1.msra.mxu0 %v387
    %1712 = vmatprep.subr.mxu0 0.0
    %1713 = vmatpush1.msra.mxu0 %v390
    %1714 = vmatprep.subr.mxu0 0.0
    %1715 = vmatpush1.msra.mxu0 %v393
    %1716 = vmatprep.subr.mxu0 0.0
    %1717 = vmatpush1.msra.mxu0 %v396
    %1718 = vmatprep.subr.mxu0 0.0
    %1719 = vmatpush1.msra.mxu0 %v399
    %1720 = vmatprep.subr.mxu0 0.0
    %1721 = vmatpush1.msra.mxu0 %v402
    %1722 = vmatprep.subr.mxu0 0.0
    %1723 = vmatpush1.msra.mxu0 %v405
    %1724 = vmatprep.subr.mxu0 0.0
    %1725 = vmatpush1.msra.mxu0 %v408
    %1726 = vmatprep.subr.mxu0 0.0
    %1727 = vmatpush1.msra.mxu0 %v411
    %1728 = vmatprep.subr.mxu0 0.0
    %1729 = vmatpush1.msra.mxu0 %v414
    %1730 = vmatprep.subr.mxu0 0.0
    %1731 = vmatpush1.msra.mxu0 0.0
    %1732 = vmatprep.subr.mxu0 0.0
    %1733 = vmatpush1.msra.mxu0 0.0
    %1734 = vmatprep.subr.mxu0 0.0
    %1735 = vmatpush1.msra.mxu0 0.0
    %1736 = vmatprep.subr.mxu0 0.0
    %1737 = vmatpush1.msra.mxu0 0.0
    %1738 = vmatprep.subr.mxu0 0.0
    %1739 = vmatpush1.msra.mxu0 0.0
    %1740 = vmatprep.subr.mxu0 0.0
    %1741 = vmatpush1.msra.mxu0 0.0
    %1742 = vmatprep.subr.mxu0 0.0
    %1743 = vmatpush1.msra.mxu0 0.0
    %1744 = vmatprep.subr.mxu0 0.0
    %1745 = vmatpush1.msra.mxu0 0.0
    %1746 = vmatprep.subr.mxu0 0.0
    %1747 = vmatpush1.msra.mxu0 0.0
    %1748 = vmatprep.subr.mxu0 0.0
    %1749 = vmatpush1.msra.mxu0 0.0
    %1750 = vmatprep.subr.mxu0 0.0
    %1751 = vmatpush1.msra.mxu0 0.0
    %1752 = vmatprep.subr.mxu0 0.0
    %1753 = vmatpush1.msra.mxu0 0.0
    %1754 = vmatprep.subr.mxu0 0.0
    %1755 = vmatpush1.msra.mxu0 0.0
    %1756 = vmatprep.subr.mxu0 0.0
    %1757 = vmatpush1.msra.mxu0 0.0
    %1758 = vmatprep.subr.mxu0 0.0
    %1759 = vmatpush1.msra.mxu0 0.0
    %1760 = vmatprep.subr.mxu0 0.0
    %1761 = vmatpush1.msra.mxu0 0.0
    %1762 = vmatprep.subr.mxu0 0.0
    %1763 = vmatpush1.msra.mxu0 0.0
    %1764 = vmatprep.subr.mxu0 0.0
    %1765 = vmatpush1.msra.mxu0 0.0
    %1766 = vmatprep.subr.mxu0 0.0
    %1767 = vmatpush1.msra.mxu0 0.0
    %1768 = vmatprep.subr.mxu0 0.0
    %1769 = vmatpush1.msra.mxu0 0.0
    %1770 = vmatprep.mubr.f32.mxu0 0.0
    %1771 = vmatmul.mubr.f32.gmra.mrb[0].mxu0 %v1633
    %v1772 = vpop.f32.mrb[0].mxu0
    %v1773 = vadd.f32 0.0, %v1772
    %v1774 = vpop.f32.mrb[0].mxu0
    %1775 = vdwg.mxu0
    %v1776 = vadd.f32 %v1630, %v1702
    %v1777 = vadd.f32 %v1631, %v1704
    %v1778 = vadd.f32 %v1632, %v1773
    %v1779 = vxor.u32 %v1776, 2147483648
    %v1780 = vmul.f32 %v1779, 1.442695
    %v1781 = vpow.pop %v1780
    %v1782 = vadd.f32 %v1781, 1.0
    %v1783 = vrcp.pop %v1782
    %v1784 = vmul.f32 1.0, %v1783
    %v1785 = vxor.u32 %v1777, 2147483648
    %v1786 = vmul.f32 %v1785, 1.442695
    %v1787 = vpow.pop %v1786
    %v1788 = vadd.f32 %v1787, 1.0
    %v1789 = vrcp.pop %v1788
    %v1790 = vmul.f32 1.0, %v1789
    %v1791 = vtanh.pop %v1777
    %v1792 = vtanh.pop %v1778
    %v1793 = vxor.u32 %v1778, 2147483648
    %v1794 = vmul.f32 %v1793, 1.442695
    %v1795 = vpow.pop %v1794
    %v1796 = vadd.f32 %v1795, 1.0
    %v1797 = vrcp.pop %v1796
    %v1798 = vmul.f32 1.0, %v1797
    %v1799 = vmul.f32 %v1784, %v1612
    %v1800 = vmul.f32 %v1790, %v1613
    %1803 = vrot.lane.b32.xlu0 %v1791, 64
    %v1804 = vpop.permute.xlu0 %1803
    %1805 = vrot.lane.b32.xlu0 %v1792, 64
    %v1806 = vpop.permute.xlu0 %1805
    %v1807 = vsel %vm594, %v1804, %v1806
    %v1809 = vmul.f32 %v1784, %v1807
    %1811 = vrot.lane.b32.xlu0 %v1809, 96
    %v1812 = vpop.permute.xlu0 %1811
    %v1814 = vadd.f32 %v1799, %v1812
    %v1815 = vadd.f32 %v1800, %v1812
    %v1816 = vtanh.pop %v1814
    %v1817 = vtanh.pop %v1815
    %1820 = vrot.lane.b32.xlu0 %v1816, 64
    %v1821 = vpop.permute.xlu0 %1820
    %1822 = vrot.lane.b32.xlu0 %v1817, 64
    %v1823 = vpop.permute.xlu0 %1822
    %v1824 = vsel %vm594, %v1821, %v1823
    %v1826 = vmul.f32 %v1798, %v1824
    %1828 = vrot.lane.b32.xlu0 %v1826, 96
    %v1829 = vpop.permute.xlu0 %1828
    %1831 = vst.msk [vmem:[#allocation2 + $0x30] sm:$0xff] %vm418, %v1829
    %v1832 = vld [vmem:[#allocation3 + $0xa8] sm:$0xff]
    %v1833 = vld [vmem:[#allocation3 + $0xb0] sm:$0xff]
    %v1834 = vld [vmem:[#allocation3 + $0xb8] sm:$0xff]
    %v1835 = vsel %vm418, %v1829, 0
    %1837 = vmatprep.subr.mxu0 %v380
    %1838 = vmatpush1.msra.mxu0 %v379
    %1839 = vmatprep.subr.mxu0 %v383
    %1840 = vmatpush1.msra.mxu0 %v382
    %1841 = vmatprep.subr.mxu0 %v386
    %1842 = vmatpush1.msra.mxu0 %v385
    %1843 = vmatprep.subr.mxu0 %v389
    %1844 = vmatpush1.msra.mxu0 %v388
    %1845 = vmatprep.subr.mxu0 %v392
    %1846 = vmatpush1.msra.mxu0 %v391
    %1847 = vmatprep.subr.mxu0 %v395
    %1848 = vmatpush1.msra.mxu0 %v394
    %1849 = vmatprep.subr.mxu0 %v398
    %1850 = vmatpush1.msra.mxu0 %v397
    %1851 = vmatprep.subr.mxu0 %v401
    %1852 = vmatpush1.msra.mxu0 %v400
    %1853 = vmatprep.subr.mxu0 %v404
    %1854 = vmatpush1.msra.mxu0 %v403
    %1855 = vmatprep.subr.mxu0 %v407
    %1856 = vmatpush1.msra.mxu0 %v406
    %1857 = vmatprep.subr.mxu0 %v410
    %1858 = vmatpush1.msra.mxu0 %v409
    %1859 = vmatprep.subr.mxu0 %v413
    %1860 = vmatpush1.msra.mxu0 %v412
    %1861 = vmatprep.subr.mxu0 0.0
    %1862 = vmatpush1.msra.mxu0 0.0
    %1863 = vmatprep.subr.mxu0 0.0
    %1864 = vmatpush1.msra.mxu0 0.0
    %1865 = vmatprep.subr.mxu0 0.0
    %1866 = vmatpush1.msra.mxu0 0.0
    %1867 = vmatprep.subr.mxu0 0.0
    %1868 = vmatpush1.msra.mxu0 0.0
    %1869 = vmatprep.subr.mxu0 0.0
    %1870 = vmatpush1.msra.mxu0 0.0
    %1871 = vmatprep.subr.mxu0 0.0
    %1872 = vmatpush1.msra.mxu0 0.0
    %1873 = vmatprep.subr.mxu0 0.0
    %1874 = vmatpush1.msra.mxu0 0.0
    %1875 = vmatprep.subr.mxu0 0.0
    %1876 = vmatpush1.msra.mxu0 0.0
    %1877 = vmatprep.subr.mxu0 0.0
    %1878 = vmatpush1.msra.mxu0 0.0
    %1879 = vmatprep.subr.mxu0 0.0
    %1880 = vmatpush1.msra.mxu0 0.0
    %1881 = vmatprep.subr.mxu0 0.0
    %1882 = vmatpush1.msra.mxu0 0.0
    %1883 = vmatprep.subr.mxu0 0.0
    %1884 = vmatpush1.msra.mxu0 0.0
    %1885 = vmatprep.subr.mxu0 0.0
    %1886 = vmatpush1.msra.mxu0 0.0
    %1887 = vmatprep.subr.mxu0 0.0
    %1888 = vmatpush1.msra.mxu0 0.0
    %1889 = vmatprep.subr.mxu0 0.0
    %1890 = vmatpush1.msra.mxu0 0.0
    %1891 = vmatprep.subr.mxu0 0.0
    %1892 = vmatpush1.msra.mxu0 0.0
    %1893 = vmatprep.subr.mxu0 0.0
    %1894 = vmatpush1.msra.mxu0 0.0
    %1895 = vmatprep.subr.mxu0 0.0
    %1896 = vmatpush1.msra.mxu0 0.0
    %1897 = vmatprep.subr.mxu0 0.0
    %1898 = vmatpush1.msra.mxu0 0.0
    %1899 = vmatprep.subr.mxu0 0.0
    %1900 = vmatpush1.msra.mxu0 0.0
    %1901 = vmatprep.mubr.f32.mxu0 0.0
    %1902 = vmatmul.mubr.f32.gmra.mrb[0].mxu0 %v1835
    %v1903 = vpop.f32.mrb[0].mxu0
    %v1904 = vadd.f32 0.0, %v1903
    %v1905 = vpop.f32.mrb[0].mxu0
    %v1906 = vadd.f32 0.0, %v1905
    %1907 = vdwg.mxu0
    %1908 = vmatprep.subr.mxu0 0.0
    %1909 = vmatpush1.msra.mxu0 %v381
    %1910 = vmatprep.subr.mxu0 0.0
    %1911 = vmatpush1.msra.mxu0 %v384
    %1912 = vmatprep.subr.mxu0 0.0
    %1913 = vmatpush1.msra.mxu0 %v387
    %1914 = vmatprep.subr.mxu0 0.0
    %1915 = vmatpush1.msra.mxu0 %v390
    %1916 = vmatprep.subr.mxu0 0.0
    %1917 = vmatpush1.msra.mxu0 %v393
    %1918 = vmatprep.subr.mxu0 0.0
    %1919 = vmatpush1.msra.mxu0 %v396
    %1920 = vmatprep.subr.mxu0 0.0
    %1921 = vmatpush1.msra.mxu0 %v399
    %1922 = vmatprep.subr.mxu0 0.0
    %1923 = vmatpush1.msra.mxu0 %v402
    %1924 = vmatprep.subr.mxu0 0.0
    %1925 = vmatpush1.msra.mxu0 %v405
    %1926 = vmatprep.subr.mxu0 0.0
    %1927 = vmatpush1.msra.mxu0 %v408
    %1928 = vmatprep.subr.mxu0 0.0
    %1929 = vmatpush1.msra.mxu0 %v411
    %1930 = vmatprep.subr.mxu0 0.0
    %1931 = vmatpush1.msra.mxu0 %v414
    %1932 = vmatprep.subr.mxu0 0.0
    %1933 = vmatpush1.msra.mxu0 0.0
    %1934 = vmatprep.subr.mxu0 0.0
    %1935 = vmatpush1.msra.mxu0 0.0
    %1936 = vmatprep.subr.mxu0 0.0
    %1937 = vmatpush1.msra.mxu0 0.0
    %1938 = vmatprep.subr.mxu0 0.0
    %1939 = vmatpush1.msra.mxu0 0.0
    %1940 = vmatprep.subr.mxu0 0.0
    %1941 = vmatpush1.msra.mxu0 0.0
    %1942 = vmatprep.subr.mxu0 0.0
    %1943 = vmatpush1.msra.mxu0 0.0
    %1944 = vmatprep.subr.mxu0 0.0
    %1945 = vmatpush1.msra.mxu0 0.0
    %1946 = vmatprep.subr.mxu0 0.0
    %1947 = vmatpush1.msra.mxu0 0.0
    %1948 = vmatprep.subr.mxu0 0.0
    %1949 = vmatpush1.msra.mxu0 0.0
    %1950 = vmatprep.subr.mxu0 0.0
    %1951 = vmatpush1.msra.mxu0 0.0
    %1952 = vmatprep.subr.mxu0 0.0
    %1953 = vmatpush1.msra.mxu0 0.0
    %1954 = vmatprep.subr.mxu0 0.0
    %1955 = vmatpush1.msra.mxu0 0.0
    %1956 = vmatprep.subr.mxu0 0.0
    %1957 = vmatpush1.msra.mxu0 0.0
    %1958 = vmatprep.subr.mxu0 0.0
    %1959 = vmatpush1.msra.mxu0 0.0
    %1960 = vmatprep.subr.mxu0 0.0
    %1961 = vmatpush1.msra.mxu0 0.0
    %1962 = vmatprep.subr.mxu0 0.0
    %1963 = vmatpush1.msra.mxu0 0.0
    %1964 = vmatprep.subr.mxu0 0.0
    %1965 = vmatpush1.msra.mxu0 0.0
    %1966 = vmatprep.subr.mxu0 0.0
    %1967 = vmatpush1.msra.mxu0 0.0
    %1968 = vmatprep.subr.mxu0 0.0
    %1969 = vmatpush1.msra.mxu0 0.0
    %1970 = vmatprep.subr.mxu0 0.0
    %1971 = vmatpush1.msra.mxu0 0.0
    %1972 = vmatprep.mubr.f32.mxu0 0.0
    %1973 = vmatmul.mubr.f32.gmra.mrb[0].mxu0 %v1835
    %v1974 = vpop.f32.mrb[0].mxu0
    %v1975 = vadd.f32 0.0, %v1974
    %v1976 = vpop.f32.mrb[0].mxu0
    %1977 = vdwg.mxu0
    %v1978 = vadd.f32 %v1832, %v1904
    %v1979 = vadd.f32 %v1833, %v1906
    %v1980 = vadd.f32 %v1834, %v1975
    %v1981 = vxor.u32 %v1978, 2147483648
    %v1982 = vmul.f32 %v1981, 1.442695
    %v1983 = vpow.pop %v1982
    %v1984 = vadd.f32 %v1983, 1.0
    %v1985 = vrcp.pop %v1984
    %v1986 = vmul.f32 1.0, %v1985
    %v1987 = vxor.u32 %v1979, 2147483648
    %v1988 = vmul.f32 %v1987, 1.442695
    %v1989 = vpow.pop %v1988
    %v1990 = vadd.f32 %v1989, 1.0
    %v1991 = vrcp.pop %v1990
    %v1992 = vmul.f32 1.0, %v1991
    %v1993 = vtanh.pop %v1979
    %v1994 = vtanh.pop %v1980
    %v1995 = vxor.u32 %v1980, 2147483648
    %v1996 = vmul.f32 %v1995, 1.442695
    %v1997 = vpow.pop %v1996
    %v1998 = vadd.f32 %v1997, 1.0
    %v1999 = vrcp.pop %v1998
    %v2000 = vmul.f32 1.0, %v1999
    %v2001 = vmul.f32 %v1986, %v1814
    %v2002 = vmul.f32 %v1992, %v1815
    %2005 = vrot.lane.b32.xlu0 %v1993, 64
    %v2006 = vpop.permute.xlu0 %2005
    %2007 = vrot.lane.b32.xlu0 %v1994, 64
    %v2008 = vpop.permute.xlu0 %2007
    %v2009 = vsel %vm594, %v2006, %v2008
    %v2011 = vmul.f32 %v1986, %v2009
    %2013 = vrot.lane.b32.xlu0 %v2011, 96
    %v2014 = vpop.permute.xlu0 %2013
    %v2016 = vadd.f32 %v2001, %v2014
    %v2017 = vadd.f32 %v2002, %v2014
    %v2018 = vtanh.pop %v2016
    %v2019 = vtanh.pop %v2017
    %2022 = vrot.lane.b32.xlu0 %v2018, 64
    %v2023 = vpop.permute.xlu0 %2022
    %2024 = vrot.lane.b32.xlu0 %v2019, 64
    %v2025 = vpop.permute.xlu0 %2024
    %v2026 = vsel %vm594, %v2023, %v2025
    %v2028 = vmul.f32 %v2000, %v2026
    %2030 = vrot.lane.b32.xlu0 %v2028, 96
    %v2031 = vpop.permute.xlu0 %2030
    %2033 = vst.msk [vmem:[#allocation2 + $0x38] sm:$0xff] %vm418, %v2031
    %v2034 = vld [vmem:[#allocation2] sm:$0xff]
    %v2035 = vld [vmem:[#allocation2 + $0x8] sm:$0xff]
    %v2036 = vld [vmem:[#allocation2 + $0x10] sm:$0xff]
    %v2037 = vld [vmem:[#allocation2 + $0x18] sm:$0xff]
    %v2038 = vld [vmem:[#allocation2 + $0x20] sm:$0xff]
    %v2039 = vld [vmem:[#allocation2 + $0x28] sm:$0xff]
    %v2040 = vld [vmem:[#allocation2 + $0x30] sm:$0xff]
    %v2041 = vld [vmem:[#allocation2 + $0x38] sm:$0xff]
    %v2042 = vld [vmem:[#allocation4] sm:$0xff]
    %v2043 = vld [vmem:[#allocation4 + $0x8] sm:$0xff]
    %v2044 = vld [vmem:[#allocation4 + $0x10] sm:$0xff]
    %v2045 = vld [vmem:[#allocation4 + $0x18] sm:$0xff]
    %v2046 = vld [vmem:[#allocation4 + $0x20] sm:$0xff]
    %v2047 = vld [vmem:[#allocation4 + $0x28] sm:$0xff]
    %v2048 = vld [vmem:[#allocation4 + $0x30] sm:$0xff]
    %v2049 = vld [vmem:[#allocation4 + $0x38] sm:$0xff]
    %v2050 = vld [vmem:[#allocation4 + $0x40] sm:$0xff]
    %v2051 = vld [vmem:[#allocation4 + $0x48] sm:$0xff]
    %v2052 = vld [vmem:[#allocation4 + $0x50] sm:$0xff]
    %v2053 = vld [vmem:[#allocation4 + $0x58] sm:$0xff]
    %v2054 = vld [vmem:[#allocation4 + $0x60] sm:$0xff]
    %v2055 = vld [vmem:[#allocation4 + $0x68] sm:$0xff]
    %v2056 = vld [vmem:[#allocation4 + $0x70] sm:$0xff]
    %v2057 = vld [vmem:[#allocation4 + $0x78] sm:$0xff]
    %v2058 = vld [vmem:[#allocation4 + $0x80] sm:$0xff]
    %v2059 = vld [vmem:[#allocation4 + $0x88] sm:$0xff]
    %v2060 = vld [vmem:[#allocation4 + $0x90] sm:$0xff]
    %v2061 = vld [vmem:[#allocation4 + $0x98] sm:$0xff]
    %v2062 = vld [vmem:[#allocation4 + $0xa0] sm:$0xff]
    %v2063 = vld [vmem:[#allocation4 + $0xa8] sm:$0xff]
    %v2064 = vld [vmem:[#allocation4 + $0xb0] sm:$0xff]
    %v2065 = vld [vmem:[#allocation4 + $0xb8] sm:$0xff]
    %v2066 = vld [vmem:[#allocation4 + $0xc0] sm:$0xff]
    %v2067 = vld [vmem:[#allocation4 + $0xc8] sm:$0xff]
    %v2068 = vld [vmem:[#allocation4 + $0xd0] sm:$0xff]
    %v2069 = vld [vmem:[#allocation4 + $0xd8] sm:$0xff]
    %v2070 = vld [vmem:[#allocation4 + $0xe0] sm:$0xff]
    %v2071 = vld [vmem:[#allocation4 + $0xe8] sm:$0xff]
    %v2072 = vld [vmem:[#allocation4 + $0xf0] sm:$0xff]
    %v2073 = vld [vmem:[#allocation4 + $0xf8] sm:$0xff]
    %v2074 = vld [vmem:[#allocation4 + $0x100] sm:$0xff]
    %v2075 = vld [vmem:[#allocation4 + $0x108] sm:$0xff]
    %v2076 = vld [vmem:[#allocation4 + $0x110] sm:$0xff]
    %v2077 = vld [vmem:[#allocation4 + $0x118] sm:$0xff]
    %v2078 = vld [vmem:[%s6] sm:$0x7]
    %v2080 = vlaneseq
    %v2081 = vshrl.u32 %v2080, 7
    %v2082 = vsub.s32 0, %v2081
    %v2083 = vrot.slane %v2078, %v2082
    %v2084 = vlaneseq
    %v2085 = vshrl.u32 %v2084, 7
    %v2086 = vsub.s32 1, %v2085
    %v2087 = vrot.slane %v2078, %v2086
    %v2088 = vlaneseq
    %v2089 = vshrl.u32 %v2088, 7
    %v2090 = vsub.s32 2, %v2089
    %v2091 = vrot.slane %v2078, %v2090
    %v2096 = vsel %vm418, %v2034, 0
    %v2099 = vsel %vm418, %v2035, 0
    %v2102 = vsel %vm418, %v2036, 0
    %v2105 = vsel %vm418, %v2037, 0
    %v2108 = vsel %vm418, %v2038, 0
    %v2111 = vsel %vm418, %v2039, 0
    %v2114 = vsel %vm418, %v2040, 0
    %v2117 = vsel %vm418, %v2041, 0
    %2119 = vmatprep.subr.mxu0 %v2043
    %2120 = vmatpush1.msra.mxu0 %v2042
    %2121 = vmatprep.subr.mxu0 %v2046
    %2122 = vmatpush1.msra.mxu0 %v2045
    %2123 = vmatprep.subr.mxu0 %v2049
    %2124 = vmatpush1.msra.mxu0 %v2048
    %2125 = vmatprep.subr.mxu0 %v2052
    %2126 = vmatpush1.msra.mxu0 %v2051
    %2127 = vmatprep.subr.mxu0 %v2055
    %2128 = vmatpush1.msra.mxu0 %v2054
    %2129 = vmatprep.subr.mxu0 %v2058
    %2130 = vmatpush1.msra.mxu0 %v2057
    %2131 = vmatprep.subr.mxu0 %v2061
    %2132 = vmatpush1.msra.mxu0 %v2060
    %2133 = vmatprep.subr.mxu0 %v2064
    %2134 = vmatpush1.msra.mxu0 %v2063
    %2135 = vmatprep.subr.mxu0 %v2067
    %2136 = vmatpush1.msra.mxu0 %v2066
    %2137 = vmatprep.subr.mxu0 %v2070
    %2138 = vmatpush1.msra.mxu0 %v2069
    %2139 = vmatprep.subr.mxu0 %v2073
    %2140 = vmatpush1.msra.mxu0 %v2072
    %2141 = vmatprep.subr.mxu0 %v2076
    %2142 = vmatpush1.msra.mxu0 %v2075
    %2143 = vmatprep.subr.mxu0 0.0
    %2144 = vmatpush1.msra.mxu0 0.0
    %2145 = vmatprep.subr.mxu0 0.0
    %2146 = vmatpush1.msra.mxu0 0.0
    %2147 = vmatprep.subr.mxu0 0.0
    %2148 = vmatpush1.msra.mxu0 0.0
    %2149 = vmatprep.subr.mxu0 0.0
    %2150 = vmatpush1.msra.mxu0 0.0
    %2151 = vmatprep.subr.mxu0 0.0
    %2152 = vmatpush1.msra.mxu0 0.0
    %2153 = vmatprep.subr.mxu0 0.0
    %2154 = vmatpush1.msra.mxu0 0.0
    %2155 = vmatprep.subr.mxu0 0.0
    %2156 = vmatpush1.msra.mxu0 0.0
    %2157 = vmatprep.subr.mxu0 0.0
    %2158 = vmatpush1.msra.mxu0 0.0
    %2159 = vmatprep.subr.mxu0 0.0
    %2160 = vmatpush1.msra.mxu0 0.0
    %2161 = vmatprep.subr.mxu0 0.0
    %2162 = vmatpush1.msra.mxu0 0.0
    %2163 = vmatprep.subr.mxu0 0.0
    %2164 = vmatpush1.msra.mxu0 0.0
    %2165 = vmatprep.subr.mxu0 0.0
    %2166 = vmatpush1.msra.mxu0 0.0
    %2167 = vmatprep.subr.mxu0 0.0
    %2168 = vmatpush1.msra.mxu0 0.0
    %2169 = vmatprep.subr.mxu0 0.0
    %2170 = vmatpush1.msra.mxu0 0.0
    %2171 = vmatprep.subr.mxu0 0.0
    %2172 = vmatpush1.msra.mxu0 0.0
    %2173 = vmatprep.subr.mxu0 0.0
    %2174 = vmatpush1.msra.mxu0 0.0
    %2175 = vmatprep.subr.mxu0 0.0
    %2176 = vmatpush1.msra.mxu0 0.0
    %2177 = vmatprep.subr.mxu0 0.0
    %2178 = vmatpush1.msra.mxu0 0.0
    %2179 = vmatprep.subr.mxu0 0.0
    %2180 = vmatpush1.msra.mxu0 0.0
    %2181 = vmatprep.subr.mxu0 0.0
    %2182 = vmatpush1.msra.mxu0 0.0
    %2183 = vmatprep.mubr.f32.mxu0 0.0
    %2184 = vmatmul.mubr.f32.gmra.mrb[0].mxu0 %v2096
    %v2185 = vpop.f32.mrb[0].mxu0
    %v2186 = vadd.f32 %v2083, %v2185
    %v2187 = vpop.f32.mrb[0].mxu0
    %v2188 = vadd.f32 %v2087, %v2187
    %2189 = vmatprep.mubr.f32.mxu0 0.0
    %2190 = vmatmul.mubr.f32.gmra.mrb[0].mxu0 %v2099
    %v2191 = vpop.f32.mrb[0].mxu0
    %v2192 = vadd.f32 %v2083, %v2191
    %v2193 = vpop.f32.mrb[0].mxu0
    %v2194 = vadd.f32 %v2087, %v2193
    %2195 = vmatprep.mubr.f32.mxu0 0.0
    %2196 = vmatmul.mubr.f32.gmra.mrb[0].mxu0 %v2102
    %v2197 = vpop.f32.mrb[0].mxu0
    %v2198 = vadd.f32 %v2083, %v2197
    %v2199 = vpop.f32.mrb[0].mxu0
    %v2200 = vadd.f32 %v2087, %v2199
    %2201 = vmatprep.mubr.f32.mxu0 0.0
    %2202 = vmatmul.mubr.f32.gmra.mrb[0].mxu0 %v2105
    %v2203 = vpop.f32.mrb[0].mxu0
    %v2204 = vadd.f32 %v2083, %v2203
    %v2205 = vpop.f32.mrb[0].mxu0
    %v2206 = vadd.f32 %v2087, %v2205
    %2207 = vmatprep.mubr.f32.mxu0 0.0
    %2208 = vmatmul.mubr.f32.gmra.mrb[0].mxu0 %v2108
    %v2209 = vpop.f32.mrb[0].mxu0
    %v2210 = vadd.f32 %v2083, %v2209
    %v2211 = vpop.f32.mrb[0].mxu0
    %v2212 = vadd.f32 %v2087, %v2211
    %2213 = vmatprep.mubr.f32.mxu0 0.0
    %2214 = vmatmul.mubr.f32.gmra.mrb[0].mxu0 %v2111
    %v2215 = vpop.f32.mrb[0].mxu0
    %v2216 = vadd.f32 %v2083, %v2215
    %v2217 = vpop.f32.mrb[0].mxu0
    %v2218 = vadd.f32 %v2087, %v2217
    %2219 = vmatprep.mubr.f32.mxu0 0.0
    %2220 = vmatmul.mubr.f32.gmra.mrb[0].mxu0 %v2114
    %v2221 = vpop.f32.mrb[0].mxu0
    %v2222 = vadd.f32 %v2083, %v2221
    %v2223 = vpop.f32.mrb[0].mxu0
    %v2224 = vadd.f32 %v2087, %v2223
    %2225 = vmatprep.mubr.f32.mxu0 0.0
    %2226 = vmatmul.mubr.f32.gmra.mrb[0].mxu0 %v2117
    %v2227 = vpop.f32.mrb[0].mxu0
    %v2228 = vadd.f32 %v2083, %v2227
    %v2229 = vpop.f32.mrb[0].mxu0
    %v2230 = vadd.f32 %v2087, %v2229
    %2231 = vdwg.mxu0
    %2232 = vmatprep.subr.mxu0 0.0
    %2233 = vmatpush1.msra.mxu0 %v2044
    %2234 = vmatprep.subr.mxu0 0.0
    %2235 = vmatpush1.msra.mxu0 %v2047
    %2236 = vmatprep.subr.mxu0 0.0
    %2237 = vmatpush1.msra.mxu0 %v2050
    %2238 = vmatprep.subr.mxu0 0.0
    %2239 = vmatpush1.msra.mxu0 %v2053
    %2240 = vmatprep.subr.mxu0 0.0
    %2241 = vmatpush1.msra.mxu0 %v2056
    %2242 = vmatprep.subr.mxu0 0.0
    %2243 = vmatpush1.msra.mxu0 %v2059
    %2244 = vmatprep.subr.mxu0 0.0
    %2245 = vmatpush1.msra.mxu0 %v2062
    %2246 = vmatprep.subr.mxu0 0.0
    %2247 = vmatpush1.msra.mxu0 %v2065
    %2248 = vmatprep.subr.mxu0 0.0
    %2249 = vmatpush1.msra.mxu0 %v2068
    %2250 = vmatprep.subr.mxu0 0.0
    %2251 = vmatpush1.msra.mxu0 %v2071
    %2252 = vmatprep.subr.mxu0 0.0
    %2253 = vmatpush1.msra.mxu0 %v2074
    %2254 = vmatprep.subr.mxu0 0.0
    %2255 = vmatpush1.msra.mxu0 %v2077
    %2256 = vmatprep.subr.mxu0 0.0
    %2257 = vmatpush1.msra.mxu0 0.0
    %2258 = vmatprep.subr.mxu0 0.0
    %2259 = vmatpush1.msra.mxu0 0.0
    %2260 = vmatprep.subr.mxu0 0.0
    %2261 = vmatpush1.msra.mxu0 0.0
    %2262 = vmatprep.subr.mxu0 0.0
    %2263 = vmatpush1.msra.mxu0 0.0
    %2264 = vmatprep.subr.mxu0 0.0
    %2265 = vmatpush1.msra.mxu0 0.0
    %2266 = vmatprep.subr.mxu0 0.0
    %2267 = vmatpush1.msra.mxu0 0.0
    %2268 = vmatprep.subr.mxu0 0.0
    %2269 = vmatpush1.msra.mxu0 0.0
    %2270 = vmatprep.subr.mxu0 0.0
    %2271 = vmatpush1.msra.mxu0 0.0
    %2272 = vmatprep.subr.mxu0 0.0
    %2273 = vmatpush1.msra.mxu0 0.0
    %2274 = vmatprep.subr.mxu0 0.0
    %2275 = vmatpush1.msra.mxu0 0.0
    %2276 = vmatprep.subr.mxu0 0.0
    %2277 = vmatpush1.msra.mxu0 0.0
    %2278 = vmatprep.subr.mxu0 0.0
    %2279 = vmatpush1.msra.mxu0 0.0
    %2280 = vmatprep.subr.mxu0 0.0
    %2281 = vmatpush1.msra.mxu0 0.0
    %2282 = vmatprep.subr.mxu0 0.0
    %2283 = vmatpush1.msra.mxu0 0.0
    %2284 = vmatprep.subr.mxu0 0.0
    %2285 = vmatpush1.msra.mxu0 0.0
    %2286 = vmatprep.subr.mxu0 0.0
    %2287 = vmatpush1.msra.mxu0 0.0
    %2288 = vmatprep.subr.mxu0 0.0
    %2289 = vmatpush1.msra.mxu0 0.0
    %2290 = vmatprep.subr.mxu0 0.0
    %2291 = vmatpush1.msra.mxu0 0.0
    %2292 = vmatprep.subr.mxu0 0.0
    %2293 = vmatpush1.msra.mxu0 0.0
    %2294 = vmatprep.subr.mxu0 0.0
    %2295 = vmatpush1.msra.mxu0 0.0
    %2296 = vmatprep.mubr.f32.mxu0 0.0
    %2297 = vmatmul.mubr.f32.gmra.mrb[0].mxu0 %v2096
    %v2298 = vpop.f32.mrb[0].mxu0
    %v2299 = vadd.f32 %v2091, %v2298
    %v2300 = vpop.f32.mrb[0].mxu0
    %2301 = vmatprep.mubr.f32.mxu0 0.0
    %2302 = vmatmul.mubr.f32.gmra.mrb[0].mxu0 %v2099
    %v2303 = vpop.f32.mrb[0].mxu0
    %v2304 = vadd.f32 %v2091, %v2303
    %v2305 = vpop.f32.mrb[0].mxu0
    %2306 = vmatprep.mubr.f32.mxu0 0.0
    %2307 = vmatmul.mubr.f32.gmra.mrb[0].mxu0 %v2102
    %v2308 = vpop.f32.mrb[0].mxu0
    %v2309 = vadd.f32 %v2091, %v2308
    %v2310 = vpop.f32.mrb[0].mxu0
    %2311 = vmatprep.mubr.f32.mxu0 0.0
    %2312 = vmatmul.mubr.f32.gmra.mrb[0].mxu0 %v2105
    %v2313 = vpop.f32.mrb[0].mxu0
    %v2314 = vadd.f32 %v2091, %v2313
    %v2315 = vpop.f32.mrb[0].mxu0
    %2316 = vmatprep.mubr.f32.mxu0 0.0
    %2317 = vmatmul.mubr.f32.gmra.mrb[0].mxu0 %v2108
    %v2318 = vpop.f32.mrb[0].mxu0
    %v2319 = vadd.f32 %v2091, %v2318
    %v2320 = vpop.f32.mrb[0].mxu0
    %2321 = vmatprep.mubr.f32.mxu0 0.0
    %2322 = vmatmul.mubr.f32.gmra.mrb[0].mxu0 %v2111
    %v2323 = vpop.f32.mrb[0].mxu0
    %v2324 = vadd.f32 %v2091, %v2323
    %v2325 = vpop.f32.mrb[0].mxu0
    %2326 = vmatprep.mubr.f32.mxu0 0.0
    %2327 = vmatmul.mubr.f32.gmra.mrb[0].mxu0 %v2114
    %v2328 = vpop.f32.mrb[0].mxu0
    %v2329 = vadd.f32 %v2091, %v2328
    %v2330 = vpop.f32.mrb[0].mxu0
    %2331 = vmatprep.mubr.f32.mxu0 0.0
    %2332 = vmatmul.mubr.f32.gmra.mrb[0].mxu0 %v2117
    %v2333 = vpop.f32.mrb[0].mxu0
    %v2334 = vadd.f32 %v2091, %v2333
    %v2335 = vpop.f32.mrb[0].mxu0
    %2336 = vdwg.mxu0
    %2337 = vst [vmem:[#allocation3] sm:$0xff] %v2186
    %2338 = vst [vmem:[#allocation3 + $0x8] sm:$0xff] %v2188
    %2339 = vst [vmem:[#allocation3 + $0x10] sm:$0xff] %v2299
    %2340 = vst [vmem:[#allocation3 + $0x18] sm:$0xff] %v2192
    %2341 = vst [vmem:[#allocation3 + $0x20] sm:$0xff] %v2194
    %2342 = vst [vmem:[#allocation3 + $0x28] sm:$0xff] %v2304
    %2343 = vst [vmem:[#allocation3 + $0x30] sm:$0xff] %v2198
    %2344 = vst [vmem:[#allocation3 + $0x38] sm:$0xff] %v2200
    %2345 = vst [vmem:[#allocation3 + $0x40] sm:$0xff] %v2309
    %2346 = vst [vmem:[#allocation3 + $0x48] sm:$0xff] %v2204
    %2347 = vst [vmem:[#allocation3 + $0x50] sm:$0xff] %v2206
    %2348 = vst [vmem:[#allocation3 + $0x58] sm:$0xff] %v2314
    %2349 = vst [vmem:[#allocation3 + $0x60] sm:$0xff] %v2210
    %2350 = vst [vmem:[#allocation3 + $0x68] sm:$0xff] %v2212
    %2351 = vst [vmem:[#allocation3 + $0x70] sm:$0xff] %v2319
    %2352 = vst [vmem:[#allocation3 + $0x78] sm:$0xff] %v2216
    %2353 = vst [vmem:[#allocation3 + $0x80] sm:$0xff] %v2218
    %2354 = vst [vmem:[#allocation3 + $0x88] sm:$0xff] %v2324
    %2355 = vst [vmem:[#allocation3 + $0x90] sm:$0xff] %v2222
    %2356 = vst [vmem:[#allocation3 + $0x98] sm:$0xff] %v2224
    %2357 = vst [vmem:[#allocation3 + $0xa0] sm:$0xff] %v2329
    %2358 = vst [vmem:[#allocation3 + $0xa8] sm:$0xff] %v2228
    %2359 = vst [vmem:[#allocation3 + $0xb0] sm:$0xff] %v2230
    %2360 = vst [vmem:[#allocation3 + $0xb8] sm:$0xff] %v2334
    %v2361 = vld [vmem:[#allocation6] sm:$0xff]
    %v2362 = vld [vmem:[#allocation6 + $0x8] sm:$0xff]
    %v2363 = vld [vmem:[#allocation6 + $0x10] sm:$0xff]
    %v2364 = vld [vmem:[#allocation6 + $0x18] sm:$0xff]
    %v2365 = vld [vmem:[#allocation6 + $0x20] sm:$0xff]
    %v2366 = vld [vmem:[#allocation6 + $0x28] sm:$0xff]
    %v2367 = vld [vmem:[#allocation6 + $0x30] sm:$0xff]
    %v2368 = vld [vmem:[#allocation6 + $0x38] sm:$0xff]
    %v2369 = vld [vmem:[#allocation6 + $0x40] sm:$0xff]
    %v2370 = vld [vmem:[#allocation6 + $0x48] sm:$0xff]
    %v2371 = vld [vmem:[#allocation6 + $0x50] sm:$0xff]
    %v2372 = vld [vmem:[#allocation6 + $0x58] sm:$0xff]
    %v2373 = vld [vmem:[#allocation6 + $0x60] sm:$0xff]
    %v2374 = vld [vmem:[#allocation6 + $0x68] sm:$0xff]
    %v2375 = vld [vmem:[#allocation6 + $0x70] sm:$0xff]
    %v2376 = vld [vmem:[#allocation6 + $0x78] sm:$0xff]
    %v2377 = vld [vmem:[#allocation6 + $0x80] sm:$0xff]
    %v2378 = vld [vmem:[#allocation6 + $0x88] sm:$0xff]
    %v2379 = vld [vmem:[#allocation6 + $0x90] sm:$0xff]
    %v2380 = vld [vmem:[#allocation6 + $0x98] sm:$0xff]
    %v2381 = vld [vmem:[#allocation6 + $0xa0] sm:$0xff]
    %v2382 = vld [vmem:[#allocation6 + $0xa8] sm:$0xff]
    %v2383 = vld [vmem:[#allocation6 + $0xb0] sm:$0xff]
    %v2384 = vld [vmem:[#allocation6 + $0xb8] sm:$0xff]
    %v2385 = vld [vmem:[#allocation6 + $0xc0] sm:$0xff]
    %v2386 = vld [vmem:[#allocation6 + $0xc8] sm:$0xff]
    %v2387 = vld [vmem:[#allocation6 + $0xd0] sm:$0xff]
    %v2388 = vld [vmem:[#allocation6 + $0xd8] sm:$0xff]
    %v2389 = vld [vmem:[#allocation6 + $0xe0] sm:$0xff]
    %v2390 = vld [vmem:[#allocation6 + $0xe8] sm:$0xff]
    %v2391 = vld [vmem:[#allocation6 + $0xf0] sm:$0xff]
    %v2392 = vld [vmem:[#allocation6 + $0xf8] sm:$0xff]
    %v2393 = vld [vmem:[#allocation6 + $0x100] sm:$0xff]
    %v2394 = vld [vmem:[#allocation6 + $0x108] sm:$0xff]
    %v2395 = vld [vmem:[#allocation6 + $0x110] sm:$0xff]
    %v2396 = vld [vmem:[#allocation6 + $0x118] sm:$0xff]
    %v2397 = vld [vmem:[#allocation3] sm:$0xff]
    %v2398 = vld [vmem:[#allocation3 + $0x8] sm:$0xff]
    %v2399 = vld [vmem:[#allocation3 + $0x10] sm:$0xff]
    %2400 = vmatprep.subr.mxu0 %v2362
    %2401 = vmatpush1.msra.mxu0 %v2361
    %2402 = vmatprep.subr.mxu0 %v2365
    %2403 = vmatpush1.msra.mxu0 %v2364
    %2404 = vmatprep.subr.mxu0 %v2368
    %2405 = vmatpush1.msra.mxu0 %v2367
    %2406 = vmatprep.subr.mxu0 %v2371
    %2407 = vmatpush1.msra.mxu0 %v2370
    %2408 = vmatprep.subr.mxu0 %v2374
    %2409 = vmatpush1.msra.mxu0 %v2373
    %2410 = vmatprep.subr.mxu0 %v2377
    %2411 = vmatpush1.msra.mxu0 %v2376
    %2412 = vmatprep.subr.mxu0 %v2380
    %2413 = vmatpush1.msra.mxu0 %v2379
    %2414 = vmatprep.subr.mxu0 %v2383
    %2415 = vmatpush1.msra.mxu0 %v2382
    %2416 = vmatprep.subr.mxu0 %v2386
    %2417 = vmatpush1.msra.mxu0 %v2385
    %2418 = vmatprep.subr.mxu0 %v2389
    %2419 = vmatpush1.msra.mxu0 %v2388
    %2420 = vmatprep.subr.mxu0 %v2392
    %2421 = vmatpush1.msra.mxu0 %v2391
    %2422 = vmatprep.subr.mxu0 %v2395
    %2423 = vmatpush1.msra.mxu0 %v2394
    %2424 = vmatprep.subr.mxu0 0.0
    %2425 = vmatpush1.msra.mxu0 0.0
    %2426 = vmatprep.subr.mxu0 0.0
    %2427 = vmatpush1.msra.mxu0 0.0
    %2428 = vmatprep.subr.mxu0 0.0
    %2429 = vmatpush1.msra.mxu0 0.0
    %2430 = vmatprep.subr.mxu0 0.0
    %2431 = vmatpush1.msra.mxu0 0.0
    %2432 = vmatprep.subr.mxu0 0.0
    %2433 = vmatpush1.msra.mxu0 0.0
    %2434 = vmatprep.subr.mxu0 0.0
    %2435 = vmatpush1.msra.mxu0 0.0
    %2436 = vmatprep.subr.mxu0 0.0
    %2437 = vmatpush1.msra.mxu0 0.0
    %2438 = vmatprep.subr.mxu0 0.0
    %2439 = vmatpush1.msra.mxu0 0.0
    %2440 = vmatprep.subr.mxu0 0.0
    %2441 = vmatpush1.msra.mxu0 0.0
    %2442 = vmatprep.subr.mxu0 0.0
    %2443 = vmatpush1.msra.mxu0 0.0
    %2444 = vmatprep.subr.mxu0 0.0
    %2445 = vmatpush1.msra.mxu0 0.0
    %2446 = vmatprep.subr.mxu0 0.0
    %2447 = vmatpush1.msra.mxu0 0.0
    %2448 = vmatprep.subr.mxu0 0.0
    %2449 = vmatpush1.msra.mxu0 0.0
    %2450 = vmatprep.subr.mxu0 0.0
    %2451 = vmatpush1.msra.mxu0 0.0
    %2452 = vmatprep.subr.mxu0 0.0
    %2453 = vmatpush1.msra.mxu0 0.0
    %2454 = vmatprep.subr.mxu0 0.0
    %2455 = vmatpush1.msra.mxu0 0.0
    %2456 = vmatprep.subr.mxu0 0.0
    %2457 = vmatpush1.msra.mxu0 0.0
    %2458 = vmatprep.subr.mxu0 0.0
    %2459 = vmatpush1.msra.mxu0 0.0
    %2460 = vmatprep.subr.mxu0 0.0
    %2461 = vmatpush1.msra.mxu0 0.0
    %2462 = vmatprep.subr.mxu0 0.0
    %2463 = vmatpush1.msra.mxu0 0.0
    %2464 = vmatprep.mubr.f32.mxu0 0.0
    %2465 = vmatmul.mubr.f32.gmra.mrb[0].mxu0 %v420
    %v2466 = vpop.f32.mrb[0].mxu0
    %v2467 = vadd.f32 0.0, %v2466
    %v2468 = vpop.f32.mrb[0].mxu0
    %v2469 = vadd.f32 0.0, %v2468
    %2470 = vdwg.mxu0
    %2471 = vmatprep.subr.mxu0 0.0
    %2472 = vmatpush1.msra.mxu0 %v2363
    %2473 = vmatprep.subr.mxu0 0.0
    %2474 = vmatpush1.msra.mxu0 %v2366
    %2475 = vmatprep.subr.mxu0 0.0
    %2476 = vmatpush1.msra.mxu0 %v2369
    %2477 = vmatprep.subr.mxu0 0.0
    %2478 = vmatpush1.msra.mxu0 %v2372
    %2479 = vmatprep.subr.mxu0 0.0
    %2480 = vmatpush1.msra.mxu0 %v2375
    %2481 = vmatprep.subr.mxu0 0.0
    %2482 = vmatpush1.msra.mxu0 %v2378
    %2483 = vmatprep.subr.mxu0 0.0
    %2484 = vmatpush1.msra.mxu0 %v2381
    %2485 = vmatprep.subr.mxu0 0.0
    %2486 = vmatpush1.msra.mxu0 %v2384
    %2487 = vmatprep.subr.mxu0 0.0
    %2488 = vmatpush1.msra.mxu0 %v2387
    %2489 = vmatprep.subr.mxu0 0.0
    %2490 = vmatpush1.msra.mxu0 %v2390
    %2491 = vmatprep.subr.mxu0 0.0
    %2492 = vmatpush1.msra.mxu0 %v2393
    %2493 = vmatprep.subr.mxu0 0.0
    %2494 = vmatpush1.msra.mxu0 %v2396
    %2495 = vmatprep.subr.mxu0 0.0
    %2496 = vmatpush1.msra.mxu0 0.0
    %2497 = vmatprep.subr.mxu0 0.0
    %2498 = vmatpush1.msra.mxu0 0.0
    %2499 = vmatprep.subr.mxu0 0.0
    %2500 = vmatpush1.msra.mxu0 0.0
    %2501 = vmatprep.subr.mxu0 0.0
    %2502 = vmatpush1.msra.mxu0 0.0
    %2503 = vmatprep.subr.mxu0 0.0
    %2504 = vmatpush1.msra.mxu0 0.0
    %2505 = vmatprep.subr.mxu0 0.0
    %2506 = vmatpush1.msra.mxu0 0.0
    %2507 = vmatprep.subr.mxu0 0.0
    %2508 = vmatpush1.msra.mxu0 0.0
    %2509 = vmatprep.subr.mxu0 0.0
    %2510 = vmatpush1.msra.mxu0 0.0
    %2511 = vmatprep.subr.mxu0 0.0
    %2512 = vmatpush1.msra.mxu0 0.0
    %2513 = vmatprep.subr.mxu0 0.0
    %2514 = vmatpush1.msra.mxu0 0.0
    %2515 = vmatprep.subr.mxu0 0.0
    %2516 = vmatpush1.msra.mxu0 0.0
    %2517 = vmatprep.subr.mxu0 0.0
    %2518 = vmatpush1.msra.mxu0 0.0
    %2519 = vmatprep.subr.mxu0 0.0
    %2520 = vmatpush1.msra.mxu0 0.0
    %2521 = vmatprep.subr.mxu0 0.0
    %2522 = vmatpush1.msra.mxu0 0.0
    %2523 = vmatprep.subr.mxu0 0.0
    %2524 = vmatpush1.msra.mxu0 0.0
    %2525 = vmatprep.subr.mxu0 0.0
    %2526 = vmatpush1.msra.mxu0 0.0
    %2527 = vmatprep.subr.mxu0 0.0
    %2528 = vmatpush1.msra.mxu0 0.0
    %2529 = vmatprep.subr.mxu0 0.0
    %2530 = vmatpush1.msra.mxu0 0.0
    %2531 = vmatprep.subr.mxu0 0.0
    %2532 = vmatpush1.msra.mxu0 0.0
    %2533 = vmatprep.subr.mxu0 0.0
    %2534 = vmatpush1.msra.mxu0 0.0
    %2535 = vmatprep.mubr.f32.mxu0 0.0
    %2536 = vmatmul.mubr.f32.gmra.mrb[0].mxu0 %v420
    %v2537 = vpop.f32.mrb[0].mxu0
    %v2538 = vadd.f32 0.0, %v2537
    %v2539 = vpop.f32.mrb[0].mxu0
    %2540 = vdwg.mxu0
    %v2541 = vadd.f32 %v2397, %v2467
    %v2542 = vadd.f32 %v2398, %v2469
    %v2543 = vadd.f32 %v2399, %v2538
    %v2544 = vxor.u32 %v2541, 2147483648
    %v2545 = vmul.f32 %v2544, 1.442695
    %v2546 = vpow.pop %v2545
    %v2547 = vadd.f32 %v2546, 1.0
    %v2548 = vrcp.pop %v2547
    %v2549 = vmul.f32 1.0, %v2548
    %v2550 = vxor.u32 %v2542, 2147483648
    %v2551 = vmul.f32 %v2550, 1.442695
    %v2552 = vpow.pop %v2551
    %v2553 = vadd.f32 %v2552, 1.0
    %v2554 = vrcp.pop %v2553
    %v2555 = vmul.f32 1.0, %v2554
    %v2556 = vtanh.pop %v2542
    %v2557 = vtanh.pop %v2543
    %v2558 = vxor.u32 %v2543, 2147483648
    %v2559 = vmul.f32 %v2558, 1.442695
    %v2560 = vpow.pop %v2559
    %v2561 = vadd.f32 %v2560, 1.0
    %v2562 = vrcp.pop %v2561
    %v2563 = vmul.f32 1.0, %v2562
    %v2564 = vmul.f32 %v2549, 0.0
    %v2565 = vmul.f32 %v2555, 0.0
    %2568 = vrot.lane.b32.xlu0 %v2556, 64
    %v2569 = vpop.permute.xlu0 %2568
    %2570 = vrot.lane.b32.xlu0 %v2557, 64
    %v2571 = vpop.permute.xlu0 %2570
    %v2572 = vsel %vm594, %v2569, %v2571
    %v2574 = vmul.f32 %v2549, %v2572
    %2576 = vrot.lane.b32.xlu0 %v2574, 96
    %v2577 = vpop.permute.xlu0 %2576
    %v2579 = vadd.f32 %v2564, %v2577
    %v2580 = vadd.f32 %v2565, %v2577
    %v2581 = vtanh.pop %v2579
    %v2582 = vtanh.pop %v2580
    %2585 = vrot.lane.b32.xlu0 %v2581, 64
    %v2586 = vpop.permute.xlu0 %2585
    %2587 = vrot.lane.b32.xlu0 %v2582, 64
    %v2588 = vpop.permute.xlu0 %2587
    %v2589 = vsel %vm594, %v2586, %v2588
    %v2591 = vmul.f32 %v2563, %v2589
    %v2592 = vld [vmem:[#allocation3 + $0x18] sm:$0xff]
    %v2593 = vld [vmem:[#allocation3 + $0x20] sm:$0xff]
    %v2594 = vld [vmem:[#allocation3 + $0x28] sm:$0xff]
    %2596 = vrot.lane.b32.xlu0 %v2591, 96
    %v2597 = vpop.permute.xlu0 %2596
    %v2598 = vsel %vm418, %v2597, 0
    %2600 = vmatprep.subr.mxu0 %v2362
    %2601 = vmatpush1.msra.mxu0 %v2361
    %2602 = vmatprep.subr.mxu0 %v2365
    %2603 = vmatpush1.msra.mxu0 %v2364
    %2604 = vmatprep.subr.mxu0 %v2368
    %2605 = vmatpush1.msra.mxu0 %v2367
    %2606 = vmatprep.subr.mxu0 %v2371
    %2607 = vmatpush1.msra.mxu0 %v2370
    %2608 = vmatprep.subr.mxu0 %v2374
    %2609 = vmatpush1.msra.mxu0 %v2373
    %2610 = vmatprep.subr.mxu0 %v2377
    %2611 = vmatpush1.msra.mxu0 %v2376
    %2612 = vmatprep.subr.mxu0 %v2380
    %2613 = vmatpush1.msra.mxu0 %v2379
    %2614 = vmatprep.subr.mxu0 %v2383
    %2615 = vmatpush1.msra.mxu0 %v2382
    %2616 = vmatprep.subr.mxu0 %v2386
    %2617 = vmatpush1.msra.mxu0 %v2385
    %2618 = vmatprep.subr.mxu0 %v2389
    %2619 = vmatpush1.msra.mxu0 %v2388
    %2620 = vmatprep.subr.mxu0 %v2392
    %2621 = vmatpush1.msra.mxu0 %v2391
    %2622 = vmatprep.subr.mxu0 %v2395
    %2623 = vmatpush1.msra.mxu0 %v2394
    %2624 = vmatprep.subr.mxu0 0.0
    %2625 = vmatpush1.msra.mxu0 0.0
    %2626 = vmatprep.subr.mxu0 0.0
    %2627 = vmatpush1.msra.mxu0 0.0
    %2628 = vmatprep.subr.mxu0 0.0
    %2629 = vmatpush1.msra.mxu0 0.0
    %2630 = vmatprep.subr.mxu0 0.0
    %2631 = vmatpush1.msra.mxu0 0.0
    %2632 = vmatprep.subr.mxu0 0.0
    %2633 = vmatpush1.msra.mxu0 0.0
    %2634 = vmatprep.subr.mxu0 0.0
    %2635 = vmatpush1.msra.mxu0 0.0
    %2636 = vmatprep.subr.mxu0 0.0
    %2637 = vmatpush1.msra.mxu0 0.0
    %2638 = vmatprep.subr.mxu0 0.0
    %2639 = vmatpush1.msra.mxu0 0.0
    %2640 = vmatprep.subr.mxu0 0.0
    %2641 = vmatpush1.msra.mxu0 0.0
    %2642 = vmatprep.subr.mxu0 0.0
    %2643 = vmatpush1.msra.mxu0 0.0
    %2644 = vmatprep.subr.mxu0 0.0
    %2645 = vmatpush1.msra.mxu0 0.0
    %2646 = vmatprep.subr.mxu0 0.0
    %2647 = vmatpush1.msra.mxu0 0.0
    %2648 = vmatprep.subr.mxu0 0.0
    %2649 = vmatpush1.msra.mxu0 0.0
    %2650 = vmatprep.subr.mxu0 0.0
    %2651 = vmatpush1.msra.mxu0 0.0
    %2652 = vmatprep.subr.mxu0 0.0
    %2653 = vmatpush1.msra.mxu0 0.0
    %2654 = vmatprep.subr.mxu0 0.0
    %2655 = vmatpush1.msra.mxu0 0.0
    %2656 = vmatprep.subr.mxu0 0.0
    %2657 = vmatpush1.msra.mxu0 0.0
    %2658 = vmatprep.subr.mxu0 0.0
    %2659 = vmatpush1.msra.mxu0 0.0
    %2660 = vmatprep.subr.mxu0 0.0
    %2661 = vmatpush1.msra.mxu0 0.0
    %2662 = vmatprep.subr.mxu0 0.0
    %2663 = vmatpush1.msra.mxu0 0.0
    %2664 = vmatprep.mubr.f32.mxu0 0.0
    %2665 = vmatmul.mubr.f32.gmra.mrb[0].mxu0 %v2598
    %v2666 = vpop.f32.mrb[0].mxu0
    %v2667 = vadd.f32 0.0, %v2666
    %v2668 = vpop.f32.mrb[0].mxu0
    %v2669 = vadd.f32 0.0, %v2668
    %2670 = vdwg.mxu0
    %2671 = vmatprep.subr.mxu0 0.0
    %2672 = vmatpush1.msra.mxu0 %v2363
    %2673 = vmatprep.subr.mxu0 0.0
    %2674 = vmatpush1.msra.mxu0 %v2366
    %2675 = vmatprep.subr.mxu0 0.0
    %2676 = vmatpush1.msra.mxu0 %v2369
    %2677 = vmatprep.subr.mxu0 0.0
    %2678 = vmatpush1.msra.mxu0 %v2372
    %2679 = vmatprep.subr.mxu0 0.0
    %2680 = vmatpush1.msra.mxu0 %v2375
    %2681 = vmatprep.subr.mxu0 0.0
    %2682 = vmatpush1.msra.mxu0 %v2378
    %2683 = vmatprep.subr.mxu0 0.0
    %2684 = vmatpush1.msra.mxu0 %v2381
    %2685 = vmatprep.subr.mxu0 0.0
    %2686 = vmatpush1.msra.mxu0 %v2384
    %2687 = vmatprep.subr.mxu0 0.0
    %2688 = vmatpush1.msra.mxu0 %v2387
    %2689 = vmatprep.subr.mxu0 0.0
    %2690 = vmatpush1.msra.mxu0 %v2390
    %2691 = vmatprep.subr.mxu0 0.0
    %2692 = vmatpush1.msra.mxu0 %v2393
    %2693 = vmatprep.subr.mxu0 0.0
    %2694 = vmatpush1.msra.mxu0 %v2396
    %2695 = vmatprep.subr.mxu0 0.0
    %2696 = vmatpush1.msra.mxu0 0.0
    %2697 = vmatprep.subr.mxu0 0.0
    %2698 = vmatpush1.msra.mxu0 0.0
    %2699 = vmatprep.subr.mxu0 0.0
    %2700 = vmatpush1.msra.mxu0 0.0
    %2701 = vmatprep.subr.mxu0 0.0
    %2702 = vmatpush1.msra.mxu0 0.0
    %2703 = vmatprep.subr.mxu0 0.0
    %2704 = vmatpush1.msra.mxu0 0.0
    %2705 = vmatprep.subr.mxu0 0.0
    %2706 = vmatpush1.msra.mxu0 0.0
    %2707 = vmatprep.subr.mxu0 0.0
    %2708 = vmatpush1.msra.mxu0 0.0
    %2709 = vmatprep.subr.mxu0 0.0
    %2710 = vmatpush1.msra.mxu0 0.0
    %2711 = vmatprep.subr.mxu0 0.0
    %2712 = vmatpush1.msra.mxu0 0.0
    %2713 = vmatprep.subr.mxu0 0.0
    %2714 = vmatpush1.msra.mxu0 0.0
    %2715 = vmatprep.subr.mxu0 0.0
    %2716 = vmatpush1.msra.mxu0 0.0
    %2717 = vmatprep.subr.mxu0 0.0
    %2718 = vmatpush1.msra.mxu0 0.0
    %2719 = vmatprep.subr.mxu0 0.0
    %2720 = vmatpush1.msra.mxu0 0.0
    %2721 = vmatprep.subr.mxu0 0.0
    %2722 = vmatpush1.msra.mxu0 0.0
    %2723 = vmatprep.subr.mxu0 0.0
    %2724 = vmatpush1.msra.mxu0 0.0
    %2725 = vmatprep.subr.mxu0 0.0
    %2726 = vmatpush1.msra.mxu0 0.0
    %2727 = vmatprep.subr.mxu0 0.0
    %2728 = vmatpush1.msra.mxu0 0.0
    %2729 = vmatprep.subr.mxu0 0.0
    %2730 = vmatpush1.msra.mxu0 0.0
    %2731 = vmatprep.subr.mxu0 0.0
    %2732 = vmatpush1.msra.mxu0 0.0
    %2733 = vmatprep.subr.mxu0 0.0
    %2734 = vmatpush1.msra.mxu0 0.0
    %2735 = vmatprep.mubr.f32.mxu0 0.0
    %2736 = vmatmul.mubr.f32.gmra.mrb[0].mxu0 %v2598
    %v2737 = vpop.f32.mrb[0].mxu0
    %v2738 = vadd.f32 0.0, %v2737
    %v2739 = vpop.f32.mrb[0].mxu0
    %2740 = vdwg.mxu0
    %v2741 = vadd.f32 %v2592, %v2667
    %v2742 = vadd.f32 %v2593, %v2669
    %v2743 = vadd.f32 %v2594, %v2738
    %v2744 = vxor.u32 %v2741, 2147483648
    %v2745 = vmul.f32 %v2744, 1.442695
    %v2746 = vpow.pop %v2745
    %v2747 = vadd.f32 %v2746, 1.0
    %v2748 = vrcp.pop %v2747
    %v2749 = vmul.f32 1.0, %v2748
    %v2750 = vxor.u32 %v2742, 2147483648
    %v2751 = vmul.f32 %v2750, 1.442695
    %v2752 = vpow.pop %v2751
    %v2753 = vadd.f32 %v2752, 1.0
    %v2754 = vrcp.pop %v2753
    %v2755 = vmul.f32 1.0, %v2754
    %v2756 = vtanh.pop %v2742
    %v2757 = vtanh.pop %v2743
    %v2758 = vxor.u32 %v2743, 2147483648
    %v2759 = vmul.f32 %v2758, 1.442695
    %v2760 = vpow.pop %v2759
    %v2761 = vadd.f32 %v2760, 1.0
    %v2762 = vrcp.pop %v2761
    %v2763 = vmul.f32 1.0, %v2762
    %v2764 = vmul.f32 %v2749, %v2579
    %v2765 = vmul.f32 %v2755, %v2580
    %2768 = vrot.lane.b32.xlu0 %v2756, 64
    %v2769 = vpop.permute.xlu0 %2768
    %2770 = vrot.lane.b32.xlu0 %v2757, 64
    %v2771 = vpop.permute.xlu0 %2770
    %v2772 = vsel %vm594, %v2769, %v2771
    %v2774 = vmul.f32 %v2749, %v2772
    %2776 = vrot.lane.b32.xlu0 %v2774, 96
    %v2777 = vpop.permute.xlu0 %2776
    %v2779 = vadd.f32 %v2764, %v2777
    %v2780 = vadd.f32 %v2765, %v2777
    %v2781 = vtanh.pop %v2779
    %v2782 = vtanh.pop %v2780
    %2785 = vrot.lane.b32.xlu0 %v2781, 64
    %v2786 = vpop.permute.xlu0 %2785
    %2787 = vrot.lane.b32.xlu0 %v2782, 64
    %v2788 = vpop.permute.xlu0 %2787
    %v2789 = vsel %vm594, %v2786, %v2788
    %v2791 = vmul.f32 %v2763, %v2789
    %v2792 = vld [vmem:[#allocation3 + $0x30] sm:$0xff]
    %v2793 = vld [vmem:[#allocation3 + $0x38] sm:$0xff]
    %v2794 = vld [vmem:[#allocation3 + $0x40] sm:$0xff]
    %2796 = vrot.lane.b32.xlu0 %v2791, 96
    %v2797 = vpop.permute.xlu0 %2796
    %v2798 = vsel %vm418, %v2797, 0
    %2800 = vmatprep.subr.mxu0 %v2362
    %2801 = vmatpush1.msra.mxu0 %v2361
    %2802 = vmatprep.subr.mxu0 %v2365
    %2803 = vmatpush1.msra.mxu0 %v2364
    %2804 = vmatprep.subr.mxu0 %v2368
    %2805 = vmatpush1.msra.mxu0 %v2367
    %2806 = vmatprep.subr.mxu0 %v2371
    %2807 = vmatpush1.msra.mxu0 %v2370
    %2808 = vmatprep.subr.mxu0 %v2374
    %2809 = vmatpush1.msra.mxu0 %v2373
    %2810 = vmatprep.subr.mxu0 %v2377
    %2811 = vmatpush1.msra.mxu0 %v2376
    %2812 = vmatprep.subr.mxu0 %v2380
    %2813 = vmatpush1.msra.mxu0 %v2379
    %2814 = vmatprep.subr.mxu0 %v2383
    %2815 = vmatpush1.msra.mxu0 %v2382
    %2816 = vmatprep.subr.mxu0 %v2386
    %2817 = vmatpush1.msra.mxu0 %v2385
    %2818 = vmatprep.subr.mxu0 %v2389
    %2819 = vmatpush1.msra.mxu0 %v2388
    %2820 = vmatprep.subr.mxu0 %v2392
    %2821 = vmatpush1.msra.mxu0 %v2391
    %2822 = vmatprep.subr.mxu0 %v2395
    %2823 = vmatpush1.msra.mxu0 %v2394
    %2824 = vmatprep.subr.mxu0 0.0
    %2825 = vmatpush1.msra.mxu0 0.0
    %2826 = vmatprep.subr.mxu0 0.0
    %2827 = vmatpush1.msra.mxu0 0.0
    %2828 = vmatprep.subr.mxu0 0.0
    %2829 = vmatpush1.msra.mxu0 0.0
    %2830 = vmatprep.subr.mxu0 0.0
    %2831 = vmatpush1.msra.mxu0 0.0
    %2832 = vmatprep.subr.mxu0 0.0
    %2833 = vmatpush1.msra.mxu0 0.0
    %2834 = vmatprep.subr.mxu0 0.0
    %2835 = vmatpush1.msra.mxu0 0.0
    %2836 = vmatprep.subr.mxu0 0.0
    %2837 = vmatpush1.msra.mxu0 0.0
    %2838 = vmatprep.subr.mxu0 0.0
    %2839 = vmatpush1.msra.mxu0 0.0
    %2840 = vmatprep.subr.mxu0 0.0
    %2841 = vmatpush1.msra.mxu0 0.0
    %2842 = vmatprep.subr.mxu0 0.0
    %2843 = vmatpush1.msra.mxu0 0.0
    %2844 = vmatprep.subr.mxu0 0.0
    %2845 = vmatpush1.msra.mxu0 0.0
    %2846 = vmatprep.subr.mxu0 0.0
    %2847 = vmatpush1.msra.mxu0 0.0
    %2848 = vmatprep.subr.mxu0 0.0
    %2849 = vmatpush1.msra.mxu0 0.0
    %2850 = vmatprep.subr.mxu0 0.0
    %2851 = vmatpush1.msra.mxu0 0.0
    %2852 = vmatprep.subr.mxu0 0.0
    %2853 = vmatpush1.msra.mxu0 0.0
    %2854 = vmatprep.subr.mxu0 0.0
    %2855 = vmatpush1.msra.mxu0 0.0
    %2856 = vmatprep.subr.mxu0 0.0
    %2857 = vmatpush1.msra.mxu0 0.0
    %2858 = vmatprep.subr.mxu0 0.0
    %2859 = vmatpush1.msra.mxu0 0.0
    %2860 = vmatprep.subr.mxu0 0.0
    %2861 = vmatpush1.msra.mxu0 0.0
    %2862 = vmatprep.subr.mxu0 0.0
    %2863 = vmatpush1.msra.mxu0 0.0
    %2864 = vmatprep.mubr.f32.mxu0 0.0
    %2865 = vmatmul.mubr.f32.gmra.mrb[0].mxu0 %v2798
    %v2866 = vpop.f32.mrb[0].mxu0
    %v2867 = vadd.f32 0.0, %v2866
    %v2868 = vpop.f32.mrb[0].mxu0
    %v2869 = vadd.f32 0.0, %v2868
    %2870 = vdwg.mxu0
    %2871 = vmatprep.subr.mxu0 0.0
    %2872 = vmatpush1.msra.mxu0 %v2363
    %2873 = vmatprep.subr.mxu0 0.0
    %2874 = vmatpush1.msra.mxu0 %v2366
    %2875 = vmatprep.subr.mxu0 0.0
    %2876 = vmatpush1.msra.mxu0 %v2369
    %2877 = vmatprep.subr.mxu0 0.0
    %2878 = vmatpush1.msra.mxu0 %v2372
    %2879 = vmatprep.subr.mxu0 0.0
    %2880 = vmatpush1.msra.mxu0 %v2375
    %2881 = vmatprep.subr.mxu0 0.0
    %2882 = vmatpush1.msra.mxu0 %v2378
    %2883 = vmatprep.subr.mxu0 0.0
    %2884 = vmatpush1.msra.mxu0 %v2381
    %2885 = vmatprep.subr.mxu0 0.0
    %2886 = vmatpush1.msra.mxu0 %v2384
    %2887 = vmatprep.subr.mxu0 0.0
    %2888 = vmatpush1.msra.mxu0 %v2387
    %2889 = vmatprep.subr.mxu0 0.0
    %2890 = vmatpush1.msra.mxu0 %v2390
    %2891 = vmatprep.subr.mxu0 0.0
    %2892 = vmatpush1.msra.mxu0 %v2393
    %2893 = vmatprep.subr.mxu0 0.0
    %2894 = vmatpush1.msra.mxu0 %v2396
    %2895 = vmatprep.subr.mxu0 0.0
    %2896 = vmatpush1.msra.mxu0 0.0
    %2897 = vmatprep.subr.mxu0 0.0
    %2898 = vmatpush1.msra.mxu0 0.0
    %2899 = vmatprep.subr.mxu0 0.0
    %2900 = vmatpush1.msra.mxu0 0.0
    %2901 = vmatprep.subr.mxu0 0.0
    %2902 = vmatpush1.msra.mxu0 0.0
    %2903 = vmatprep.subr.mxu0 0.0
    %2904 = vmatpush1.msra.mxu0 0.0
    %2905 = vmatprep.subr.mxu0 0.0
    %2906 = vmatpush1.msra.mxu0 0.0
    %2907 = vmatprep.subr.mxu0 0.0
    %2908 = vmatpush1.msra.mxu0 0.0
    %2909 = vmatprep.subr.mxu0 0.0
    %2910 = vmatpush1.msra.mxu0 0.0
    %2911 = vmatprep.subr.mxu0 0.0
    %2912 = vmatpush1.msra.mxu0 0.0
    %2913 = vmatprep.subr.mxu0 0.0
    %2914 = vmatpush1.msra.mxu0 0.0
    %2915 = vmatprep.subr.mxu0 0.0
    %2916 = vmatpush1.msra.mxu0 0.0
    %2917 = vmatprep.subr.mxu0 0.0
    %2918 = vmatpush1.msra.mxu0 0.0
    %2919 = vmatprep.subr.mxu0 0.0
    %2920 = vmatpush1.msra.mxu0 0.0
    %2921 = vmatprep.subr.mxu0 0.0
    %2922 = vmatpush1.msra.mxu0 0.0
    %2923 = vmatprep.subr.mxu0 0.0
    %2924 = vmatpush1.msra.mxu0 0.0
    %2925 = vmatprep.subr.mxu0 0.0
    %2926 = vmatpush1.msra.mxu0 0.0
    %2927 = vmatprep.subr.mxu0 0.0
    %2928 = vmatpush1.msra.mxu0 0.0
    %2929 = vmatprep.subr.mxu0 0.0
    %2930 = vmatpush1.msra.mxu0 0.0
    %2931 = vmatprep.subr.mxu0 0.0
    %2932 = vmatpush1.msra.mxu0 0.0
    %2933 = vmatprep.subr.mxu0 0.0
    %2934 = vmatpush1.msra.mxu0 0.0
    %2935 = vmatprep.mubr.f32.mxu0 0.0
    %2936 = vmatmul.mubr.f32.gmra.mrb[0].mxu0 %v2798
    %v2937 = vpop.f32.mrb[0].mxu0
    %v2938 = vadd.f32 0.0, %v2937
    %v2939 = vpop.f32.mrb[0].mxu0
    %2940 = vdwg.mxu0
    %v2941 = vadd.f32 %v2792, %v2867
    %v2942 = vadd.f32 %v2793, %v2869
    %v2943 = vadd.f32 %v2794, %v2938
    %v2944 = vxor.u32 %v2941, 2147483648
    %v2945 = vmul.f32 %v2944, 1.442695
    %v2946 = vpow.pop %v2945
    %v2947 = vadd.f32 %v2946, 1.0
    %v2948 = vrcp.pop %v2947
    %v2949 = vmul.f32 1.0, %v2948
    %v2950 = vxor.u32 %v2942, 2147483648
    %v2951 = vmul.f32 %v2950, 1.442695
    %v2952 = vpow.pop %v2951
    %v2953 = vadd.f32 %v2952, 1.0
    %v2954 = vrcp.pop %v2953
    %v2955 = vmul.f32 1.0, %v2954
    %v2956 = vtanh.pop %v2942
    %v2957 = vtanh.pop %v2943
    %v2958 = vxor.u32 %v2943, 2147483648
    %v2959 = vmul.f32 %v2958, 1.442695
    %v2960 = vpow.pop %v2959
    %v2961 = vadd.f32 %v2960, 1.0
    %v2962 = vrcp.pop %v2961
    %v2963 = vmul.f32 1.0, %v2962
    %v2964 = vmul.f32 %v2949, %v2779
    %v2965 = vmul.f32 %v2955, %v2780
    %2968 = vrot.lane.b32.xlu0 %v2956, 64
    %v2969 = vpop.permute.xlu0 %2968
    %2970 = vrot.lane.b32.xlu0 %v2957, 64
    %v2971 = vpop.permute.xlu0 %2970
    %v2972 = vsel %vm594, %v2969, %v2971
    %v2974 = vmul.f32 %v2949, %v2972
    %2976 = vrot.lane.b32.xlu0 %v2974, 96
    %v2977 = vpop.permute.xlu0 %2976
    %v2979 = vadd.f32 %v2964, %v2977
    %v2980 = vadd.f32 %v2965, %v2977
    %v2981 = vtanh.pop %v2979
    %v2982 = vtanh.pop %v2980
    %2985 = vrot.lane.b32.xlu0 %v2981, 64
    %v2986 = vpop.permute.xlu0 %2985
    %2987 = vrot.lane.b32.xlu0 %v2982, 64
    %v2988 = vpop.permute.xlu0 %2987
    %v2989 = vsel %vm594, %v2986, %v2988
    %v2991 = vmul.f32 %v2963, %v2989
    %v2992 = vld [vmem:[#allocation3 + $0x48] sm:$0xff]
    %v2993 = vld [vmem:[#allocation3 + $0x50] sm:$0xff]
    %v2994 = vld [vmem:[#allocation3 + $0x58] sm:$0xff]
    %2996 = vrot.lane.b32.xlu0 %v2991, 96
    %v2997 = vpop.permute.xlu0 %2996
    %v2998 = vsel %vm418, %v2997, 0
    %3000 = vmatprep.subr.mxu0 %v2362
    %3001 = vmatpush1.msra.mxu0 %v2361
    %3002 = vmatprep.subr.mxu0 %v2365
    %3003 = vmatpush1.msra.mxu0 %v2364
    %3004 = vmatprep.subr.mxu0 %v2368
    %3005 = vmatpush1.msra.mxu0 %v2367
    %3006 = vmatprep.subr.mxu0 %v2371
    %3007 = vmatpush1.msra.mxu0 %v2370
    %3008 = vmatprep.subr.mxu0 %v2374
    %3009 = vmatpush1.msra.mxu0 %v2373
    %3010 = vmatprep.subr.mxu0 %v2377
    %3011 = vmatpush1.msra.mxu0 %v2376
    %3012 = vmatprep.subr.mxu0 %v2380
    %3013 = vmatpush1.msra.mxu0 %v2379
    %3014 = vmatprep.subr.mxu0 %v2383
    %3015 = vmatpush1.msra.mxu0 %v2382
    %3016 = vmatprep.subr.mxu0 %v2386
    %3017 = vmatpush1.msra.mxu0 %v2385
    %3018 = vmatprep.subr.mxu0 %v2389
    %3019 = vmatpush1.msra.mxu0 %v2388
    %3020 = vmatprep.subr.mxu0 %v2392
    %3021 = vmatpush1.msra.mxu0 %v2391
    %3022 = vmatprep.subr.mxu0 %v2395
    %3023 = vmatpush1.msra.mxu0 %v2394
    %3024 = vmatprep.subr.mxu0 0.0
    %3025 = vmatpush1.msra.mxu0 0.0
    %3026 = vmatprep.subr.mxu0 0.0
    %3027 = vmatpush1.msra.mxu0 0.0
    %3028 = vmatprep.subr.mxu0 0.0
    %3029 = vmatpush1.msra.mxu0 0.0
    %3030 = vmatprep.subr.mxu0 0.0
    %3031 = vmatpush1.msra.mxu0 0.0
    %3032 = vmatprep.subr.mxu0 0.0
    %3033 = vmatpush1.msra.mxu0 0.0
    %3034 = vmatprep.subr.mxu0 0.0
    %3035 = vmatpush1.msra.mxu0 0.0
    %3036 = vmatprep.subr.mxu0 0.0
    %3037 = vmatpush1.msra.mxu0 0.0
    %3038 = vmatprep.subr.mxu0 0.0
    %3039 = vmatpush1.msra.mxu0 0.0
    %3040 = vmatprep.subr.mxu0 0.0
    %3041 = vmatpush1.msra.mxu0 0.0
    %3042 = vmatprep.subr.mxu0 0.0
    %3043 = vmatpush1.msra.mxu0 0.0
    %3044 = vmatprep.subr.mxu0 0.0
    %3045 = vmatpush1.msra.mxu0 0.0
    %3046 = vmatprep.subr.mxu0 0.0
    %3047 = vmatpush1.msra.mxu0 0.0
    %3048 = vmatprep.subr.mxu0 0.0
    %3049 = vmatpush1.msra.mxu0 0.0
    %3050 = vmatprep.subr.mxu0 0.0
    %3051 = vmatpush1.msra.mxu0 0.0
    %3052 = vmatprep.subr.mxu0 0.0
    %3053 = vmatpush1.msra.mxu0 0.0
    %3054 = vmatprep.subr.mxu0 0.0
    %3055 = vmatpush1.msra.mxu0 0.0
    %3056 = vmatprep.subr.mxu0 0.0
    %3057 = vmatpush1.msra.mxu0 0.0
    %3058 = vmatprep.subr.mxu0 0.0
    %3059 = vmatpush1.msra.mxu0 0.0
    %3060 = vmatprep.subr.mxu0 0.0
    %3061 = vmatpush1.msra.mxu0 0.0
    %3062 = vmatprep.subr.mxu0 0.0
    %3063 = vmatpush1.msra.mxu0 0.0
    %3064 = vmatprep.mubr.f32.mxu0 0.0
    %3065 = vmatmul.mubr.f32.gmra.mrb[0].mxu0 %v2998
    %v3066 = vpop.f32.mrb[0].mxu0
    %v3067 = vadd.f32 0.0, %v3066
    %v3068 = vpop.f32.mrb[0].mxu0
    %v3069 = vadd.f32 0.0, %v3068
    %3070 = vdwg.mxu0
    %3071 = vmatprep.subr.mxu0 0.0
    %3072 = vmatpush1.msra.mxu0 %v2363
    %3073 = vmatprep.subr.mxu0 0.0
    %3074 = vmatpush1.msra.mxu0 %v2366
    %3075 = vmatprep.subr.mxu0 0.0
    %3076 = vmatpush1.msra.mxu0 %v2369
    %3077 = vmatprep.subr.mxu0 0.0
    %3078 = vmatpush1.msra.mxu0 %v2372
    %3079 = vmatprep.subr.mxu0 0.0
    %3080 = vmatpush1.msra.mxu0 %v2375
    %3081 = vmatprep.subr.mxu0 0.0
    %3082 = vmatpush1.msra.mxu0 %v2378
    %3083 = vmatprep.subr.mxu0 0.0
    %3084 = vmatpush1.msra.mxu0 %v2381
    %3085 = vmatprep.subr.mxu0 0.0
    %3086 = vmatpush1.msra.mxu0 %v2384
    %3087 = vmatprep.subr.mxu0 0.0
    %3088 = vmatpush1.msra.mxu0 %v2387
    %3089 = vmatprep.subr.mxu0 0.0
    %3090 = vmatpush1.msra.mxu0 %v2390
    %3091 = vmatprep.subr.mxu0 0.0
    %3092 = vmatpush1.msra.mxu0 %v2393
    %3093 = vmatprep.subr.mxu0 0.0
    %3094 = vmatpush1.msra.mxu0 %v2396
    %3095 = vmatprep.subr.mxu0 0.0
    %3096 = vmatpush1.msra.mxu0 0.0
    %3097 = vmatprep.subr.mxu0 0.0
    %3098 = vmatpush1.msra.mxu0 0.0
    %3099 = vmatprep.subr.mxu0 0.0
    %3100 = vmatpush1.msra.mxu0 0.0
    %3101 = vmatprep.subr.mxu0 0.0
    %3102 = vmatpush1.msra.mxu0 0.0
    %3103 = vmatprep.subr.mxu0 0.0
    %3104 = vmatpush1.msra.mxu0 0.0
    %3105 = vmatprep.subr.mxu0 0.0
    %3106 = vmatpush1.msra.mxu0 0.0
    %3107 = vmatprep.subr.mxu0 0.0
    %3108 = vmatpush1.msra.mxu0 0.0
    %3109 = vmatprep.subr.mxu0 0.0
    %3110 = vmatpush1.msra.mxu0 0.0
    %3111 = vmatprep.subr.mxu0 0.0
    %3112 = vmatpush1.msra.mxu0 0.0
    %3113 = vmatprep.subr.mxu0 0.0
    %3114 = vmatpush1.msra.mxu0 0.0
    %3115 = vmatprep.subr.mxu0 0.0
    %3116 = vmatpush1.msra.mxu0 0.0
    %3117 = vmatprep.subr.mxu0 0.0
    %3118 = vmatpush1.msra.mxu0 0.0
    %3119 = vmatprep.subr.mxu0 0.0
    %3120 = vmatpush1.msra.mxu0 0.0
    %3121 = vmatprep.subr.mxu0 0.0
    %3122 = vmatpush1.msra.mxu0 0.0
    %3123 = vmatprep.subr.mxu0 0.0
    %3124 = vmatpush1.msra.mxu0 0.0
    %3125 = vmatprep.subr.mxu0 0.0
    %3126 = vmatpush1.msra.mxu0 0.0
    %3127 = vmatprep.subr.mxu0 0.0
    %3128 = vmatpush1.msra.mxu0 0.0
    %3129 = vmatprep.subr.mxu0 0.0
    %3130 = vmatpush1.msra.mxu0 0.0
    %3131 = vmatprep.subr.mxu0 0.0
    %3132 = vmatpush1.msra.mxu0 0.0
    %3133 = vmatprep.subr.mxu0 0.0
    %3134 = vmatpush1.msra.mxu0 0.0
    %3135 = vmatprep.mubr.f32.mxu0 0.0
    %3136 = vmatmul.mubr.f32.gmra.mrb[0].mxu0 %v2998
    %v3137 = vpop.f32.mrb[0].mxu0
    %v3138 = vadd.f32 0.0, %v3137
    %v3139 = vpop.f32.mrb[0].mxu0
    %3140 = vdwg.mxu0
    %v3141 = vadd.f32 %v2992, %v3067
    %v3142 = vadd.f32 %v2993, %v3069
    %v3143 = vadd.f32 %v2994, %v3138
    %v3144 = vxor.u32 %v3141, 2147483648
    %v3145 = vmul.f32 %v3144, 1.442695
    %v3146 = vpow.pop %v3145
    %v3147 = vadd.f32 %v3146, 1.0
    %v3148 = vrcp.pop %v3147
    %v3149 = vmul.f32 1.0, %v3148
    %v3150 = vxor.u32 %v3142, 2147483648
    %v3151 = vmul.f32 %v3150, 1.442695
    %v3152 = vpow.pop %v3151
    %v3153 = vadd.f32 %v3152, 1.0
    %v3154 = vrcp.pop %v3153
    %v3155 = vmul.f32 1.0, %v3154
    %v3156 = vtanh.pop %v3142
    %v3157 = vtanh.pop %v3143
    %v3158 = vxor.u32 %v3143, 2147483648
    %v3159 = vmul.f32 %v3158, 1.442695
    %v3160 = vpow.pop %v3159
    %v3161 = vadd.f32 %v3160, 1.0
    %v3162 = vrcp.pop %v3161
    %v3163 = vmul.f32 1.0, %v3162
    %v3164 = vmul.f32 %v3149, %v2979
    %v3165 = vmul.f32 %v3155, %v2980
    %3168 = vrot.lane.b32.xlu0 %v3156, 64
    %v3169 = vpop.permute.xlu0 %3168
    %3170 = vrot.lane.b32.xlu0 %v3157, 64
    %v3171 = vpop.permute.xlu0 %3170
    %v3172 = vsel %vm594, %v3169, %v3171
    %v3174 = vmul.f32 %v3149, %v3172
    %3176 = vrot.lane.b32.xlu0 %v3174, 96
    %v3177 = vpop.permute.xlu0 %3176
    %v3179 = vadd.f32 %v3164, %v3177
    %v3180 = vadd.f32 %v3165, %v3177
    %v3181 = vtanh.pop %v3179
    %v3182 = vtanh.pop %v3180
    %3185 = vrot.lane.b32.xlu0 %v3181, 64
    %v3186 = vpop.permute.xlu0 %3185
    %3187 = vrot.lane.b32.xlu0 %v3182, 64
    %v3188 = vpop.permute.xlu0 %3187
    %v3189 = vsel %vm594, %v3186, %v3188
    %v3191 = vmul.f32 %v3163, %v3189
    %v3192 = vld [vmem:[#allocation3 + $0x60] sm:$0xff]
    %v3193 = vld [vmem:[#allocation3 + $0x68] sm:$0xff]
    %v3194 = vld [vmem:[#allocation3 + $0x70] sm:$0xff]
    %3196 = vrot.lane.b32.xlu0 %v3191, 96
    %v3197 = vpop.permute.xlu0 %3196
    %v3198 = vsel %vm418, %v3197, 0
    %3200 = vmatprep.subr.mxu0 %v2362
    %3201 = vmatpush1.msra.mxu0 %v2361
    %3202 = vmatprep.subr.mxu0 %v2365
    %3203 = vmatpush1.msra.mxu0 %v2364
    %3204 = vmatprep.subr.mxu0 %v2368
    %3205 = vmatpush1.msra.mxu0 %v2367
    %3206 = vmatprep.subr.mxu0 %v2371
    %3207 = vmatpush1.msra.mxu0 %v2370
    %3208 = vmatprep.subr.mxu0 %v2374
    %3209 = vmatpush1.msra.mxu0 %v2373
    %3210 = vmatprep.subr.mxu0 %v2377
    %3211 = vmatpush1.msra.mxu0 %v2376
    %3212 = vmatprep.subr.mxu0 %v2380
    %3213 = vmatpush1.msra.mxu0 %v2379
    %3214 = vmatprep.subr.mxu0 %v2383
    %3215 = vmatpush1.msra.mxu0 %v2382
    %3216 = vmatprep.subr.mxu0 %v2386
    %3217 = vmatpush1.msra.mxu0 %v2385
    %3218 = vmatprep.subr.mxu0 %v2389
    %3219 = vmatpush1.msra.mxu0 %v2388
    %3220 = vmatprep.subr.mxu0 %v2392
    %3221 = vmatpush1.msra.mxu0 %v2391
    %3222 = vmatprep.subr.mxu0 %v2395
    %3223 = vmatpush1.msra.mxu0 %v2394
    %3224 = vmatprep.subr.mxu0 0.0
    %3225 = vmatpush1.msra.mxu0 0.0
    %3226 = vmatprep.subr.mxu0 0.0
    %3227 = vmatpush1.msra.mxu0 0.0
    %3228 = vmatprep.subr.mxu0 0.0
    %3229 = vmatpush1.msra.mxu0 0.0
    %3230 = vmatprep.subr.mxu0 0.0
    %3231 = vmatpush1.msra.mxu0 0.0
    %3232 = vmatprep.subr.mxu0 0.0
    %3233 = vmatpush1.msra.mxu0 0.0
    %3234 = vmatprep.subr.mxu0 0.0
    %3235 = vmatpush1.msra.mxu0 0.0
    %3236 = vmatprep.subr.mxu0 0.0
    %3237 = vmatpush1.msra.mxu0 0.0
    %3238 = vmatprep.subr.mxu0 0.0
    %3239 = vmatpush1.msra.mxu0 0.0
    %3240 = vmatprep.subr.mxu0 0.0
    %3241 = vmatpush1.msra.mxu0 0.0
    %3242 = vmatprep.subr.mxu0 0.0
    %3243 = vmatpush1.msra.mxu0 0.0
    %3244 = vmatprep.subr.mxu0 0.0
    %3245 = vmatpush1.msra.mxu0 0.0
    %3246 = vmatprep.subr.mxu0 0.0
    %3247 = vmatpush1.msra.mxu0 0.0
    %3248 = vmatprep.subr.mxu0 0.0
    %3249 = vmatpush1.msra.mxu0 0.0
    %3250 = vmatprep.subr.mxu0 0.0
    %3251 = vmatpush1.msra.mxu0 0.0
    %3252 = vmatprep.subr.mxu0 0.0
    %3253 = vmatpush1.msra.mxu0 0.0
    %3254 = vmatprep.subr.mxu0 0.0
    %3255 = vmatpush1.msra.mxu0 0.0
    %3256 = vmatprep.subr.mxu0 0.0
    %3257 = vmatpush1.msra.mxu0 0.0
    %3258 = vmatprep.subr.mxu0 0.0
    %3259 = vmatpush1.msra.mxu0 0.0
    %3260 = vmatprep.subr.mxu0 0.0
    %3261 = vmatpush1.msra.mxu0 0.0
    %3262 = vmatprep.subr.mxu0 0.0
    %3263 = vmatpush1.msra.mxu0 0.0
    %3264 = vmatprep.mubr.f32.mxu0 0.0
    %3265 = vmatmul.mubr.f32.gmra.mrb[0].mxu0 %v3198
    %v3266 = vpop.f32.mrb[0].mxu0
    %v3267 = vadd.f32 0.0, %v3266
    %v3268 = vpop.f32.mrb[0].mxu0
    %v3269 = vadd.f32 0.0, %v3268
    %3270 = vdwg.mxu0
    %3271 = vmatprep.subr.mxu0 0.0
    %3272 = vmatpush1.msra.mxu0 %v2363
    %3273 = vmatprep.subr.mxu0 0.0
    %3274 = vmatpush1.msra.mxu0 %v2366
    %3275 = vmatprep.subr.mxu0 0.0
    %3276 = vmatpush1.msra.mxu0 %v2369
    %3277 = vmatprep.subr.mxu0 0.0
    %3278 = vmatpush1.msra.mxu0 %v2372
    %3279 = vmatprep.subr.mxu0 0.0
    %3280 = vmatpush1.msra.mxu0 %v2375
    %3281 = vmatprep.subr.mxu0 0.0
    %3282 = vmatpush1.msra.mxu0 %v2378
    %3283 = vmatprep.subr.mxu0 0.0
    %3284 = vmatpush1.msra.mxu0 %v2381
    %3285 = vmatprep.subr.mxu0 0.0
    %3286 = vmatpush1.msra.mxu0 %v2384
    %3287 = vmatprep.subr.mxu0 0.0
    %3288 = vmatpush1.msra.mxu0 %v2387
    %3289 = vmatprep.subr.mxu0 0.0
    %3290 = vmatpush1.msra.mxu0 %v2390
    %3291 = vmatprep.subr.mxu0 0.0
    %3292 = vmatpush1.msra.mxu0 %v2393
    %3293 = vmatprep.subr.mxu0 0.0
    %3294 = vmatpush1.msra.mxu0 %v2396
    %3295 = vmatprep.subr.mxu0 0.0
    %3296 = vmatpush1.msra.mxu0 0.0
    %3297 = vmatprep.subr.mxu0 0.0
    %3298 = vmatpush1.msra.mxu0 0.0
    %3299 = vmatprep.subr.mxu0 0.0
    %3300 = vmatpush1.msra.mxu0 0.0
    %3301 = vmatprep.subr.mxu0 0.0
    %3302 = vmatpush1.msra.mxu0 0.0
    %3303 = vmatprep.subr.mxu0 0.0
    %3304 = vmatpush1.msra.mxu0 0.0
    %3305 = vmatprep.subr.mxu0 0.0
    %3306 = vmatpush1.msra.mxu0 0.0
    %3307 = vmatprep.subr.mxu0 0.0
    %3308 = vmatpush1.msra.mxu0 0.0
    %3309 = vmatprep.subr.mxu0 0.0
    %3310 = vmatpush1.msra.mxu0 0.0
    %3311 = vmatprep.subr.mxu0 0.0
    %3312 = vmatpush1.msra.mxu0 0.0
    %3313 = vmatprep.subr.mxu0 0.0
    %3314 = vmatpush1.msra.mxu0 0.0
    %3315 = vmatprep.subr.mxu0 0.0
    %3316 = vmatpush1.msra.mxu0 0.0
    %3317 = vmatprep.subr.mxu0 0.0
    %3318 = vmatpush1.msra.mxu0 0.0
    %3319 = vmatprep.subr.mxu0 0.0
    %3320 = vmatpush1.msra.mxu0 0.0
    %3321 = vmatprep.subr.mxu0 0.0
    %3322 = vmatpush1.msra.mxu0 0.0
    %3323 = vmatprep.subr.mxu0 0.0
    %3324 = vmatpush1.msra.mxu0 0.0
    %3325 = vmatprep.subr.mxu0 0.0
    %3326 = vmatpush1.msra.mxu0 0.0
    %3327 = vmatprep.subr.mxu0 0.0
    %3328 = vmatpush1.msra.mxu0 0.0
    %3329 = vmatprep.subr.mxu0 0.0
    %3330 = vmatpush1.msra.mxu0 0.0
    %3331 = vmatprep.subr.mxu0 0.0
    %3332 = vmatpush1.msra.mxu0 0.0
    %3333 = vmatprep.subr.mxu0 0.0
    %3334 = vmatpush1.msra.mxu0 0.0
    %3335 = vmatprep.mubr.f32.mxu0 0.0
    %3336 = vmatmul.mubr.f32.gmra.mrb[0].mxu0 %v3198
    %v3337 = vpop.f32.mrb[0].mxu0
    %v3338 = vadd.f32 0.0, %v3337
    %v3339 = vpop.f32.mrb[0].mxu0
    %3340 = vdwg.mxu0
    %v3341 = vadd.f32 %v3192, %v3267
    %v3342 = vadd.f32 %v3193, %v3269
    %v3343 = vadd.f32 %v3194, %v3338
    %v3344 = vxor.u32 %v3341, 2147483648
    %v3345 = vmul.f32 %v3344, 1.442695
    %v3346 = vpow.pop %v3345
    %v3347 = vadd.f32 %v3346, 1.0
    %v3348 = vrcp.pop %v3347
    %v3349 = vmul.f32 1.0, %v3348
    %v3350 = vxor.u32 %v3342, 2147483648
    %v3351 = vmul.f32 %v3350, 1.442695
    %v3352 = vpow.pop %v3351
    %v3353 = vadd.f32 %v3352, 1.0
    %v3354 = vrcp.pop %v3353
    %v3355 = vmul.f32 1.0, %v3354
    %v3356 = vtanh.pop %v3342
    %v3357 = vtanh.pop %v3343
    %v3358 = vxor.u32 %v3343, 2147483648
    %v3359 = vmul.f32 %v3358, 1.442695
    %v3360 = vpow.pop %v3359
    %v3361 = vadd.f32 %v3360, 1.0
    %v3362 = vrcp.pop %v3361
    %v3363 = vmul.f32 1.0, %v3362
    %v3364 = vmul.f32 %v3349, %v3179
    %v3365 = vmul.f32 %v3355, %v3180
    %3368 = vrot.lane.b32.xlu0 %v3356, 64
    %v3369 = vpop.permute.xlu0 %3368
    %3370 = vrot.lane.b32.xlu0 %v3357, 64
    %v3371 = vpop.permute.xlu0 %3370
    %v3372 = vsel %vm594, %v3369, %v3371
    %v3374 = vmul.f32 %v3349, %v3372
    %3376 = vrot.lane.b32.xlu0 %v3374, 96
    %v3377 = vpop.permute.xlu0 %3376
    %v3379 = vadd.f32 %v3364, %v3377
    %v3380 = vadd.f32 %v3365, %v3377
    %v3381 = vtanh.pop %v3379
    %v3382 = vtanh.pop %v3380
    %3385 = vrot.lane.b32.xlu0 %v3381, 64
    %v3386 = vpop.permute.xlu0 %3385
    %3387 = vrot.lane.b32.xlu0 %v3382, 64
    %v3388 = vpop.permute.xlu0 %3387
    %v3389 = vsel %vm594, %v3386, %v3388
    %v3391 = vmul.f32 %v3363, %v3389
    %v3392 = vld [vmem:[#allocation3 + $0x78] sm:$0xff]
    %v3393 = vld [vmem:[#allocation3 + $0x80] sm:$0xff]
    %v3394 = vld [vmem:[#allocation3 + $0x88] sm:$0xff]
    %3396 = vrot.lane.b32.xlu0 %v3391, 96
    %v3397 = vpop.permute.xlu0 %3396
    %v3398 = vsel %vm418, %v3397, 0
    %3400 = vmatprep.subr.mxu0 %v2362
    %3401 = vmatpush1.msra.mxu0 %v2361
    %3402 = vmatprep.subr.mxu0 %v2365
    %3403 = vmatpush1.msra.mxu0 %v2364
    %3404 = vmatprep.subr.mxu0 %v2368
    %3405 = vmatpush1.msra.mxu0 %v2367
    %3406 = vmatprep.subr.mxu0 %v2371
    %3407 = vmatpush1.msra.mxu0 %v2370
    %3408 = vmatprep.subr.mxu0 %v2374
    %3409 = vmatpush1.msra.mxu0 %v2373
    %3410 = vmatprep.subr.mxu0 %v2377
    %3411 = vmatpush1.msra.mxu0 %v2376
    %3412 = vmatprep.subr.mxu0 %v2380
    %3413 = vmatpush1.msra.mxu0 %v2379
    %3414 = vmatprep.subr.mxu0 %v2383
    %3415 = vmatpush1.msra.mxu0 %v2382
    %3416 = vmatprep.subr.mxu0 %v2386
    %3417 = vmatpush1.msra.mxu0 %v2385
    %3418 = vmatprep.subr.mxu0 %v2389
    %3419 = vmatpush1.msra.mxu0 %v2388
    %3420 = vmatprep.subr.mxu0 %v2392
    %3421 = vmatpush1.msra.mxu0 %v2391
    %3422 = vmatprep.subr.mxu0 %v2395
    %3423 = vmatpush1.msra.mxu0 %v2394
    %3424 = vmatprep.subr.mxu0 0.0
    %3425 = vmatpush1.msra.mxu0 0.0
    %3426 = vmatprep.subr.mxu0 0.0
    %3427 = vmatpush1.msra.mxu0 0.0
    %3428 = vmatprep.subr.mxu0 0.0
    %3429 = vmatpush1.msra.mxu0 0.0
    %3430 = vmatprep.subr.mxu0 0.0
    %3431 = vmatpush1.msra.mxu0 0.0
    %3432 = vmatprep.subr.mxu0 0.0
    %3433 = vmatpush1.msra.mxu0 0.0
    %3434 = vmatprep.subr.mxu0 0.0
    %3435 = vmatpush1.msra.mxu0 0.0
    %3436 = vmatprep.subr.mxu0 0.0
    %3437 = vmatpush1.msra.mxu0 0.0
    %3438 = vmatprep.subr.mxu0 0.0
    %3439 = vmatpush1.msra.mxu0 0.0
    %3440 = vmatprep.subr.mxu0 0.0
    %3441 = vmatpush1.msra.mxu0 0.0
    %3442 = vmatprep.subr.mxu0 0.0
    %3443 = vmatpush1.msra.mxu0 0.0
    %3444 = vmatprep.subr.mxu0 0.0
    %3445 = vmatpush1.msra.mxu0 0.0
    %3446 = vmatprep.subr.mxu0 0.0
    %3447 = vmatpush1.msra.mxu0 0.0
    %3448 = vmatprep.subr.mxu0 0.0
    %3449 = vmatpush1.msra.mxu0 0.0
    %3450 = vmatprep.subr.mxu0 0.0
    %3451 = vmatpush1.msra.mxu0 0.0
    %3452 = vmatprep.subr.mxu0 0.0
    %3453 = vmatpush1.msra.mxu0 0.0
    %3454 = vmatprep.subr.mxu0 0.0
    %3455 = vmatpush1.msra.mxu0 0.0
    %3456 = vmatprep.subr.mxu0 0.0
    %3457 = vmatpush1.msra.mxu0 0.0
    %3458 = vmatprep.subr.mxu0 0.0
    %3459 = vmatpush1.msra.mxu0 0.0
    %3460 = vmatprep.subr.mxu0 0.0
    %3461 = vmatpush1.msra.mxu0 0.0
    %3462 = vmatprep.subr.mxu0 0.0
    %3463 = vmatpush1.msra.mxu0 0.0
    %3464 = vmatprep.mubr.f32.mxu0 0.0
    %3465 = vmatmul.mubr.f32.gmra.mrb[0].mxu0 %v3398
    %v3466 = vpop.f32.mrb[0].mxu0
    %v3467 = vadd.f32 0.0, %v3466
    %v3468 = vpop.f32.mrb[0].mxu0
    %v3469 = vadd.f32 0.0, %v3468
    %3470 = vdwg.mxu0
    %3471 = vmatprep.subr.mxu0 0.0
    %3472 = vmatpush1.msra.mxu0 %v2363
    %3473 = vmatprep.subr.mxu0 0.0
    %3474 = vmatpush1.msra.mxu0 %v2366
    %3475 = vmatprep.subr.mxu0 0.0
    %3476 = vmatpush1.msra.mxu0 %v2369
    %3477 = vmatprep.subr.mxu0 0.0
    %3478 = vmatpush1.msra.mxu0 %v2372
    %3479 = vmatprep.subr.mxu0 0.0
    %3480 = vmatpush1.msra.mxu0 %v2375
    %3481 = vmatprep.subr.mxu0 0.0
    %3482 = vmatpush1.msra.mxu0 %v2378
    %3483 = vmatprep.subr.mxu0 0.0
    %3484 = vmatpush1.msra.mxu0 %v2381
    %3485 = vmatprep.subr.mxu0 0.0
    %3486 = vmatpush1.msra.mxu0 %v2384
    %3487 = vmatprep.subr.mxu0 0.0
    %3488 = vmatpush1.msra.mxu0 %v2387
    %3489 = vmatprep.subr.mxu0 0.0
    %3490 = vmatpush1.msra.mxu0 %v2390
    %3491 = vmatprep.subr.mxu0 0.0
    %3492 = vmatpush1.msra.mxu0 %v2393
    %3493 = vmatprep.subr.mxu0 0.0
    %3494 = vmatpush1.msra.mxu0 %v2396
    %3495 = vmatprep.subr.mxu0 0.0
    %3496 = vmatpush1.msra.mxu0 0.0
    %3497 = vmatprep.subr.mxu0 0.0
    %3498 = vmatpush1.msra.mxu0 0.0
    %3499 = vmatprep.subr.mxu0 0.0
    %3500 = vmatpush1.msra.mxu0 0.0
    %3501 = vmatprep.subr.mxu0 0.0
    %3502 = vmatpush1.msra.mxu0 0.0
    %3503 = vmatprep.subr.mxu0 0.0
    %3504 = vmatpush1.msra.mxu0 0.0
    %3505 = vmatprep.subr.mxu0 0.0
    %3506 = vmatpush1.msra.mxu0 0.0
    %3507 = vmatprep.subr.mxu0 0.0
    %3508 = vmatpush1.msra.mxu0 0.0
    %3509 = vmatprep.subr.mxu0 0.0
    %3510 = vmatpush1.msra.mxu0 0.0
    %3511 = vmatprep.subr.mxu0 0.0
    %3512 = vmatpush1.msra.mxu0 0.0
    %3513 = vmatprep.subr.mxu0 0.0
    %3514 = vmatpush1.msra.mxu0 0.0
    %3515 = vmatprep.subr.mxu0 0.0
    %3516 = vmatpush1.msra.mxu0 0.0
    %3517 = vmatprep.subr.mxu0 0.0
    %3518 = vmatpush1.msra.mxu0 0.0
    %3519 = vmatprep.subr.mxu0 0.0
    %3520 = vmatpush1.msra.mxu0 0.0
    %3521 = vmatprep.subr.mxu0 0.0
    %3522 = vmatpush1.msra.mxu0 0.0
    %3523 = vmatprep.subr.mxu0 0.0
    %3524 = vmatpush1.msra.mxu0 0.0
    %3525 = vmatprep.subr.mxu0 0.0
    %3526 = vmatpush1.msra.mxu0 0.0
    %3527 = vmatprep.subr.mxu0 0.0
    %3528 = vmatpush1.msra.mxu0 0.0
    %3529 = vmatprep.subr.mxu0 0.0
    %3530 = vmatpush1.msra.mxu0 0.0
    %3531 = vmatprep.subr.mxu0 0.0
    %3532 = vmatpush1.msra.mxu0 0.0
    %3533 = vmatprep.subr.mxu0 0.0
    %3534 = vmatpush1.msra.mxu0 0.0
    %3535 = vmatprep.mubr.f32.mxu0 0.0
    %3536 = vmatmul.mubr.f32.gmra.mrb[0].mxu0 %v3398
    %v3537 = vpop.f32.mrb[0].mxu0
    %v3538 = vadd.f32 0.0, %v3537
    %v3539 = vpop.f32.mrb[0].mxu0
    %3540 = vdwg.mxu0
    %v3541 = vadd.f32 %v3392, %v3467
    %v3542 = vadd.f32 %v3393, %v3469
    %v3543 = vadd.f32 %v3394, %v3538
    %v3544 = vxor.u32 %v3541, 2147483648
    %v3545 = vmul.f32 %v3544, 1.442695
    %v3546 = vpow.pop %v3545
    %v3547 = vadd.f32 %v3546, 1.0
    %v3548 = vrcp.pop %v3547
    %v3549 = vmul.f32 1.0, %v3548
    %v3550 = vxor.u32 %v3542, 2147483648
    %v3551 = vmul.f32 %v3550, 1.442695
    %v3552 = vpow.pop %v3551
    %v3553 = vadd.f32 %v3552, 1.0
    %v3554 = vrcp.pop %v3553
    %v3555 = vmul.f32 1.0, %v3554
    %v3556 = vtanh.pop %v3542
    %v3557 = vtanh.pop %v3543
    %v3558 = vxor.u32 %v3543, 2147483648
    %v3559 = vmul.f32 %v3558, 1.442695
    %v3560 = vpow.pop %v3559
    %v3561 = vadd.f32 %v3560, 1.0
    %v3562 = vrcp.pop %v3561
    %v3563 = vmul.f32 1.0, %v3562
    %v3564 = vmul.f32 %v3549, %v3379
    %v3565 = vmul.f32 %v3555, %v3380
    %3568 = vrot.lane.b32.xlu0 %v3556, 64
    %v3569 = vpop.permute.xlu0 %3568
    %3570 = vrot.lane.b32.xlu0 %v3557, 64
    %v3571 = vpop.permute.xlu0 %3570
    %v3572 = vsel %vm594, %v3569, %v3571
    %v3574 = vmul.f32 %v3549, %v3572
    %3576 = vrot.lane.b32.xlu0 %v3574, 96
    %v3577 = vpop.permute.xlu0 %3576
    %v3579 = vadd.f32 %v3564, %v3577
    %v3580 = vadd.f32 %v3565, %v3577
    %v3581 = vtanh.pop %v3579
    %v3582 = vtanh.pop %v3580
    %3585 = vrot.lane.b32.xlu0 %v3581, 64
    %v3586 = vpop.permute.xlu0 %3585
    %3587 = vrot.lane.b32.xlu0 %v3582, 64
    %v3588 = vpop.permute.xlu0 %3587
    %v3589 = vsel %vm594, %v3586, %v3588
    %v3591 = vmul.f32 %v3563, %v3589
    %v3592 = vld [vmem:[#allocation3 + $0x90] sm:$0xff]
    %v3593 = vld [vmem:[#allocation3 + $0x98] sm:$0xff]
    %v3594 = vld [vmem:[#allocation3 + $0xa0] sm:$0xff]
    %3596 = vrot.lane.b32.xlu0 %v3591, 96
    %v3597 = vpop.permute.xlu0 %3596
    %v3598 = vsel %vm418, %v3597, 0
    %3600 = vmatprep.subr.mxu0 %v2362
    %3601 = vmatpush1.msra.mxu0 %v2361
    %3602 = vmatprep.subr.mxu0 %v2365
    %3603 = vmatpush1.msra.mxu0 %v2364
    %3604 = vmatprep.subr.mxu0 %v2368
    %3605 = vmatpush1.msra.mxu0 %v2367
    %3606 = vmatprep.subr.mxu0 %v2371
    %3607 = vmatpush1.msra.mxu0 %v2370
    %3608 = vmatprep.subr.mxu0 %v2374
    %3609 = vmatpush1.msra.mxu0 %v2373
    %3610 = vmatprep.subr.mxu0 %v2377
    %3611 = vmatpush1.msra.mxu0 %v2376
    %3612 = vmatprep.subr.mxu0 %v2380
    %3613 = vmatpush1.msra.mxu0 %v2379
    %3614 = vmatprep.subr.mxu0 %v2383
    %3615 = vmatpush1.msra.mxu0 %v2382
    %3616 = vmatprep.subr.mxu0 %v2386
    %3617 = vmatpush1.msra.mxu0 %v2385
    %3618 = vmatprep.subr.mxu0 %v2389
    %3619 = vmatpush1.msra.mxu0 %v2388
    %3620 = vmatprep.subr.mxu0 %v2392
    %3621 = vmatpush1.msra.mxu0 %v2391
    %3622 = vmatprep.subr.mxu0 %v2395
    %3623 = vmatpush1.msra.mxu0 %v2394
    %3624 = vmatprep.subr.mxu0 0.0
    %3625 = vmatpush1.msra.mxu0 0.0
    %3626 = vmatprep.subr.mxu0 0.0
    %3627 = vmatpush1.msra.mxu0 0.0
    %3628 = vmatprep.subr.mxu0 0.0
    %3629 = vmatpush1.msra.mxu0 0.0
    %3630 = vmatprep.subr.mxu0 0.0
    %3631 = vmatpush1.msra.mxu0 0.0
    %3632 = vmatprep.subr.mxu0 0.0
    %3633 = vmatpush1.msra.mxu0 0.0
    %3634 = vmatprep.subr.mxu0 0.0
    %3635 = vmatpush1.msra.mxu0 0.0
    %3636 = vmatprep.subr.mxu0 0.0
    %3637 = vmatpush1.msra.mxu0 0.0
    %3638 = vmatprep.subr.mxu0 0.0
    %3639 = vmatpush1.msra.mxu0 0.0
    %3640 = vmatprep.subr.mxu0 0.0
    %3641 = vmatpush1.msra.mxu0 0.0
    %3642 = vmatprep.subr.mxu0 0.0
    %3643 = vmatpush1.msra.mxu0 0.0
    %3644 = vmatprep.subr.mxu0 0.0
    %3645 = vmatpush1.msra.mxu0 0.0
    %3646 = vmatprep.subr.mxu0 0.0
    %3647 = vmatpush1.msra.mxu0 0.0
    %3648 = vmatprep.subr.mxu0 0.0
    %3649 = vmatpush1.msra.mxu0 0.0
    %3650 = vmatprep.subr.mxu0 0.0
    %3651 = vmatpush1.msra.mxu0 0.0
    %3652 = vmatprep.subr.mxu0 0.0
    %3653 = vmatpush1.msra.mxu0 0.0
    %3654 = vmatprep.subr.mxu0 0.0
    %3655 = vmatpush1.msra.mxu0 0.0
    %3656 = vmatprep.subr.mxu0 0.0
    %3657 = vmatpush1.msra.mxu0 0.0
    %3658 = vmatprep.subr.mxu0 0.0
    %3659 = vmatpush1.msra.mxu0 0.0
    %3660 = vmatprep.subr.mxu0 0.0
    %3661 = vmatpush1.msra.mxu0 0.0
    %3662 = vmatprep.subr.mxu0 0.0
    %3663 = vmatpush1.msra.mxu0 0.0
    %3664 = vmatprep.mubr.f32.mxu0 0.0
    %3665 = vmatmul.mubr.f32.gmra.mrb[0].mxu0 %v3598
    %v3666 = vpop.f32.mrb[0].mxu0
    %v3667 = vadd.f32 0.0, %v3666
    %v3668 = vpop.f32.mrb[0].mxu0
    %v3669 = vadd.f32 0.0, %v3668
    %3670 = vdwg.mxu0
    %3671 = vmatprep.subr.mxu0 0.0
    %3672 = vmatpush1.msra.mxu0 %v2363
    %3673 = vmatprep.subr.mxu0 0.0
    %3674 = vmatpush1.msra.mxu0 %v2366
    %3675 = vmatprep.subr.mxu0 0.0
    %3676 = vmatpush1.msra.mxu0 %v2369
    %3677 = vmatprep.subr.mxu0 0.0
    %3678 = vmatpush1.msra.mxu0 %v2372
    %3679 = vmatprep.subr.mxu0 0.0
    %3680 = vmatpush1.msra.mxu0 %v2375
    %3681 = vmatprep.subr.mxu0 0.0
    %3682 = vmatpush1.msra.mxu0 %v2378
    %3683 = vmatprep.subr.mxu0 0.0
    %3684 = vmatpush1.msra.mxu0 %v2381
    %3685 = vmatprep.subr.mxu0 0.0
    %3686 = vmatpush1.msra.mxu0 %v2384
    %3687 = vmatprep.subr.mxu0 0.0
    %3688 = vmatpush1.msra.mxu0 %v2387
    %3689 = vmatprep.subr.mxu0 0.0
    %3690 = vmatpush1.msra.mxu0 %v2390
    %3691 = vmatprep.subr.mxu0 0.0
    %3692 = vmatpush1.msra.mxu0 %v2393
    %3693 = vmatprep.subr.mxu0 0.0
    %3694 = vmatpush1.msra.mxu0 %v2396
    %3695 = vmatprep.subr.mxu0 0.0
    %3696 = vmatpush1.msra.mxu0 0.0
    %3697 = vmatprep.subr.mxu0 0.0
    %3698 = vmatpush1.msra.mxu0 0.0
    %3699 = vmatprep.subr.mxu0 0.0
    %3700 = vmatpush1.msra.mxu0 0.0
    %3701 = vmatprep.subr.mxu0 0.0
    %3702 = vmatpush1.msra.mxu0 0.0
    %3703 = vmatprep.subr.mxu0 0.0
    %3704 = vmatpush1.msra.mxu0 0.0
    %3705 = vmatprep.subr.mxu0 0.0
    %3706 = vmatpush1.msra.mxu0 0.0
    %3707 = vmatprep.subr.mxu0 0.0
    %3708 = vmatpush1.msra.mxu0 0.0
    %3709 = vmatprep.subr.mxu0 0.0
    %3710 = vmatpush1.msra.mxu0 0.0
    %3711 = vmatprep.subr.mxu0 0.0
    %3712 = vmatpush1.msra.mxu0 0.0
    %3713 = vmatprep.subr.mxu0 0.0
    %3714 = vmatpush1.msra.mxu0 0.0
    %3715 = vmatprep.subr.mxu0 0.0
    %3716 = vmatpush1.msra.mxu0 0.0
    %3717 = vmatprep.subr.mxu0 0.0
    %3718 = vmatpush1.msra.mxu0 0.0
    %3719 = vmatprep.subr.mxu0 0.0
    %3720 = vmatpush1.msra.mxu0 0.0
    %3721 = vmatprep.subr.mxu0 0.0
    %3722 = vmatpush1.msra.mxu0 0.0
    %3723 = vmatprep.subr.mxu0 0.0
    %3724 = vmatpush1.msra.mxu0 0.0
    %3725 = vmatprep.subr.mxu0 0.0
    %3726 = vmatpush1.msra.mxu0 0.0
    %3727 = vmatprep.subr.mxu0 0.0
    %3728 = vmatpush1.msra.mxu0 0.0
    %3729 = vmatprep.subr.mxu0 0.0
    %3730 = vmatpush1.msra.mxu0 0.0
    %3731 = vmatprep.subr.mxu0 0.0
    %3732 = vmatpush1.msra.mxu0 0.0
    %3733 = vmatprep.subr.mxu0 0.0
    %3734 = vmatpush1.msra.mxu0 0.0
    %3735 = vmatprep.mubr.f32.mxu0 0.0
    %3736 = vmatmul.mubr.f32.gmra.mrb[0].mxu0 %v3598
    %v3737 = vpop.f32.mrb[0].mxu0
    %v3738 = vadd.f32 0.0, %v3737
    %v3739 = vpop.f32.mrb[0].mxu0
    %3740 = vdwg.mxu0
    %v3741 = vadd.f32 %v3592, %v3667
    %v3742 = vadd.f32 %v3593, %v3669
    %v3743 = vadd.f32 %v3594, %v3738
    %v3744 = vxor.u32 %v3741, 2147483648
    %v3745 = vmul.f32 %v3744, 1.442695
    %v3746 = vpow.pop %v3745
    %v3747 = vadd.f32 %v3746, 1.0
    %v3748 = vrcp.pop %v3747
    %v3749 = vmul.f32 1.0, %v3748
    %v3750 = vxor.u32 %v3742, 2147483648
    %v3751 = vmul.f32 %v3750, 1.442695
    %v3752 = vpow.pop %v3751
    %v3753 = vadd.f32 %v3752, 1.0
    %v3754 = vrcp.pop %v3753
    %v3755 = vmul.f32 1.0, %v3754
    %v3756 = vtanh.pop %v3742
    %v3757 = vtanh.pop %v3743
    %v3758 = vxor.u32 %v3743, 2147483648
    %v3759 = vmul.f32 %v3758, 1.442695
    %v3760 = vpow.pop %v3759
    %v3761 = vadd.f32 %v3760, 1.0
    %v3762 = vrcp.pop %v3761
    %v3763 = vmul.f32 1.0, %v3762
    %v3764 = vmul.f32 %v3749, %v3579
    %v3765 = vmul.f32 %v3755, %v3580
    %3768 = vrot.lane.b32.xlu0 %v3756, 64
    %v3769 = vpop.permute.xlu0 %3768
    %3770 = vrot.lane.b32.xlu0 %v3757, 64
    %v3771 = vpop.permute.xlu0 %3770
    %v3772 = vsel %vm594, %v3769, %v3771
    %v3774 = vmul.f32 %v3749, %v3772
    %3776 = vrot.lane.b32.xlu0 %v3774, 96
    %v3777 = vpop.permute.xlu0 %3776
    %v3779 = vadd.f32 %v3764, %v3777
    %v3780 = vadd.f32 %v3765, %v3777
    %v3781 = vtanh.pop %v3779
    %v3782 = vtanh.pop %v3780
    %3785 = vrot.lane.b32.xlu0 %v3781, 64
    %v3786 = vpop.permute.xlu0 %3785
    %3787 = vrot.lane.b32.xlu0 %v3782, 64
    %v3788 = vpop.permute.xlu0 %3787
    %v3789 = vsel %vm594, %v3786, %v3788
    %v3791 = vmul.f32 %v3763, %v3789
    %v3792 = vld [vmem:[#allocation3 + $0xa8] sm:$0xff]
    %v3793 = vld [vmem:[#allocation3 + $0xb0] sm:$0xff]
    %v3794 = vld [vmem:[#allocation3 + $0xb8] sm:$0xff]
    %3796 = vrot.lane.b32.xlu0 %v3791, 96
    %v3797 = vpop.permute.xlu0 %3796
    %v3798 = vsel %vm418, %v3797, 0
    %3800 = vmatprep.subr.mxu0 %v2362
    %3801 = vmatpush1.msra.mxu0 %v2361
    %3802 = vmatprep.subr.mxu0 %v2365
    %3803 = vmatpush1.msra.mxu0 %v2364
    %3804 = vmatprep.subr.mxu0 %v2368
    %3805 = vmatpush1.msra.mxu0 %v2367
    %3806 = vmatprep.subr.mxu0 %v2371
    %3807 = vmatpush1.msra.mxu0 %v2370
    %3808 = vmatprep.subr.mxu0 %v2374
    %3809 = vmatpush1.msra.mxu0 %v2373
    %3810 = vmatprep.subr.mxu0 %v2377
    %3811 = vmatpush1.msra.mxu0 %v2376
    %3812 = vmatprep.subr.mxu0 %v2380
    %3813 = vmatpush1.msra.mxu0 %v2379
    %3814 = vmatprep.subr.mxu0 %v2383
    %3815 = vmatpush1.msra.mxu0 %v2382
    %3816 = vmatprep.subr.mxu0 %v2386
    %3817 = vmatpush1.msra.mxu0 %v2385
    %3818 = vmatprep.subr.mxu0 %v2389
    %3819 = vmatpush1.msra.mxu0 %v2388
    %3820 = vmatprep.subr.mxu0 %v2392
    %3821 = vmatpush1.msra.mxu0 %v2391
    %3822 = vmatprep.subr.mxu0 %v2395
    %3823 = vmatpush1.msra.mxu0 %v2394
    %3824 = vmatprep.subr.mxu0 0.0
    %3825 = vmatpush1.msra.mxu0 0.0
    %3826 = vmatprep.subr.mxu0 0.0
    %3827 = vmatpush1.msra.mxu0 0.0
    %3828 = vmatprep.subr.mxu0 0.0
    %3829 = vmatpush1.msra.mxu0 0.0
    %3830 = vmatprep.subr.mxu0 0.0
    %3831 = vmatpush1.msra.mxu0 0.0
    %3832 = vmatprep.subr.mxu0 0.0
    %3833 = vmatpush1.msra.mxu0 0.0
    %3834 = vmatprep.subr.mxu0 0.0
    %3835 = vmatpush1.msra.mxu0 0.0
    %3836 = vmatprep.subr.mxu0 0.0
    %3837 = vmatpush1.msra.mxu0 0.0
    %3838 = vmatprep.subr.mxu0 0.0
    %3839 = vmatpush1.msra.mxu0 0.0
    %3840 = vmatprep.subr.mxu0 0.0
    %3841 = vmatpush1.msra.mxu0 0.0
    %3842 = vmatprep.subr.mxu0 0.0
    %3843 = vmatpush1.msra.mxu0 0.0
    %3844 = vmatprep.subr.mxu0 0.0
    %3845 = vmatpush1.msra.mxu0 0.0
    %3846 = vmatprep.subr.mxu0 0.0
    %3847 = vmatpush1.msra.mxu0 0.0
    %3848 = vmatprep.subr.mxu0 0.0
    %3849 = vmatpush1.msra.mxu0 0.0
    %3850 = vmatprep.subr.mxu0 0.0
    %3851 = vmatpush1.msra.mxu0 0.0
    %3852 = vmatprep.subr.mxu0 0.0
    %3853 = vmatpush1.msra.mxu0 0.0
    %3854 = vmatprep.subr.mxu0 0.0
    %3855 = vmatpush1.msra.mxu0 0.0
    %3856 = vmatprep.subr.mxu0 0.0
    %3857 = vmatpush1.msra.mxu0 0.0
    %3858 = vmatprep.subr.mxu0 0.0
    %3859 = vmatpush1.msra.mxu0 0.0
    %3860 = vmatprep.subr.mxu0 0.0
    %3861 = vmatpush1.msra.mxu0 0.0
    %3862 = vmatprep.subr.mxu0 0.0
    %3863 = vmatpush1.msra.mxu0 0.0
    %3864 = vmatprep.mubr.f32.mxu0 0.0
    %3865 = vmatmul.mubr.f32.gmra.mrb[0].mxu0 %v3798
    %v3866 = vpop.f32.mrb[0].mxu0
    %v3867 = vadd.f32 0.0, %v3866
    %v3868 = vpop.f32.mrb[0].mxu0
    %v3869 = vadd.f32 0.0, %v3868
    %3870 = vdwg.mxu0
    %3871 = vmatprep.subr.mxu0 0.0
    %3872 = vmatpush1.msra.mxu0 %v2363
    %3873 = vmatprep.subr.mxu0 0.0
    %3874 = vmatpush1.msra.mxu0 %v2366
    %3875 = vmatprep.subr.mxu0 0.0
    %3876 = vmatpush1.msra.mxu0 %v2369
    %3877 = vmatprep.subr.mxu0 0.0
    %3878 = vmatpush1.msra.mxu0 %v2372
    %3879 = vmatprep.subr.mxu0 0.0
    %3880 = vmatpush1.msra.mxu0 %v2375
    %3881 = vmatprep.subr.mxu0 0.0
    %3882 = vmatpush1.msra.mxu0 %v2378
    %3883 = vmatprep.subr.mxu0 0.0
    %3884 = vmatpush1.msra.mxu0 %v2381
    %3885 = vmatprep.subr.mxu0 0.0
    %3886 = vmatpush1.msra.mxu0 %v2384
    %3887 = vmatprep.subr.mxu0 0.0
    %3888 = vmatpush1.msra.mxu0 %v2387
    %3889 = vmatprep.subr.mxu0 0.0
    %3890 = vmatpush1.msra.mxu0 %v2390
    %3891 = vmatprep.subr.mxu0 0.0
    %3892 = vmatpush1.msra.mxu0 %v2393
    %3893 = vmatprep.subr.mxu0 0.0
    %3894 = vmatpush1.msra.mxu0 %v2396
    %3895 = vmatprep.subr.mxu0 0.0
    %3896 = vmatpush1.msra.mxu0 0.0
    %3897 = vmatprep.subr.mxu0 0.0
    %3898 = vmatpush1.msra.mxu0 0.0
    %3899 = vmatprep.subr.mxu0 0.0
    %3900 = vmatpush1.msra.mxu0 0.0
    %3901 = vmatprep.subr.mxu0 0.0
    %3902 = vmatpush1.msra.mxu0 0.0
    %3903 = vmatprep.subr.mxu0 0.0
    %3904 = vmatpush1.msra.mxu0 0.0
    %3905 = vmatprep.subr.mxu0 0.0
    %3906 = vmatpush1.msra.mxu0 0.0
    %3907 = vmatprep.subr.mxu0 0.0
    %3908 = vmatpush1.msra.mxu0 0.0
    %3909 = vmatprep.subr.mxu0 0.0
    %3910 = vmatpush1.msra.mxu0 0.0
    %3911 = vmatprep.subr.mxu0 0.0
    %3912 = vmatpush1.msra.mxu0 0.0
    %3913 = vmatprep.subr.mxu0 0.0
    %3914 = vmatpush1.msra.mxu0 0.0
    %3915 = vmatprep.subr.mxu0 0.0
    %3916 = vmatpush1.msra.mxu0 0.0
    %3917 = vmatprep.subr.mxu0 0.0
    %3918 = vmatpush1.msra.mxu0 0.0
    %3919 = vmatprep.subr.mxu0 0.0
    %3920 = vmatpush1.msra.mxu0 0.0
    %3921 = vmatprep.subr.mxu0 0.0
    %3922 = vmatpush1.msra.mxu0 0.0
    %3923 = vmatprep.subr.mxu0 0.0
    %3924 = vmatpush1.msra.mxu0 0.0
    %3925 = vmatprep.subr.mxu0 0.0
    %3926 = vmatpush1.msra.mxu0 0.0
    %3927 = vmatprep.subr.mxu0 0.0
    %3928 = vmatpush1.msra.mxu0 0.0
    %3929 = vmatprep.subr.mxu0 0.0
    %3930 = vmatpush1.msra.mxu0 0.0
    %3931 = vmatprep.subr.mxu0 0.0
    %3932 = vmatpush1.msra.mxu0 0.0
    %3933 = vmatprep.subr.mxu0 0.0
    %3934 = vmatpush1.msra.mxu0 0.0
    %3935 = vmatprep.mubr.f32.mxu0 0.0
    %3936 = vmatmul.mubr.f32.gmra.mrb[0].mxu0 %v3798
    %v3937 = vpop.f32.mrb[0].mxu0
    %v3938 = vadd.f32 0.0, %v3937
    %v3939 = vpop.f32.mrb[0].mxu0
    %3940 = vdwg.mxu0
    %v3941 = vadd.f32 %v3792, %v3867
    %v3942 = vadd.f32 %v3793, %v3869
    %v3943 = vadd.f32 %v3794, %v3938
    %v3944 = vxor.u32 %v3941, 2147483648
    %v3945 = vmul.f32 %v3944, 1.442695
    %v3946 = vpow.pop %v3945
    %v3947 = vadd.f32 %v3946, 1.0
    %v3948 = vrcp.pop %v3947
    %v3949 = vmul.f32 1.0, %v3948
    %v3950 = vxor.u32 %v3942, 2147483648
    %v3951 = vmul.f32 %v3950, 1.442695
    %v3952 = vpow.pop %v3951
    %v3953 = vadd.f32 %v3952, 1.0
    %v3954 = vrcp.pop %v3953
    %v3955 = vmul.f32 1.0, %v3954
    %v3956 = vtanh.pop %v3942
    %v3957 = vtanh.pop %v3943
    %v3958 = vxor.u32 %v3943, 2147483648
    %v3959 = vmul.f32 %v3958, 1.442695
    %v3960 = vpow.pop %v3959
    %v3961 = vadd.f32 %v3960, 1.0
    %v3962 = vrcp.pop %v3961
    %v3963 = vmul.f32 1.0, %v3962
    %v3964 = vmul.f32 %v3949, %v3779
    %v3965 = vmul.f32 %v3955, %v3780
    %3968 = vrot.lane.b32.xlu0 %v3956, 64
    %v3969 = vpop.permute.xlu0 %3968
    %3970 = vrot.lane.b32.xlu0 %v3957, 64
    %v3971 = vpop.permute.xlu0 %3970
    %v3972 = vsel %vm594, %v3969, %v3971
    %v3974 = vmul.f32 %v3949, %v3972
    %3976 = vrot.lane.b32.xlu0 %v3974, 96
    %v3977 = vpop.permute.xlu0 %3976
    %v3979 = vadd.f32 %v3964, %v3977
    %v3980 = vadd.f32 %v3965, %v3977
    %v3981 = vtanh.pop %v3979
    %v3982 = vtanh.pop %v3980
    %3985 = vrot.lane.b32.xlu0 %v3981, 64
    %v3986 = vpop.permute.xlu0 %3985
    %3987 = vrot.lane.b32.xlu0 %v3982, 64
    %v3988 = vpop.permute.xlu0 %3987
    %v3989 = vsel %vm594, %v3986, %v3988
    %v3991 = vmul.f32 %v3963, %v3989
    %v3992 = vld [vmem:[%s7] sm:$0xff]
    %v3993 = vld [vmem:[%s7 + $0x8] sm:$0xff]
    %v3994 = vld [vmem:[%s7 + $0x10] sm:$0xff]
    %v3995 = vld [vmem:[%s7 + $0x18] sm:$0xff]
    %v3996 = vld [vmem:[%s7 + $0x20] sm:$0xff]
    %v3997 = vld [vmem:[%s7 + $0x28] sm:$0xff]
    %v3998 = vld [vmem:[%s7 + $0x30] sm:$0xff]
    %v3999 = vld [vmem:[%s7 + $0x38] sm:$0xff]
    %v4000 = vld [vmem:[%s7 + $0x40] sm:$0xff]
    %v4001 = vld [vmem:[%s7 + $0x48] sm:$0xff]
    %v4002 = vld [vmem:[%s7 + $0x50] sm:$0xff]
    %v4003 = vld [vmem:[%s7 + $0x58] sm:$0xff]
    %v4004 = vld [vmem:[%s8] sm:$0x1]
    %v4006 = vlaneseq
    %v4007 = vshrl.u32 %v4006, 7
    %v4008 = vsub.s32 0, %v4007
    %v4009 = vrot.slane %v4004, %v4008
    %4012 = vrot.lane.b32.xlu0 %v3991, 96
    %v4013 = vpop.permute.xlu0 %4012
    %v4014 = vsel %vm418, %v4013, 0
    %4016 = vmatprep.subr.mxu0 0.0
    %4017 = vmatpush1.msra.mxu0 %v3992
    %4018 = vmatprep.subr.mxu0 0.0
    %4019 = vmatpush1.msra.mxu0 %v3993
    %4020 = vmatprep.subr.mxu0 0.0
    %4021 = vmatpush1.msra.mxu0 %v3994
    %4022 = vmatprep.subr.mxu0 0.0
    %4023 = vmatpush1.msra.mxu0 %v3995
    %4024 = vmatprep.subr.mxu0 0.0
    %4025 = vmatpush1.msra.mxu0 %v3996
    %4026 = vmatprep.subr.mxu0 0.0
    %4027 = vmatpush1.msra.mxu0 %v3997
    %4028 = vmatprep.subr.mxu0 0.0
    %4029 = vmatpush1.msra.mxu0 %v3998
    %4030 = vmatprep.subr.mxu0 0.0
    %4031 = vmatpush1.msra.mxu0 %v3999
    %4032 = vmatprep.subr.mxu0 0.0
    %4033 = vmatpush1.msra.mxu0 %v4000
    %4034 = vmatprep.subr.mxu0 0.0
    %4035 = vmatpush1.msra.mxu0 %v4001
    %4036 = vmatprep.subr.mxu0 0.0
    %4037 = vmatpush1.msra.mxu0 %v4002
    %4038 = vmatprep.subr.mxu0 0.0
    %4039 = vmatpush1.msra.mxu0 %v4003
    %4040 = vmatprep.subr.mxu0 0.0
    %4041 = vmatpush1.msra.mxu0 0.0
    %4042 = vmatprep.subr.mxu0 0.0
    %4043 = vmatpush1.msra.mxu0 0.0
    %4044 = vmatprep.subr.mxu0 0.0
    %4045 = vmatpush1.msra.mxu0 0.0
    %4046 = vmatprep.subr.mxu0 0.0
    %4047 = vmatpush1.msra.mxu0 0.0
    %4048 = vmatprep.subr.mxu0 0.0
    %4049 = vmatpush1.msra.mxu0 0.0
    %4050 = vmatprep.subr.mxu0 0.0
    %4051 = vmatpush1.msra.mxu0 0.0
    %4052 = vmatprep.subr.mxu0 0.0
    %4053 = vmatpush1.msra.mxu0 0.0
    %4054 = vmatprep.subr.mxu0 0.0
    %4055 = vmatpush1.msra.mxu0 0.0
    %4056 = vmatprep.subr.mxu0 0.0
    %4057 = vmatpush1.msra.mxu0 0.0
    %4058 = vmatprep.subr.mxu0 0.0
    %4059 = vmatpush1.msra.mxu0 0.0
    %4060 = vmatprep.subr.mxu0 0.0
    %4061 = vmatpush1.msra.mxu0 0.0
    %4062 = vmatprep.subr.mxu0 0.0
    %4063 = vmatpush1.msra.mxu0 0.0
    %4064 = vmatprep.subr.mxu0 0.0
    %4065 = vmatpush1.msra.mxu0 0.0
    %4066 = vmatprep.subr.mxu0 0.0
    %4067 = vmatpush1.msra.mxu0 0.0
    %4068 = vmatprep.subr.mxu0 0.0
    %4069 = vmatpush1.msra.mxu0 0.0
    %4070 = vmatprep.subr.mxu0 0.0
    %4071 = vmatpush1.msra.mxu0 0.0
    %4072 = vmatprep.subr.mxu0 0.0
    %4073 = vmatpush1.msra.mxu0 0.0
    %4074 = vmatprep.subr.mxu0 0.0
    %4075 = vmatpush1.msra.mxu0 0.0
    %4076 = vmatprep.subr.mxu0 0.0
    %4077 = vmatpush1.msra.mxu0 0.0
    %4078 = vmatprep.subr.mxu0 0.0
    %4079 = vmatpush1.msra.mxu0 0.0
    %4080 = vmatprep.mubr.f32.mxu0 0.0
    %4081 = vmatmul.mubr.f32.gmra.mrb[0].mxu0 %v4014
    %v4082 = vpop.f32.mrb[0].mxu0
    %v4083 = vadd.f32 %v4009, %v4082
    %v4084 = vpop.f32.mrb[0].mxu0
    %4085 = vdwg.mxu0
    %v4086 = vxor.u32 %v4083, 2147483648
    %v4087 = vmul.f32 %v4086, 1.442695
    %v4088 = vpow.pop %v4087
    %v4089 = vadd.f32 %v4088, 1.0
    %v4090 = vrcp.pop %v4089
    %v4091 = vmul.f32 1.0, %v4090
    %vm4092 = vcmask 31744
    %4093 = vst.msk [vmem:[%s9] sm:$0xff] %vm4092, %v4091
    // Predicated region
    $region46: #{multi_input_lstm_forward.1} parent=1 // pred_check
      _
    $region47: #{multi_input_lstm_forward.1} parent=1 // pred_check_branch
      %4095 = sbr.rel (0) target = $region49
    $region48: #{multi_input_lstm_forward.1} parent=1 // pred_region
      _
    $region49: #{multi_input_lstm_forward.1} parent=1 // pred_fallthru
      _
    // Predicated region
    $region50: #{multi_input_lstm_forward.1} parent=1 // pred_check
      _
    $region51: #{multi_input_lstm_forward.1} parent=1 // pred_check_branch
      %4097 = sbr.rel (0) target = $region53
    $region52: #{multi_input_lstm_forward.1} parent=1 // pred_region
      _
    $region53: #{multi_input_lstm_forward.1} parent=1 // pred_fallthru
      _
    %4098 = vsyncpa [#allocation5], 1
    %4099 = vsyncpa [#allocation7], 1

</llo_original>
